<compile_context>
chip_gen: v7x
topology: tpu7x:2x2x1
jax: 0.10.0
libtpu: 0.0.40
codegen_flags: <defaults>
</compile_context>

<pallas_src>
import functools

import jax
import jax.numpy as jnp
from jax.experimental import pallas as pl
from jax.experimental.pallas import tpu as pltpu

# ----------------------------- config (small) --------------------------------
HIDDEN = 32
NUM_HEADS = 4
HEAD_DIM = HIDDEN // NUM_HEADS
INTERMEDIATE = 64
NUM_LAYERS = 2
FIT_SIZE = 48
VOCAB = 100
TYPE_VOCAB = 2
MAX_POS = 32
NUM_CLASSES = 3          # e.g. mnli
LN_EPS = 1e-12
ATTN_SCALE = 1.0 / (HEAD_DIM ** 0.5)


# ------------------------------ in-kernel helpers -----------------------------
def _ln(x, g, b):
    x = x.astype(jnp.float32)
    mu = jnp.mean(x, axis=-1, keepdims=True)
    var = jnp.mean((x - mu) * (x - mu), axis=-1, keepdims=True)
    return (x - mu) * jax.lax.rsqrt(var + LN_EPS) * g + b


# ------------------------------ fused encoder kernel --------------------------
def _encoder_kernel(
    # constant inputs
    emb_ref, mask_ref, emb_ln_g_ref, emb_ln_b_ref, fit0_w_ref, fit0_b_ref,
    # per-layer stacked inputs (block = one layer)
    qkv_w_ref, qkv_b_ref, ao_w_ref, ao_b_ref, attn_ln_g_ref, attn_ln_b_ref,
    ffn_w1_ref, ffn_b1_ref, ffn_w2_ref, ffn_b2_ref, ffn_ln_g_ref, ffn_ln_b_ref,
    fit_w_ref, fit_b_ref,
    # constant head inputs
    pool_w_ref, pool_b_ref, cls_w_ref, cls_b_ref,
    # outputs
    fit0_ref, scores_ref, fit_ref, logits_ref,
    # scratch
    x_scratch,
    *, batch, seq):
    l = pl.program_id(0)

    # ---- layer-0 prologue: embedding LayerNorm + fit_denses[0] ----
    @pl.when(l == 0)
    def _():
        x0 = _ln(emb_ref[...], emb_ln_g_ref[...], emb_ln_b_ref[...])
        x_scratch[...] = x0
        fit0_ref[...] = (jnp.dot(x0, fit0_w_ref[...],
                                 preferred_element_type=jnp.float32)
                         + fit0_b_ref[...])

    x = x_scratch[...]                       # (B*S, HIDDEN), resident in VMEM
    mask = mask_ref[...]                     # (B, 1, S) additive mask

    # ---- attention: fused QKV projection (one lane-dense 96-wide matmul) ----
    qkv = (jnp.dot(x, qkv_w_ref[0], preferred_element_type=jnp.float32)
           + qkv_b_ref[0])                   # (B*S, 3*HIDDEN)

    # Per-head attention; heads are lane slices, no HBM round trips.
    # attn_proj = concat_h(ctx_h) @ ao_w  ==  sum_h ctx_h @ ao_w[h*D:(h+1)*D]
    attn_proj = ao_b_ref[0]                  # (1, HIDDEN) broadcasts over rows
    for h in range(NUM_HEADS):
        lo = h * HEAD_DIM
        q = qkv[:, lo:lo + HEAD_DIM].reshape(batch, seq, HEAD_DIM)
        k = qkv[:, HIDDEN + lo:HIDDEN + lo + HEAD_DIM].reshape(batch, seq, HEAD_DIM)
        v = qkv[:, 2 * HIDDEN + lo:2 * HIDDEN + lo + HEAD_DIM].reshape(
            batch, seq, HEAD_DIM)
        s = (jnp.einsum("bqd,bkd->bqk", q, k,
                        preferred_element_type=jnp.float32) * ATTN_SCALE + mask)
        # lane-dense score slab: row = b*S+q, lane = h*S + k
        scores_ref[0, :, h * seq:(h + 1) * seq] = s.reshape(batch * seq, seq)
        s_max = jnp.max(s, axis=-1, keepdims=True)
        p = jnp.exp(s - s_max)
        p = p * pl.reciprocal(jnp.sum(p, axis=-1, keepdims=True), approx=True)
        ctx = jnp.einsum("bqk,bkd->bqd", p, v,
                         preferred_element_type=jnp.float32)
        attn_proj = attn_proj + jnp.dot(
            ctx.reshape(batch * seq, HEAD_DIM),
            ao_w_ref[0, lo:lo + HEAD_DIM, :],
            preferred_element_type=jnp.float32)

    attn_out = _ln(attn_proj + x, attn_ln_g_ref[0], attn_ln_b_ref[0])

    # ---- FFN ----
    h1 = (jnp.dot(attn_out, ffn_w1_ref[0], preferred_element_type=jnp.float32)
          + ffn_b1_ref[0])
    # TODO(synk): reference BERT GELU is erf-based; tanh approximation used here.
    h1 = jax.nn.gelu(h1, approximate=True)
    ffn = (jnp.dot(h1, ffn_w2_ref[0], preferred_element_type=jnp.float32)
           + ffn_b2_ref[0])
    x_new = _ln(ffn + attn_out, ffn_ln_g_ref[0], ffn_ln_b_ref[0])
    x_scratch[...] = x_new                   # carry to next layer (VMEM-resident)

    # ---- fit_denses[l + 1] ----
    fit_ref[0] = (jnp.dot(x_new, fit_w_ref[0],
                          preferred_element_type=jnp.float32) + fit_b_ref[0])

    # ---- final-layer epilogue: CLS pooler + classifier ----
    @pl.when(l == pl.num_programs(0) - 1)
    def _():
        cls_tok = x_new.reshape(batch, seq, HIDDEN)[:, 0, :]
        pooled = jnp.tanh(jnp.dot(cls_tok, pool_w_ref[...],
                                  preferred_element_type=jnp.float32)
                          + pool_b_ref[...])
        logits_ref[...] = (jnp.dot(pooled, cls_w_ref[...],
                                   preferred_element_type=jnp.float32)
                           + cls_b_ref[...])


# ------------------------------ BlockSpec helpers ------------------------------
def _const_spec(shape):
    zeros = (0,) * len(shape)
    return pl.BlockSpec(tuple(shape), lambda l: zeros)


def _per_layer_spec(shape):
    zeros = (0,) * len(shape)
    return pl.BlockSpec((1,) + tuple(shape), lambda l: (l,) + zeros)


# ------------------------------ parameters --------------------------------
def init_params(key):
    keys = iter(jax.random.split(key, 256))

    def nrm(shape):
        return 0.02 * jax.random.normal(next(keys), shape, jnp.float32)

    def ln():
        return jnp.ones((HIDDEN,), jnp.float32), jnp.zeros((HIDDEN,), jnp.float32)

    params = {
        "tok_emb": nrm((VOCAB, HIDDEN)),
        "seg_emb": nrm((TYPE_VOCAB, HIDDEN)),
        "pos_emb": nrm((MAX_POS, HIDDEN)),
    }
    params["emb_ln_g"], params["emb_ln_b"] = ln()

    layers = []
    for _ in range(NUM_LAYERS):
        layer = {
            "q_w": nrm((HIDDEN, HIDDEN)), "q_b": jnp.zeros((HIDDEN,)),
            "k_w": nrm((HIDDEN, HIDDEN)), "k_b": jnp.zeros((HIDDEN,)),
            "v_w": nrm((HIDDEN, HIDDEN)), "v_b": jnp.zeros((HIDDEN,)),
            "ao_w": nrm((HIDDEN, HIDDEN)), "ao_b": jnp.zeros((HIDDEN,)),
            "ffn_w1": nrm((HIDDEN, INTERMEDIATE)), "ffn_b1": jnp.zeros((INTERMEDIATE,)),
            "ffn_w2": nrm((INTERMEDIATE, HIDDEN)), "ffn_b2": jnp.zeros((HIDDEN,)),
        }
        layer["attn_ln_g"], layer["attn_ln_b"] = ln()
        layer["ffn_ln_g"], layer["ffn_ln_b"] = ln()
        layers.append(layer)
    params["layers"] = layers

    params["fit"] = [
        (nrm((HIDDEN, FIT_SIZE)), jnp.zeros((FIT_SIZE,))) for _ in range(NUM_LAYERS + 1)
    ]
    params["pool_w"] = nrm((HIDDEN, HIDDEN))
    params["pool_b"] = jnp.zeros((HIDDEN,))
    params["cls_w"] = nrm((HIDDEN, NUM_CLASSES))
    params["cls_b"] = jnp.zeros((NUM_CLASSES,))
    return params


# ------------------------------ forward pass --------------------------------
def tiny_bert_forward(params, token_ids, segment_ids, position_ids, attn_mask):
    B, S = token_ids.shape
    L = NUM_LAYERS

    # Embedding table gathers (plain-JAX glue).
    emb = (params["tok_emb"][token_ids]
           + params["seg_emb"][segment_ids]
           + params["pos_emb"][position_ids]).reshape(B * S, HIDDEN)
    add_mask = ((1.0 - attn_mask.astype(jnp.float32)) * -10000.0).reshape(B, 1, S)

    # One-time per-layer weight stacking (so the layer loop is a grid axis).
    ls = params["layers"]
    qkv_w = jnp.stack([jnp.concatenate([p["q_w"], p["k_w"], p["v_w"]], axis=1)
                       for p in ls])
    qkv_b = jnp.stack([jnp.concatenate([p["q_b"], p["k_b"], p["v_b"]])[None, :]
                       for p in ls])
    ao_w = jnp.stack([p["ao_w"] for p in ls])
    ao_b = jnp.stack([p["ao_b"][None, :] for p in ls])
    attn_ln_g = jnp.stack([p["attn_ln_g"][None, :] for p in ls])
    attn_ln_b = jnp.stack([p["attn_ln_b"][None, :] for p in ls])
    ffn_w1 = jnp.stack([p["ffn_w1"] for p in ls])
    ffn_b1 = jnp.stack([p["ffn_b1"][None, :] for p in ls])
    ffn_w2 = jnp.stack([p["ffn_w2"] for p in ls])
    ffn_b2 = jnp.stack([p["ffn_b2"][None, :] for p in ls])
    ffn_ln_g = jnp.stack([p["ffn_ln_g"][None, :] for p in ls])
    ffn_ln_b = jnp.stack([p["ffn_ln_b"][None, :] for p in ls])
    fit_w = jnp.stack([params["fit"][i + 1][0] for i in range(L)])
    fit_b = jnp.stack([params["fit"][i + 1][1][None, :] for i in range(L)])

    kernel = functools.partial(_encoder_kernel, batch=B, seq=S)

    grid_spec = pltpu.PrefetchScalarGridSpec(
        num_scalar_prefetch=0,
        grid=(L,),
        in_specs=[
            _const_spec((B * S, HIDDEN)),                 # emb
            _const_spec((B, 1, S)),                       # additive mask
            _const_spec((1, HIDDEN)), _const_spec((1, HIDDEN)),     # emb LN
            _const_spec((HIDDEN, FIT_SIZE)), _const_spec((1, FIT_SIZE)),  # fit[0]
            _per_layer_spec((HIDDEN, 3 * HIDDEN)), _per_layer_spec((1, 3 * HIDDEN)),
            _per_layer_spec((HIDDEN, HIDDEN)), _per_layer_spec((1, HIDDEN)),
            _per_layer_spec((1, HIDDEN)), _per_layer_spec((1, HIDDEN)),
            _per_layer_spec((HIDDEN, INTERMEDIATE)), _per_layer_spec((1, INTERMEDIATE)),
            _per_layer_spec((INTERMEDIATE, HIDDEN)), _per_layer_spec((1, HIDDEN)),
            _per_layer_spec((1, HIDDEN)), _per_layer_spec((1, HIDDEN)),
            _per_layer_spec((HIDDEN, FIT_SIZE)), _per_layer_spec((1, FIT_SIZE)),
            _const_spec((HIDDEN, HIDDEN)), _const_spec((1, HIDDEN)),        # pooler
            _const_spec((HIDDEN, NUM_CLASSES)), _const_spec((1, NUM_CLASSES)),  # cls
        ],
        out_specs=(
            _const_spec((B * S, FIT_SIZE)),               # fit_denses[0] output
            _per_layer_spec((B * S, NUM_HEADS * S)),      # per-layer attention scores
            _per_layer_spec((B * S, FIT_SIZE)),           # per-layer fit outputs
            _const_spec((B, NUM_CLASSES)),                # logits
        ),
        scratch_shapes=[pltpu.VMEM((B * S, HIDDEN), jnp.float32)],
    )

    fit0, scores, fits, logits = pl.pallas_call(
        kernel,
        grid_spec=grid_spec,
        out_shape=(
            jax.ShapeDtypeStruct((B * S, FIT_SIZE), jnp.float32),
            jax.ShapeDtypeStruct((L, B * S, NUM_HEADS * S), jnp.float32),
            jax.ShapeDtypeStruct((L, B * S, FIT_SIZE), jnp.float32),
            jax.ShapeDtypeStruct((B, NUM_CLASSES), jnp.float32),
        ),
        compiler_params=pltpu.CompilerParams(dimension_semantics=("arbitrary",)),
    )(emb, add_mask,
      params["emb_ln_g"][None, :], params["emb_ln_b"][None, :],
      params["fit"][0][0], params["fit"][0][1][None, :],
      qkv_w, qkv_b, ao_w, ao_b, attn_ln_g, attn_ln_b,
      ffn_w1, ffn_b1, ffn_w2, ffn_b2, ffn_ln_g, ffn_ln_b,
      fit_w, fit_b,
      params["pool_w"], params["pool_b"][None, :],
      params["cls_w"], params["cls_b"][None, :])

    # Reshape the lane-dense score slab [l, b*S+q, h*S+k] -> (L, B, H, S, S).
    sc = scores.reshape(L, B, S, NUM_HEADS, S).transpose(0, 1, 3, 2, 4)
    all_attn = [sc[l] for l in range(L)]
    all_ffn = [fit0.reshape(B, S, FIT_SIZE)] + [
        fits[l].reshape(B, S, FIT_SIZE) for l in range(L)]

    if logits.shape[-1] == 1:                 # torch .squeeze(-1) semantics
        logits = logits[..., 0]
    return logits, all_attn, all_ffn


# ------------------------------ main --------------------------------
if __name__ == "__main__":
    root = jax.random.PRNGKey(0)
    k_tok, k_params = jax.random.split(root)

    B, S = 2, 8
    token_ids = jax.random.randint(k_tok, (B, S), 0, VOCAB, dtype=jnp.int32)
    segment_ids = jnp.zeros((B, S), jnp.int32)
    position_ids = jnp.broadcast_to(jnp.arange(S, dtype=jnp.int32), (B, S))
    attn_mask = jnp.ones((B, S), jnp.float32)

    params = init_params(k_params)

    fwd = jax.jit(tiny_bert_forward)
    logits, all_attn, all_ffn = fwd(params, token_ids, segment_ids,
                                    position_ids, attn_mask)
    jax.block_until_ready((logits, all_attn, all_ffn))

    assert logits.shape == (B, NUM_CLASSES)
    assert len(all_attn) == NUM_LAYERS and all_attn[0].shape == (B, NUM_HEADS, S, S)
    assert len(all_ffn) == NUM_LAYERS + 1 and all_ffn[0].shape == (B, S, FIT_SIZE)
    print("KERNEL_OK")
</pallas_src>

<mosaic_0001>
module attributes {stable_mosaic.version = 11 : i64} {
  func.func @_encoder_kernel(%arg0: i32, %arg1: memref<16x32xf32, #tpu.memory_space<vmem>>, %arg2: memref<2x1x8xf32, #tpu.memory_space<vmem>>, %arg3: memref<1x32xf32, #tpu.memory_space<vmem>>, %arg4: memref<1x32xf32, #tpu.memory_space<vmem>>, %arg5: memref<32x48xf32, #tpu.memory_space<vmem>>, %arg6: memref<1x48xf32, #tpu.memory_space<vmem>>, %arg7: memref<1x32x96xf32, #tpu.memory_space<vmem>>, %arg8: memref<1x1x96xf32, #tpu.memory_space<vmem>>, %arg9: memref<1x32x32xf32, #tpu.memory_space<vmem>>, %arg10: memref<1x1x32xf32, #tpu.memory_space<vmem>>, %arg11: memref<1x1x32xf32, #tpu.memory_space<vmem>>, %arg12: memref<1x1x32xf32, #tpu.memory_space<vmem>>, %arg13: memref<1x32x64xf32, #tpu.memory_space<vmem>>, %arg14: memref<1x1x64xf32, #tpu.memory_space<vmem>>, %arg15: memref<1x64x32xf32, #tpu.memory_space<vmem>>, %arg16: memref<1x1x32xf32, #tpu.memory_space<vmem>>, %arg17: memref<1x1x32xf32, #tpu.memory_space<vmem>>, %arg18: memref<1x1x32xf32, #tpu.memory_space<vmem>>, %arg19: memref<1x32x48xf32, #tpu.memory_space<vmem>>, %arg20: memref<1x1x48xf32, #tpu.memory_space<vmem>>, %arg21: memref<32x32xf32, #tpu.memory_space<vmem>>, %arg22: memref<1x32xf32, #tpu.memory_space<vmem>>, %arg23: memref<32x3xf32, #tpu.memory_space<vmem>>, %arg24: memref<1x3xf32, #tpu.memory_space<vmem>>, %arg25: memref<16x48xf32, #tpu.memory_space<vmem>>, %arg26: memref<1x16x32xf32, #tpu.memory_space<vmem>>, %arg27: memref<1x16x48xf32, #tpu.memory_space<vmem>>, %arg28: memref<2x3xf32, #tpu.memory_space<vmem>>, %arg29: memref<16x32xf32, #tpu.memory_space<vmem>>) attributes {dimension_semantics = [#tpu.dimension_semantics<arbitrary>], iteration_bounds = array<i64: 2>, scalar_prefetch = 0 : i64, scratch_operands = 1 : i64, tpu.core_type = #tpu.core_type<tc>, window_params = [{pipeline_mode = #tpu.pipeline_mode<synchronous>, transform_indices = @transform_0, window_bounds = array<i64: 16, 32>}, {pipeline_mode = #tpu.pipeline_mode<synchronous>, transform_indices = @transform_1, window_bounds = array<i64: 2, 1, 8>}, {pipeline_mode = #tpu.pipeline_mode<synchronous>, transform_indices = @transform_2, window_bounds = array<i64: 1, 32>}, {pipeline_mode = #tpu.pipeline_mode<synchronous>, transform_indices = @transform_3, window_bounds = array<i64: 1, 32>}, {pipeline_mode = #tpu.pipeline_mode<synchronous>, transform_indices = @transform_4, window_bounds = array<i64: 32, 48>}, {pipeline_mode = #tpu.pipeline_mode<synchronous>, transform_indices = @transform_5, window_bounds = array<i64: 1, 48>}, {transform_indices = @transform_6, window_bounds = array<i64: 1, 32, 96>}, {transform_indices = @transform_7, window_bounds = array<i64: 1, 1, 96>}, {transform_indices = @transform_8, window_bounds = array<i64: 1, 32, 32>}, {transform_indices = @transform_9, window_bounds = array<i64: 1, 1, 32>}, {transform_indices = @transform_10, window_bounds = array<i64: 1, 1, 32>}, {transform_indices = @transform_11, window_bounds = array<i64: 1, 1, 32>}, {transform_indices = @transform_12, window_bounds = array<i64: 1, 32, 64>}, {transform_indices = @transform_13, window_bounds = array<i64: 1, 1, 64>}, {transform_indices = @transform_14, window_bounds = array<i64: 1, 64, 32>}, {transform_indices = @transform_15, window_bounds = array<i64: 1, 1, 32>}, {transform_indices = @transform_16, window_bounds = array<i64: 1, 1, 32>}, {transform_indices = @transform_17, window_bounds = array<i64: 1, 1, 32>}, {transform_indices = @transform_18, window_bounds = array<i64: 1, 32, 48>}, {transform_indices = @transform_19, window_bounds = array<i64: 1, 1, 48>}, {pipeline_mode = #tpu.pipeline_mode<synchronous>, transform_indices = @transform_20, window_bounds = array<i64: 32, 32>}, {pipeline_mode = #tpu.pipeline_mode<synchronous>, transform_indices = @transform_21, window_bounds = array<i64: 1, 32>}, {pipeline_mode = #tpu.pipeline_mode<synchronous>, transform_indices = @transform_22, window_bounds = array<i64: 32, 3>}, {pipeline_mode = #tpu.pipeline_mode<synchronous>, transform_indices = @transform_23, window_bounds = array<i64: 1, 3>}, {pipeline_mode = #tpu.pipeline_mode<synchronous>, transform_indices = @transform_24, window_bounds = array<i64: 16, 48>}, {transform_indices = @transform_25, window_bounds = array<i64: 1, 16, 32>}, {transform_indices = @transform_26, window_bounds = array<i64: 1, 16, 48>}, {pipeline_mode = #tpu.pipeline_mode<synchronous>, transform_indices = @transform_27, window_bounds = array<i64: 2, 3>}]} {
    %c0_i32 = arith.constant 0 : i32
    %0 = arith.cmpi eq, %arg0, %c0_i32 : i32
    %1 = arith.extui %0 : i1 to i32
    %c0_i32_0 = arith.constant 0 : i32
    %2 = arith.cmpi ne, %1, %c0_i32_0 : i32
    scf.if %2 {
      %c0_112 = arith.constant 0 : index
      %c0_113 = arith.constant 0 : index
      %238 = vector.load %arg1[%c0_112, %c0_113] : memref<16x32xf32, #tpu.memory_space<vmem>>, vector<16x32xf32>
      %c0_114 = arith.constant 0 : index
      %c0_115 = arith.constant 0 : index
      %239 = vector.load %arg3[%c0_114, %c0_115] : memref<1x32xf32, #tpu.memory_space<vmem>>, vector<1x32xf32>
      %c0_116 = arith.constant 0 : index
      %c0_117 = arith.constant 0 : index
      %240 = vector.load %arg4[%c0_116, %c0_117] : memref<1x32xf32, #tpu.memory_space<vmem>>, vector<1x32xf32>
      %cst_118 = arith.constant dense<0.000000e+00> : vector<16xf32>
      %241 = vector.multi_reduction <add>, %238, %cst_118 [1] : vector<16x32xf32> to vector<16xf32>
      %242 = vector.shape_cast %241 : vector<16xf32> to vector<16x1xf32>
      %cst_119 = arith.constant 3.200000e+01 : f32
      %243 = vector.broadcast %cst_119 : f32 to vector<16x1xf32>
      %244 = arith.divf %242, %243 : vector<16x1xf32>
      %245 = vector.broadcast %244 : vector<16x1xf32> to vector<16x32xf32>
      %246 = arith.subf %238, %245 : vector<16x32xf32>
      %247 = vector.broadcast %244 : vector<16x1xf32> to vector<16x32xf32>
      %248 = arith.subf %238, %247 : vector<16x32xf32>
      %249 = arith.mulf %246, %248 : vector<16x32xf32>
      %cst_120 = arith.constant dense<0.000000e+00> : vector<16xf32>
      %250 = vector.multi_reduction <add>, %249, %cst_120 [1] : vector<16x32xf32> to vector<16xf32>
      %251 = vector.shape_cast %250 : vector<16xf32> to vector<16x1xf32>
      %cst_121 = arith.constant 3.200000e+01 : f32
      %252 = vector.broadcast %cst_121 : f32 to vector<16x1xf32>
      %253 = arith.divf %251, %252 : vector<16x1xf32>
      %254 = vector.broadcast %244 : vector<16x1xf32> to vector<16x32xf32>
      %255 = arith.subf %238, %254 : vector<16x32xf32>
      %cst_122 = arith.constant 9.99999996E-13 : f32
      %256 = vector.broadcast %cst_122 : f32 to vector<16x1xf32>
      %257 = arith.addf %253, %256 : vector<16x1xf32>
      %258 = math.rsqrt %257 : vector<16x1xf32>
      %259 = vector.broadcast %258 : vector<16x1xf32> to vector<16x32xf32>
      %260 = arith.mulf %255, %259 : vector<16x32xf32>
      %261 = vector.broadcast %239 : vector<1x32xf32> to vector<16x32xf32>
      %262 = arith.mulf %260, %261 : vector<16x32xf32>
      %263 = vector.broadcast %240 : vector<1x32xf32> to vector<16x32xf32>
      %264 = arith.addf %262, %263 : vector<16x32xf32>
      %c0_123 = arith.constant 0 : index
      %c0_124 = arith.constant 0 : index
      %265 = vector.load %arg29[%c0_123, %c0_124] : memref<16x32xf32, #tpu.memory_space<vmem>>, vector<16x32xf32>
      tpu.vector_store %arg29[%c0_123, %c0_124], %264 {strides = array<i32>} : memref<16x32xf32, #tpu.memory_space<vmem>>, vector<16x32xf32>,
      %c0_125 = arith.constant 0 : index
      %c0_126 = arith.constant 0 : index
      %266 = vector.load %arg5[%c0_125, %c0_126] : memref<32x48xf32, #tpu.memory_space<vmem>>, vector<32x48xf32>
      %cst_127 = arith.constant dense<0.000000e+00> : vector<16x48xf32>
      %267 = tpu.matmul %264, %266, %cst_127 {dimension_numbers = #tpu.dot_dimension_numbers<[1], [0], [0], [1], [0, 0, 1, 1], [], []>} : vector<16x32xf32>, vector<32x48xf32>, vector<16x48xf32> -> vector<16x48xf32>
      %c0_128 = arith.constant 0 : index
      %c0_129 = arith.constant 0 : index
      %268 = vector.load %arg6[%c0_128, %c0_129] : memref<1x48xf32, #tpu.memory_space<vmem>>, vector<1x48xf32>
      %269 = vector.broadcast %268 : vector<1x48xf32> to vector<16x48xf32>
      %270 = arith.addf %267, %269 : vector<16x48xf32>
      %c0_130 = arith.constant 0 : index
      %c0_131 = arith.constant 0 : index
      %271 = vector.load %arg25[%c0_130, %c0_131] : memref<16x48xf32, #tpu.memory_space<vmem>>, vector<16x48xf32>
      tpu.vector_store %arg25[%c0_130, %c0_131], %270 {strides = array<i32>} : memref<16x48xf32, #tpu.memory_space<vmem>>, vector<16x48xf32>,
    } else {
    }
    %c0 = arith.constant 0 : index
    %c0_1 = arith.constant 0 : index
    %3 = vector.load %arg29[%c0, %c0_1] : memref<16x32xf32, #tpu.memory_space<vmem>>, vector<16x32xf32>
    %c0_2 = arith.constant 0 : index
    %c0_3 = arith.constant 0 : index
    %c0_4 = arith.constant 0 : index
    %4 = vector.load %arg2[%c0_2, %c0_3, %c0_4] : memref<2x1x8xf32, #tpu.memory_space<vmem>>, vector<2x1x8xf32>
    %c0_5 = arith.constant 0 : index
    %c0_6 = arith.constant 0 : index
    %c0_7 = arith.constant 0 : index
    %5 = vector.load %arg7[%c0_5, %c0_6, %c0_7] : memref<1x32x96xf32, #tpu.memory_space<vmem>>, vector<1x32x96xf32>
    %6 = vector.shape_cast %5 : vector<1x32x96xf32> to vector<32x96xf32>
    %cst = arith.constant dense<0.000000e+00> : vector<16x96xf32>
    %7 = tpu.matmul %3, %6, %cst {dimension_numbers = #tpu.dot_dimension_numbers<[1], [0], [0], [1], [0, 0, 1, 1], [], []>} : vector<16x32xf32>, vector<32x96xf32>, vector<16x96xf32> -> vector<16x96xf32>
    %c0_8 = arith.constant 0 : index
    %c0_9 = arith.constant 0 : index
    %c0_10 = arith.constant 0 : index
    %8 = vector.load %arg8[%c0_8, %c0_9, %c0_10] : memref<1x1x96xf32, #tpu.memory_space<vmem>>, vector<1x1x96xf32>
    %9 = vector.shape_cast %8 : vector<1x1x96xf32> to vector<1x96xf32>
    %10 = vector.broadcast %9 : vector<1x96xf32> to vector<16x96xf32>
    %11 = arith.addf %7, %10 : vector<16x96xf32>
    %c0_11 = arith.constant 0 : index
    %c0_12 = arith.constant 0 : index
    %c0_13 = arith.constant 0 : index
    %12 = vector.load %arg10[%c0_11, %c0_12, %c0_13] : memref<1x1x32xf32, #tpu.memory_space<vmem>>, vector<1x1x32xf32>
    %13 = vector.shape_cast %12 : vector<1x1x32xf32> to vector<1x32xf32>
    %14 = vector.extract_strided_slice %11 {offsets = [0, 0], sizes = [16, 8], strides = [1, 1]} : vector<16x96xf32> to vector<16x8xf32>
    %15 = vector.shape_cast %14 : vector<16x8xf32> to vector<2x8x8xf32>
    %16 = vector.extract_strided_slice %11 {offsets = [0, 32], sizes = [16, 8], strides = [1, 1]} : vector<16x96xf32> to vector<16x8xf32>
    %17 = vector.shape_cast %16 : vector<16x8xf32> to vector<2x8x8xf32>
    %18 = vector.extract_strided_slice %11 {offsets = [0, 64], sizes = [16, 8], strides = [1, 1]} : vector<16x96xf32> to vector<16x8xf32>
    %19 = vector.shape_cast %18 : vector<16x8xf32> to vector<2x8x8xf32>
    "tpu.trace_start"() <{level = 10 : i32, message = "bqd,bkd->bqk"}> : () -> ()
    %cst_14 = arith.constant dense<0.000000e+00> : vector<2x8x8xf32>
    %20 = tpu.matmul %15, %17, %cst_14 {dimension_numbers = #tpu.dot_dimension_numbers<[2], [2], [1], [1], [0, 0, 0, 1, 1, 1], [0], [0]>} : vector<2x8x8xf32>, vector<2x8x8xf32>, vector<2x8x8xf32> -> vector<2x8x8xf32>
    "tpu.trace_stop"() : () -> ()
    %cst_15 = arith.constant 0.353553385 : f32
    %21 = vector.broadcast %cst_15 : f32 to vector<2x8x8xf32>
    %22 = arith.mulf %20, %21 : vector<2x8x8xf32>
    %23 = vector.broadcast %4 : vector<2x1x8xf32> to vector<2x8x8xf32>
    %24 = arith.addf %22, %23 : vector<2x8x8xf32>
    %25 = vector.shape_cast %24 : vector<2x8x8xf32> to vector<16x8xf32>
    %c0_16 = arith.constant 0 : index
    %c0_17 = arith.constant 0 : index
    %c0_18 = arith.constant 0 : index
    %26 = vector.load %arg26[%c0_16, %c0_17, %c0_18] : memref<1x16x32xf32, #tpu.memory_space<vmem>>, vector<1x16x8xf32>
    %27 = vector.shape_cast %26 : vector<1x16x8xf32> to vector<16x8xf32>
    %28 = vector.shape_cast %25 : vector<16x8xf32> to vector<1x16x8xf32>
    tpu.vector_store %arg26[%c0_16, %c0_17, %c0_18], %28 {strides = array<i32>} : memref<1x16x32xf32, #tpu.memory_space<vmem>>, vector<1x16x8xf32>,
    %cst_19 = arith.constant dense<0xFF800000> : vector<2x8xf32>
    %29 = vector.multi_reduction <maximumf>, %24, %cst_19 [2] : vector<2x8x8xf32> to vector<2x8xf32>
    %30 = vector.shape_cast %29 : vector<2x8xf32> to vector<2x8x1xf32>
    %31 = vector.broadcast %30 : vector<2x8x1xf32> to vector<2x8x8xf32>
    %32 = arith.subf %24, %31 : vector<2x8x8xf32>
    %33 = math.exp %32 : vector<2x8x8xf32>
    %cst_20 = arith.constant dense<0.000000e+00> : vector<2x8xf32>
    %34 = vector.multi_reduction <add>, %33, %cst_20 [2] : vector<2x8x8xf32> to vector<2x8xf32>
    %35 = vector.shape_cast %34 : vector<2x8xf32> to vector<2x8x1xf32>
    %36 = tpu.reciprocal %35 {approx = true} : vector<2x8x1xf32> -> vector<2x8x1xf32>
    %37 = vector.broadcast %36 : vector<2x8x1xf32> to vector<2x8x8xf32>
    %38 = arith.mulf %33, %37 : vector<2x8x8xf32>
    "tpu.trace_start"() <{level = 10 : i32, message = "bqk,bkd->bqd"}> : () -> ()
    %cst_21 = arith.constant dense<0.000000e+00> : vector<2x8x8xf32>
    %39 = tpu.matmul %38, %19, %cst_21 {dimension_numbers = #tpu.dot_dimension_numbers<[2], [1], [1], [2], [0, 0, 0, 1, 1, 2], [0], [0]>} : vector<2x8x8xf32>, vector<2x8x8xf32>, vector<2x8x8xf32> -> vector<2x8x8xf32>
    "tpu.trace_stop"() : () -> ()
    %40 = vector.shape_cast %39 : vector<2x8x8xf32> to vector<16x8xf32>
    %c0_22 = arith.constant 0 : index
    %c0_23 = arith.constant 0 : index
    %c0_24 = arith.constant 0 : index
    %41 = vector.load %arg9[%c0_22, %c0_23, %c0_24] : memref<1x32x32xf32, #tpu.memory_space<vmem>>, vector<1x8x32xf32>
    %42 = vector.shape_cast %41 : vector<1x8x32xf32> to vector<8x32xf32>
    %cst_25 = arith.constant dense<0.000000e+00> : vector<16x32xf32>
    %43 = tpu.matmul %40, %42, %cst_25 {dimension_numbers = #tpu.dot_dimension_numbers<[1], [0], [0], [1], [0, 0, 1, 1], [], []>} : vector<16x8xf32>, vector<8x32xf32>, vector<16x32xf32> -> vector<16x32xf32>
    %44 = vector.broadcast %13 : vector<1x32xf32> to vector<16x32xf32>
    %45 = arith.addf %44, %43 : vector<16x32xf32>
    %46 = vector.extract_strided_slice %11 {offsets = [0, 8], sizes = [16, 8], strides = [1, 1]} : vector<16x96xf32> to vector<16x8xf32>
    %47 = vector.shape_cast %46 : vector<16x8xf32> to vector<2x8x8xf32>
    %48 = vector.extract_strided_slice %11 {offsets = [0, 40], sizes = [16, 8], strides = [1, 1]} : vector<16x96xf32> to vector<16x8xf32>
    %49 = vector.shape_cast %48 : vector<16x8xf32> to vector<2x8x8xf32>
    %50 = vector.extract_strided_slice %11 {offsets = [0, 72], sizes = [16, 8], strides = [1, 1]} : vector<16x96xf32> to vector<16x8xf32>
    %51 = vector.shape_cast %50 : vector<16x8xf32> to vector<2x8x8xf32>
    "tpu.trace_start"() <{level = 10 : i32, message = "bqd,bkd->bqk"}> : () -> ()
    %cst_26 = arith.constant dense<0.000000e+00> : vector<2x8x8xf32>
    %52 = tpu.matmul %47, %49, %cst_26 {dimension_numbers = #tpu.dot_dimension_numbers<[2], [2], [1], [1], [0, 0, 0, 1, 1, 1], [0], [0]>} : vector<2x8x8xf32>, vector<2x8x8xf32>, vector<2x8x8xf32> -> vector<2x8x8xf32>
    "tpu.trace_stop"() : () -> ()
    %cst_27 = arith.constant 0.353553385 : f32
    %53 = vector.broadcast %cst_27 : f32 to vector<2x8x8xf32>
    %54 = arith.mulf %52, %53 : vector<2x8x8xf32>
    %55 = vector.broadcast %4 : vector<2x1x8xf32> to vector<2x8x8xf32>
    %56 = arith.addf %54, %55 : vector<2x8x8xf32>
    %57 = vector.shape_cast %56 : vector<2x8x8xf32> to vector<16x8xf32>
    %c0_28 = arith.constant 0 : index
    %c0_29 = arith.constant 0 : index
    %c8 = arith.constant 8 : index
    %58 = vector.load %arg26[%c0_28, %c0_29, %c8] : memref<1x16x32xf32, #tpu.memory_space<vmem>>, vector<1x16x8xf32>
    %59 = vector.shape_cast %58 : vector<1x16x8xf32> to vector<16x8xf32>
    %60 = vector.shape_cast %57 : vector<16x8xf32> to vector<1x16x8xf32>
    tpu.vector_store %arg26[%c0_28, %c0_29, %c8], %60 {strides = array<i32>} : memref<1x16x32xf32, #tpu.memory_space<vmem>>, vector<1x16x8xf32>,
    %cst_30 = arith.constant dense<0xFF800000> : vector<2x8xf32>
    %61 = vector.multi_reduction <maximumf>, %56, %cst_30 [2] : vector<2x8x8xf32> to vector<2x8xf32>
    %62 = vector.shape_cast %61 : vector<2x8xf32> to vector<2x8x1xf32>
    %63 = vector.broadcast %62 : vector<2x8x1xf32> to vector<2x8x8xf32>
    %64 = arith.subf %56, %63 : vector<2x8x8xf32>
    %65 = math.exp %64 : vector<2x8x8xf32>
    %cst_31 = arith.constant dense<0.000000e+00> : vector<2x8xf32>
    %66 = vector.multi_reduction <add>, %65, %cst_31 [2] : vector<2x8x8xf32> to vector<2x8xf32>
    %67 = vector.shape_cast %66 : vector<2x8xf32> to vector<2x8x1xf32>
    %68 = tpu.reciprocal %67 {approx = true} : vector<2x8x1xf32> -> vector<2x8x1xf32>
    %69 = vector.broadcast %68 : vector<2x8x1xf32> to vector<2x8x8xf32>
    %70 = arith.mulf %65, %69 : vector<2x8x8xf32>
    "tpu.trace_start"() <{level = 10 : i32, message = "bqk,bkd->bqd"}> : () -> ()
    %cst_32 = arith.constant dense<0.000000e+00> : vector<2x8x8xf32>
    %71 = tpu.matmul %70, %51, %cst_32 {dimension_numbers = #tpu.dot_dimension_numbers<[2], [1], [1], [2], [0, 0, 0, 1, 1, 2], [0], [0]>} : vector<2x8x8xf32>, vector<2x8x8xf32>, vector<2x8x8xf32> -> vector<2x8x8xf32>
    "tpu.trace_stop"() : () -> ()
    %72 = vector.shape_cast %71 : vector<2x8x8xf32> to vector<16x8xf32>
    %c0_33 = arith.constant 0 : index
    %c8_34 = arith.constant 8 : index
    %c0_35 = arith.constant 0 : index
    %73 = vector.load %arg9[%c0_33, %c8_34, %c0_35] : memref<1x32x32xf32, #tpu.memory_space<vmem>>, vector<1x8x32xf32>
    %74 = vector.shape_cast %73 : vector<1x8x32xf32> to vector<8x32xf32>
    %cst_36 = arith.constant dense<0.000000e+00> : vector<16x32xf32>
    %75 = tpu.matmul %72, %74, %cst_36 {dimension_numbers = #tpu.dot_dimension_numbers<[1], [0], [0], [1], [0, 0, 1, 1], [], []>} : vector<16x8xf32>, vector<8x32xf32>, vector<16x32xf32> -> vector<16x32xf32>
    %76 = arith.addf %45, %75 : vector<16x32xf32>
    %77 = vector.extract_strided_slice %11 {offsets = [0, 16], sizes = [16, 8], strides = [1, 1]} : vector<16x96xf32> to vector<16x8xf32>
    %78 = vector.shape_cast %77 : vector<16x8xf32> to vector<2x8x8xf32>
    %79 = vector.extract_strided_slice %11 {offsets = [0, 48], sizes = [16, 8], strides = [1, 1]} : vector<16x96xf32> to vector<16x8xf32>
    %80 = vector.shape_cast %79 : vector<16x8xf32> to vector<2x8x8xf32>
    %81 = vector.extract_strided_slice %11 {offsets = [0, 80], sizes = [16, 8], strides = [1, 1]} : vector<16x96xf32> to vector<16x8xf32>
    %82 = vector.shape_cast %81 : vector<16x8xf32> to vector<2x8x8xf32>
    "tpu.trace_start"() <{level = 10 : i32, message = "bqd,bkd->bqk"}> : () -> ()
    %cst_37 = arith.constant dense<0.000000e+00> : vector<2x8x8xf32>
    %83 = tpu.matmul %78, %80, %cst_37 {dimension_numbers = #tpu.dot_dimension_numbers<[2], [2], [1], [1], [0, 0, 0, 1, 1, 1], [0], [0]>} : vector<2x8x8xf32>, vector<2x8x8xf32>, vector<2x8x8xf32> -> vector<2x8x8xf32>
    "tpu.trace_stop"() : () -> ()
    %cst_38 = arith.constant 0.353553385 : f32
    %84 = vector.broadcast %cst_38 : f32 to vector<2x8x8xf32>
    %85 = arith.mulf %83, %84 : vector<2x8x8xf32>
    %86 = vector.broadcast %4 : vector<2x1x8xf32> to vector<2x8x8xf32>
    %87 = arith.addf %85, %86 : vector<2x8x8xf32>
    %88 = vector.shape_cast %87 : vector<2x8x8xf32> to vector<16x8xf32>
    %c0_39 = arith.constant 0 : index
    %c0_40 = arith.constant 0 : index
    %c16 = arith.constant 16 : index
    %89 = vector.load %arg26[%c0_39, %c0_40, %c16] : memref<1x16x32xf32, #tpu.memory_space<vmem>>, vector<1x16x8xf32>
    %90 = vector.shape_cast %89 : vector<1x16x8xf32> to vector<16x8xf32>
    %91 = vector.shape_cast %88 : vector<16x8xf32> to vector<1x16x8xf32>
    tpu.vector_store %arg26[%c0_39, %c0_40, %c16], %91 {strides = array<i32>} : memref<1x16x32xf32, #tpu.memory_space<vmem>>, vector<1x16x8xf32>,
    %cst_41 = arith.constant dense<0xFF800000> : vector<2x8xf32>
    %92 = vector.multi_reduction <maximumf>, %87, %cst_41 [2] : vector<2x8x8xf32> to vector<2x8xf32>
    %93 = vector.shape_cast %92 : vector<2x8xf32> to vector<2x8x1xf32>
    %94 = vector.broadcast %93 : vector<2x8x1xf32> to vector<2x8x8xf32>
    %95 = arith.subf %87, %94 : vector<2x8x8xf32>
    %96 = math.exp %95 : vector<2x8x8xf32>
    %cst_42 = arith.constant dense<0.000000e+00> : vector<2x8xf32>
    %97 = vector.multi_reduction <add>, %96, %cst_42 [2] : vector<2x8x8xf32> to vector<2x8xf32>
    %98 = vector.shape_cast %97 : vector<2x8xf32> to vector<2x8x1xf32>
    %99 = tpu.reciprocal %98 {approx = true} : vector<2x8x1xf32> -> vector<2x8x1xf32>
    %100 = vector.broadcast %99 : vector<2x8x1xf32> to vector<2x8x8xf32>
    %101 = arith.mulf %96, %100 : vector<2x8x8xf32>
    "tpu.trace_start"() <{level = 10 : i32, message = "bqk,bkd->bqd"}> : () -> ()
    %cst_43 = arith.constant dense<0.000000e+00> : vector<2x8x8xf32>
    %102 = tpu.matmul %101, %82, %cst_43 {dimension_numbers = #tpu.dot_dimension_numbers<[2], [1], [1], [2], [0, 0, 0, 1, 1, 2], [0], [0]>} : vector<2x8x8xf32>, vector<2x8x8xf32>, vector<2x8x8xf32> -> vector<2x8x8xf32>
    "tpu.trace_stop"() : () -> ()
    %103 = vector.shape_cast %102 : vector<2x8x8xf32> to vector<16x8xf32>
    %c0_44 = arith.constant 0 : index
    %c16_45 = arith.constant 16 : index
    %c0_46 = arith.constant 0 : index
    %104 = vector.load %arg9[%c0_44, %c16_45, %c0_46] : memref<1x32x32xf32, #tpu.memory_space<vmem>>, vector<1x8x32xf32>
    %105 = vector.shape_cast %104 : vector<1x8x32xf32> to vector<8x32xf32>
    %cst_47 = arith.constant dense<0.000000e+00> : vector<16x32xf32>
    %106 = tpu.matmul %103, %105, %cst_47 {dimension_numbers = #tpu.dot_dimension_numbers<[1], [0], [0], [1], [0, 0, 1, 1], [], []>} : vector<16x8xf32>, vector<8x32xf32>, vector<16x32xf32> -> vector<16x32xf32>
    %107 = arith.addf %76, %106 : vector<16x32xf32>
    %108 = vector.extract_strided_slice %11 {offsets = [0, 24], sizes = [16, 8], strides = [1, 1]} : vector<16x96xf32> to vector<16x8xf32>
    %109 = vector.shape_cast %108 : vector<16x8xf32> to vector<2x8x8xf32>
    %110 = vector.extract_strided_slice %11 {offsets = [0, 56], sizes = [16, 8], strides = [1, 1]} : vector<16x96xf32> to vector<16x8xf32>
    %111 = vector.shape_cast %110 : vector<16x8xf32> to vector<2x8x8xf32>
    %112 = vector.extract_strided_slice %11 {offsets = [0, 88], sizes = [16, 8], strides = [1, 1]} : vector<16x96xf32> to vector<16x8xf32>
    %113 = vector.shape_cast %112 : vector<16x8xf32> to vector<2x8x8xf32>
    "tpu.trace_start"() <{level = 10 : i32, message = "bqd,bkd->bqk"}> : () -> ()
    %cst_48 = arith.constant dense<0.000000e+00> : vector<2x8x8xf32>
    %114 = tpu.matmul %109, %111, %cst_48 {dimension_numbers = #tpu.dot_dimension_numbers<[2], [2], [1], [1], [0, 0, 0, 1, 1, 1], [0], [0]>} : vector<2x8x8xf32>, vector<2x8x8xf32>, vector<2x8x8xf32> -> vector<2x8x8xf32>
    "tpu.trace_stop"() : () -> ()
    %cst_49 = arith.constant 0.353553385 : f32
    %115 = vector.broadcast %cst_49 : f32 to vector<2x8x8xf32>
    %116 = arith.mulf %114, %115 : vector<2x8x8xf32>
    %117 = vector.broadcast %4 : vector<2x1x8xf32> to vector<2x8x8xf32>
    %118 = arith.addf %116, %117 : vector<2x8x8xf32>
    %119 = vector.shape_cast %118 : vector<2x8x8xf32> to vector<16x8xf32>
    %c0_50 = arith.constant 0 : index
    %c0_51 = arith.constant 0 : index
    %c24 = arith.constant 24 : index
    %120 = vector.load %arg26[%c0_50, %c0_51, %c24] : memref<1x16x32xf32, #tpu.memory_space<vmem>>, vector<1x16x8xf32>
    %121 = vector.shape_cast %120 : vector<1x16x8xf32> to vector<16x8xf32>
    %122 = vector.shape_cast %119 : vector<16x8xf32> to vector<1x16x8xf32>
    tpu.vector_store %arg26[%c0_50, %c0_51, %c24], %122 {strides = array<i32>} : memref<1x16x32xf32, #tpu.memory_space<vmem>>, vector<1x16x8xf32>,
    %cst_52 = arith.constant dense<0xFF800000> : vector<2x8xf32>
    %123 = vector.multi_reduction <maximumf>, %118, %cst_52 [2] : vector<2x8x8xf32> to vector<2x8xf32>
    %124 = vector.shape_cast %123 : vector<2x8xf32> to vector<2x8x1xf32>
    %125 = vector.broadcast %124 : vector<2x8x1xf32> to vector<2x8x8xf32>
    %126 = arith.subf %118, %125 : vector<2x8x8xf32>
    %127 = math.exp %126 : vector<2x8x8xf32>
    %cst_53 = arith.constant dense<0.000000e+00> : vector<2x8xf32>
    %128 = vector.multi_reduction <add>, %127, %cst_53 [2] : vector<2x8x8xf32> to vector<2x8xf32>
    %129 = vector.shape_cast %128 : vector<2x8xf32> to vector<2x8x1xf32>
    %130 = tpu.reciprocal %129 {approx = true} : vector<2x8x1xf32> -> vector<2x8x1xf32>
    %131 = vector.broadcast %130 : vector<2x8x1xf32> to vector<2x8x8xf32>
    %132 = arith.mulf %127, %131 : vector<2x8x8xf32>
    "tpu.trace_start"() <{level = 10 : i32, message = "bqk,bkd->bqd"}> : () -> ()
    %cst_54 = arith.constant dense<0.000000e+00> : vector<2x8x8xf32>
    %133 = tpu.matmul %132, %113, %cst_54 {dimension_numbers = #tpu.dot_dimension_numbers<[2], [1], [1], [2], [0, 0, 0, 1, 1, 2], [0], [0]>} : vector<2x8x8xf32>, vector<2x8x8xf32>, vector<2x8x8xf32> -> vector<2x8x8xf32>
    "tpu.trace_stop"() : () -> ()
    %134 = vector.shape_cast %133 : vector<2x8x8xf32> to vector<16x8xf32>
    %c0_55 = arith.constant 0 : index
    %c24_56 = arith.constant 24 : index
    %c0_57 = arith.constant 0 : index
    %135 = vector.load %arg9[%c0_55, %c24_56, %c0_57] : memref<1x32x32xf32, #tpu.memory_space<vmem>>, vector<1x8x32xf32>
    %136 = vector.shape_cast %135 : vector<1x8x32xf32> to vector<8x32xf32>
    %cst_58 = arith.constant dense<0.000000e+00> : vector<16x32xf32>
    %137 = tpu.matmul %134, %136, %cst_58 {dimension_numbers = #tpu.dot_dimension_numbers<[1], [0], [0], [1], [0, 0, 1, 1], [], []>} : vector<16x8xf32>, vector<8x32xf32>, vector<16x32xf32> -> vector<16x32xf32>
    %138 = arith.addf %107, %137 : vector<16x32xf32>
    %139 = arith.addf %138, %3 : vector<16x32xf32>
    %c0_59 = arith.constant 0 : index
    %c0_60 = arith.constant 0 : index
    %c0_61 = arith.constant 0 : index
    %140 = vector.load %arg11[%c0_59, %c0_60, %c0_61] : memref<1x1x32xf32, #tpu.memory_space<vmem>>, vector<1x1x32xf32>
    %141 = vector.shape_cast %140 : vector<1x1x32xf32> to vector<1x32xf32>
    %c0_62 = arith.constant 0 : index
    %c0_63 = arith.constant 0 : index
    %c0_64 = arith.constant 0 : index
    %142 = vector.load %arg12[%c0_62, %c0_63, %c0_64] : memref<1x1x32xf32, #tpu.memory_space<vmem>>, vector<1x1x32xf32>
    %143 = vector.shape_cast %142 : vector<1x1x32xf32> to vector<1x32xf32>
    %cst_65 = arith.constant dense<0.000000e+00> : vector<16xf32>
    %144 = vector.multi_reduction <add>, %139, %cst_65 [1] : vector<16x32xf32> to vector<16xf32>
    %145 = vector.shape_cast %144 : vector<16xf32> to vector<16x1xf32>
    %cst_66 = arith.constant 3.200000e+01 : f32
    %146 = vector.broadcast %cst_66 : f32 to vector<16x1xf32>
    %147 = arith.divf %145, %146 : vector<16x1xf32>
    %148 = vector.broadcast %147 : vector<16x1xf32> to vector<16x32xf32>
    %149 = arith.subf %139, %148 : vector<16x32xf32>
    %150 = vector.broadcast %147 : vector<16x1xf32> to vector<16x32xf32>
    %151 = arith.subf %139, %150 : vector<16x32xf32>
    %152 = arith.mulf %149, %151 : vector<16x32xf32>
    %cst_67 = arith.constant dense<0.000000e+00> : vector<16xf32>
    %153 = vector.multi_reduction <add>, %152, %cst_67 [1] : vector<16x32xf32> to vector<16xf32>
    %154 = vector.shape_cast %153 : vector<16xf32> to vector<16x1xf32>
    %cst_68 = arith.constant 3.200000e+01 : f32
    %155 = vector.broadcast %cst_68 : f32 to vector<16x1xf32>
    %156 = arith.divf %154, %155 : vector<16x1xf32>
    %157 = vector.broadcast %147 : vector<16x1xf32> to vector<16x32xf32>
    %158 = arith.subf %139, %157 : vector<16x32xf32>
    %cst_69 = arith.constant 9.99999996E-13 : f32
    %159 = vector.broadcast %cst_69 : f32 to vector<16x1xf32>
    %160 = arith.addf %156, %159 : vector<16x1xf32>
    %161 = math.rsqrt %160 : vector<16x1xf32>
    %162 = vector.broadcast %161 : vector<16x1xf32> to vector<16x32xf32>
    %163 = arith.mulf %158, %162 : vector<16x32xf32>
    %164 = vector.broadcast %141 : vector<1x32xf32> to vector<16x32xf32>
    %165 = arith.mulf %163, %164 : vector<16x32xf32>
    %166 = vector.broadcast %143 : vector<1x32xf32> to vector<16x32xf32>
    %167 = arith.addf %165, %166 : vector<16x32xf32>
    %c0_70 = arith.constant 0 : index
    %c0_71 = arith.constant 0 : index
    %c0_72 = arith.constant 0 : index
    %168 = vector.load %arg13[%c0_70, %c0_71, %c0_72] : memref<1x32x64xf32, #tpu.memory_space<vmem>>, vector<1x32x64xf32>
    %169 = vector.shape_cast %168 : vector<1x32x64xf32> to vector<32x64xf32>
    %cst_73 = arith.constant dense<0.000000e+00> : vector<16x64xf32>
    %170 = tpu.matmul %167, %169, %cst_73 {dimension_numbers = #tpu.dot_dimension_numbers<[1], [0], [0], [1], [0, 0, 1, 1], [], []>} : vector<16x32xf32>, vector<32x64xf32>, vector<16x64xf32> -> vector<16x64xf32>
    %c0_74 = arith.constant 0 : index
    %c0_75 = arith.constant 0 : index
    %c0_76 = arith.constant 0 : index
    %171 = vector.load %arg14[%c0_74, %c0_75, %c0_76] : memref<1x1x64xf32, #tpu.memory_space<vmem>>, vector<1x1x64xf32>
    %172 = vector.shape_cast %171 : vector<1x1x64xf32> to vector<1x64xf32>
    %173 = vector.broadcast %172 : vector<1x64xf32> to vector<16x64xf32>
    %174 = arith.addf %170, %173 : vector<16x64xf32>
    %175 = arith.mulf %174, %174 : vector<16x64xf32>
    %176 = arith.mulf %174, %175 : vector<16x64xf32>
    %cst_77 = arith.constant 4.471500e-02 : f32
    %177 = vector.broadcast %cst_77 : f32 to vector<16x64xf32>
    %178 = arith.mulf %177, %176 : vector<16x64xf32>
    %179 = arith.addf %174, %178 : vector<16x64xf32>
    %cst_78 = arith.constant 0.797884583 : f32
    %180 = vector.broadcast %cst_78 : f32 to vector<16x64xf32>
    %181 = arith.mulf %180, %179 : vector<16x64xf32>
    %182 = math.tanh %181 : vector<16x64xf32>
    %cst_79 = arith.constant 1.000000e+00 : f32
    %183 = vector.broadcast %cst_79 : f32 to vector<16x64xf32>
    %184 = arith.addf %183, %182 : vector<16x64xf32>
    %cst_80 = arith.constant 5.000000e-01 : f32
    %185 = vector.broadcast %cst_80 : f32 to vector<16x64xf32>
    %186 = arith.mulf %185, %184 : vector<16x64xf32>
    %187 = arith.mulf %174, %186 : vector<16x64xf32>
    %c0_81 = arith.constant 0 : index
    %c0_82 = arith.constant 0 : index
    %c0_83 = arith.constant 0 : index
    %188 = vector.load %arg15[%c0_81, %c0_82, %c0_83] : memref<1x64x32xf32, #tpu.memory_space<vmem>>, vector<1x64x32xf32>
    %189 = vector.shape_cast %188 : vector<1x64x32xf32> to vector<64x32xf32>
    %cst_84 = arith.constant dense<0.000000e+00> : vector<16x32xf32>
    %190 = tpu.matmul %187, %189, %cst_84 {dimension_numbers = #tpu.dot_dimension_numbers<[1], [0], [0], [1], [0, 0, 1, 1], [], []>} : vector<16x64xf32>, vector<64x32xf32>, vector<16x32xf32> -> vector<16x32xf32>
    %c0_85 = arith.constant 0 : index
    %c0_86 = arith.constant 0 : index
    %c0_87 = arith.constant 0 : index
    %191 = vector.load %arg16[%c0_85, %c0_86, %c0_87] : memref<1x1x32xf32, #tpu.memory_space<vmem>>, vector<1x1x32xf32>
    %192 = vector.shape_cast %191 : vector<1x1x32xf32> to vector<1x32xf32>
    %193 = vector.broadcast %192 : vector<1x32xf32> to vector<16x32xf32>
    %194 = arith.addf %190, %193 : vector<16x32xf32>
    %195 = arith.addf %194, %167 : vector<16x32xf32>
    %c0_88 = arith.constant 0 : index
    %c0_89 = arith.constant 0 : index
    %c0_90 = arith.constant 0 : index
    %196 = vector.load %arg17[%c0_88, %c0_89, %c0_90] : memref<1x1x32xf32, #tpu.memory_space<vmem>>, vector<1x1x32xf32>
    %197 = vector.shape_cast %196 : vector<1x1x32xf32> to vector<1x32xf32>
    %c0_91 = arith.constant 0 : index
    %c0_92 = arith.constant 0 : index
    %c0_93 = arith.constant 0 : index
    %198 = vector.load %arg18[%c0_91, %c0_92, %c0_93] : memref<1x1x32xf32, #tpu.memory_space<vmem>>, vector<1x1x32xf32>
    %199 = vector.shape_cast %198 : vector<1x1x32xf32> to vector<1x32xf32>
    %cst_94 = arith.constant dense<0.000000e+00> : vector<16xf32>
    %200 = vector.multi_reduction <add>, %195, %cst_94 [1] : vector<16x32xf32> to vector<16xf32>
    %201 = vector.shape_cast %200 : vector<16xf32> to vector<16x1xf32>
    %cst_95 = arith.constant 3.200000e+01 : f32
    %202 = vector.broadcast %cst_95 : f32 to vector<16x1xf32>
    %203 = arith.divf %201, %202 : vector<16x1xf32>
    %204 = vector.broadcast %203 : vector<16x1xf32> to vector<16x32xf32>
    %205 = arith.subf %195, %204 : vector<16x32xf32>
    %206 = vector.broadcast %203 : vector<16x1xf32> to vector<16x32xf32>
    %207 = arith.subf %195, %206 : vector<16x32xf32>
    %208 = arith.mulf %205, %207 : vector<16x32xf32>
    %cst_96 = arith.constant dense<0.000000e+00> : vector<16xf32>
    %209 = vector.multi_reduction <add>, %208, %cst_96 [1] : vector<16x32xf32> to vector<16xf32>
    %210 = vector.shape_cast %209 : vector<16xf32> to vector<16x1xf32>
    %cst_97 = arith.constant 3.200000e+01 : f32
    %211 = vector.broadcast %cst_97 : f32 to vector<16x1xf32>
    %212 = arith.divf %210, %211 : vector<16x1xf32>
    %213 = vector.broadcast %203 : vector<16x1xf32> to vector<16x32xf32>
    %214 = arith.subf %195, %213 : vector<16x32xf32>
    %cst_98 = arith.constant 9.99999996E-13 : f32
    %215 = vector.broadcast %cst_98 : f32 to vector<16x1xf32>
    %216 = arith.addf %212, %215 : vector<16x1xf32>
    %217 = math.rsqrt %216 : vector<16x1xf32>
    %218 = vector.broadcast %217 : vector<16x1xf32> to vector<16x32xf32>
    %219 = arith.mulf %214, %218 : vector<16x32xf32>
    %220 = vector.broadcast %197 : vector<1x32xf32> to vector<16x32xf32>
    %221 = arith.mulf %219, %220 : vector<16x32xf32>
    %222 = vector.broadcast %199 : vector<1x32xf32> to vector<16x32xf32>
    %223 = arith.addf %221, %222 : vector<16x32xf32>
    %c0_99 = arith.constant 0 : index
    %c0_100 = arith.constant 0 : index
    %224 = vector.load %arg29[%c0_99, %c0_100] : memref<16x32xf32, #tpu.memory_space<vmem>>, vector<16x32xf32>
    tpu.vector_store %arg29[%c0_99, %c0_100], %223 {strides = array<i32>} : memref<16x32xf32, #tpu.memory_space<vmem>>, vector<16x32xf32>,
    %c0_101 = arith.constant 0 : index
    %c0_102 = arith.constant 0 : index
    %c0_103 = arith.constant 0 : index
    %225 = vector.load %arg19[%c0_101, %c0_102, %c0_103] : memref<1x32x48xf32, #tpu.memory_space<vmem>>, vector<1x32x48xf32>
    %226 = vector.shape_cast %225 : vector<1x32x48xf32> to vector<32x48xf32>
    %cst_104 = arith.constant dense<0.000000e+00> : vector<16x48xf32>
    %227 = tpu.matmul %223, %226, %cst_104 {dimension_numbers = #tpu.dot_dimension_numbers<[1], [0], [0], [1], [0, 0, 1, 1], [], []>} : vector<16x32xf32>, vector<32x48xf32>, vector<16x48xf32> -> vector<16x48xf32>
    %c0_105 = arith.constant 0 : index
    %c0_106 = arith.constant 0 : index
    %c0_107 = arith.constant 0 : index
    %228 = vector.load %arg20[%c0_105, %c0_106, %c0_107] : memref<1x1x48xf32, #tpu.memory_space<vmem>>, vector<1x1x48xf32>
    %229 = vector.shape_cast %228 : vector<1x1x48xf32> to vector<1x48xf32>
    %230 = vector.broadcast %229 : vector<1x48xf32> to vector<16x48xf32>
    %231 = arith.addf %227, %230 : vector<16x48xf32>
    %c0_108 = arith.constant 0 : index
    %c0_109 = arith.constant 0 : index
    %c0_110 = arith.constant 0 : index
    %232 = vector.load %arg27[%c0_108, %c0_109, %c0_110] : memref<1x16x48xf32, #tpu.memory_space<vmem>>, vector<1x16x48xf32>
    %233 = vector.shape_cast %232 : vector<1x16x48xf32> to vector<16x48xf32>
    %234 = vector.shape_cast %231 : vector<16x48xf32> to vector<1x16x48xf32>
    tpu.vector_store %arg27[%c0_108, %c0_109, %c0_110], %234 {strides = array<i32>} : memref<1x16x48xf32, #tpu.memory_space<vmem>>, vector<1x16x48xf32>,
    %c1_i32 = arith.constant 1 : i32
    %235 = arith.cmpi eq, %arg0, %c1_i32 : i32
    %236 = arith.extui %235 : i1 to i32
    %c0_i32_111 = arith.constant 0 : i32
    %237 = arith.cmpi ne, %236, %c0_i32_111 : i32
    scf.if %237 {
      %238 = vector.shape_cast %223 : vector<16x32xf32> to vector<2x8x32xf32>
      %239 = vector.extract_strided_slice %238 {offsets = [0, 0, 0], sizes = [2, 1, 32], strides = [1, 1, 1]} : vector<2x8x32xf32> to vector<2x1x32xf32>
      %240 = vector.shape_cast %239 : vector<2x1x32xf32> to vector<2x32xf32>
      %c0_112 = arith.constant 0 : index
      %c0_113 = arith.constant 0 : index
      %241 = vector.load %arg21[%c0_112, %c0_113] : memref<32x32xf32, #tpu.memory_space<vmem>>, vector<32x32xf32>
      %cst_114 = arith.constant dense<0.000000e+00> : vector<2x32xf32>
      %242 = tpu.matmul %240, %241, %cst_114 {dimension_numbers = #tpu.dot_dimension_numbers<[1], [0], [0], [1], [0, 0, 1, 1], [], []>} : vector<2x32xf32>, vector<32x32xf32>, vector<2x32xf32> -> vector<2x32xf32>
      %c0_115 = arith.constant 0 : index
      %c0_116 = arith.constant 0 : index
      %243 = vector.load %arg22[%c0_115, %c0_116] : memref<1x32xf32, #tpu.memory_space<vmem>>, vector<1x32xf32>
      %244 = vector.broadcast %243 : vector<1x32xf32> to vector<2x32xf32>
      %245 = arith.addf %242, %244 : vector<2x32xf32>
      %246 = math.tanh %245 : vector<2x32xf32>
      %c0_117 = arith.constant 0 : index
      %c0_118 = arith.constant 0 : index
      %247 = vector.load %arg23[%c0_117, %c0_118] : memref<32x3xf32, #tpu.memory_space<vmem>>, vector<32x3xf32>
      %cst_119 = arith.constant dense<0.000000e+00> : vector<2x3xf32>
      %248 = tpu.matmul %246, %247, %cst_119 {dimension_numbers = #tpu.dot_dimension_numbers<[1], [0], [0], [1], [0, 0, 1, 1], [], []>} : vector<2x32xf32>, vector<32x3xf32>, vector<2x3xf32> -> vector<2x3xf32>
      %c0_120 = arith.constant 0 : index
      %c0_121 = arith.constant 0 : index
      %249 = vector.load %arg24[%c0_120, %c0_121] : memref<1x3xf32, #tpu.memory_space<vmem>>, vector<1x3xf32>
      %250 = vector.broadcast %249 : vector<1x3xf32> to vector<2x3xf32>
      %251 = arith.addf %248, %250 : vector<2x3xf32>
      %c0_122 = arith.constant 0 : index
      %c0_123 = arith.constant 0 : index
      %252 = vector.load %arg28[%c0_122, %c0_123] : memref<2x3xf32, #tpu.memory_space<vmem>>, vector<2x3xf32>
      tpu.vector_store %arg28[%c0_122, %c0_123], %251 {strides = array<i32>} : memref<2x3xf32, #tpu.memory_space<vmem>>, vector<2x3xf32>,
    } else {
    }
    return
  }
  func.func @transform_0(%arg0: i32) -> (i32, i32) {
    %c0_i32 = arith.constant 0 : i32
    %c0_i32_0 = arith.constant 0 : i32
    %c0_i32_1 = arith.constant 0 : i32
    return %c0_i32, %c0_i32_0 : i32, i32
  }
  func.func @transform_1(%arg0: i32) -> (i32, i32, i32) {
    %c0_i32 = arith.constant 0 : i32
    %c0_i32_0 = arith.constant 0 : i32
    %c0_i32_1 = arith.constant 0 : i32
    %c0_i32_2 = arith.constant 0 : i32
    return %c0_i32, %c0_i32_0, %c0_i32_1 : i32, i32, i32
  }
  func.func @transform_2(%arg0: i32) -> (i32, i32) {
    %c0_i32 = arith.constant 0 : i32
    %c0_i32_0 = arith.constant 0 : i32
    %c0_i32_1 = arith.constant 0 : i32
    return %c0_i32, %c0_i32_0 : i32, i32
  }
  func.func @transform_3(%arg0: i32) -> (i32, i32) {
    %c0_i32 = arith.constant 0 : i32
    %c0_i32_0 = arith.constant 0 : i32
    %c0_i32_1 = arith.constant 0 : i32
    return %c0_i32, %c0_i32_0 : i32, i32
  }
  func.func @transform_4(%arg0: i32) -> (i32, i32) {
    %c0_i32 = arith.constant 0 : i32
    %c0_i32_0 = arith.constant 0 : i32
    %c0_i32_1 = arith.constant 0 : i32
    return %c0_i32, %c0_i32_0 : i32, i32
  }
  func.func @transform_5(%arg0: i32) -> (i32, i32) {
    %c0_i32 = arith.constant 0 : i32
    %c0_i32_0 = arith.constant 0 : i32
    %c0_i32_1 = arith.constant 0 : i32
    return %c0_i32, %c0_i32_0 : i32, i32
  }
  func.func @transform_6(%arg0: i32) -> (i32, i32, i32) {
    %c0_i32 = arith.constant 0 : i32
    %c0_i32_0 = arith.constant 0 : i32
    %c0_i32_1 = arith.constant 0 : i32
    return %arg0, %c0_i32, %c0_i32_0 : i32, i32, i32
  }
  func.func @transform_7(%arg0: i32) -> (i32, i32, i32) {
    %c0_i32 = arith.constant 0 : i32
    %c0_i32_0 = arith.constant 0 : i32
    %c0_i32_1 = arith.constant 0 : i32
    return %arg0, %c0_i32, %c0_i32_0 : i32, i32, i32
  }
  func.func @transform_8(%arg0: i32) -> (i32, i32, i32) {
    %c0_i32 = arith.constant 0 : i32
    %c0_i32_0 = arith.constant 0 : i32
    %c0_i32_1 = arith.constant 0 : i32
    return %arg0, %c0_i32, %c0_i32_0 : i32, i32, i32
  }
  func.func @transform_9(%arg0: i32) -> (i32, i32, i32) {
    %c0_i32 = arith.constant 0 : i32
    %c0_i32_0 = arith.constant 0 : i32
    %c0_i32_1 = arith.constant 0 : i32
    return %arg0, %c0_i32, %c0_i32_0 : i32, i32, i32
  }
  func.func @transform_10(%arg0: i32) -> (i32, i32, i32) {
    %c0_i32 = arith.constant 0 : i32
    %c0_i32_0 = arith.constant 0 : i32
    %c0_i32_1 = arith.constant 0 : i32
    return %arg0, %c0_i32, %c0_i32_0 : i32, i32, i32
  }
  func.func @transform_11(%arg0: i32) -> (i32, i32, i32) {
    %c0_i32 = arith.constant 0 : i32
    %c0_i32_0 = arith.constant 0 : i32
    %c0_i32_1 = arith.constant 0 : i32
    return %arg0, %c0_i32, %c0_i32_0 : i32, i32, i32
  }
  func.func @transform_12(%arg0: i32) -> (i32, i32, i32) {
    %c0_i32 = arith.constant 0 : i32
    %c0_i32_0 = arith.constant 0 : i32
    %c0_i32_1 = arith.constant 0 : i32
    return %arg0, %c0_i32, %c0_i32_0 : i32, i32, i32
  }
  func.func @transform_13(%arg0: i32) -> (i32, i32, i32) {
    %c0_i32 = arith.constant 0 : i32
    %c0_i32_0 = arith.constant 0 : i32
    %c0_i32_1 = arith.constant 0 : i32
    return %arg0, %c0_i32, %c0_i32_0 : i32, i32, i32
  }
  func.func @transform_14(%arg0: i32) -> (i32, i32, i32) {
    %c0_i32 = arith.constant 0 : i32
    %c0_i32_0 = arith.constant 0 : i32
    %c0_i32_1 = arith.constant 0 : i32
    return %arg0, %c0_i32, %c0_i32_0 : i32, i32, i32
  }
  func.func @transform_15(%arg0: i32) -> (i32, i32, i32) {
    %c0_i32 = arith.constant 0 : i32
    %c0_i32_0 = arith.constant 0 : i32
    %c0_i32_1 = arith.constant 0 : i32
    return %arg0, %c0_i32, %c0_i32_0 : i32, i32, i32
  }
  func.func @transform_16(%arg0: i32) -> (i32, i32, i32) {
    %c0_i32 = arith.constant 0 : i32
    %c0_i32_0 = arith.constant 0 : i32
    %c0_i32_1 = arith.constant 0 : i32
    return %arg0, %c0_i32, %c0_i32_0 : i32, i32, i32
  }
  func.func @transform_17(%arg0: i32) -> (i32, i32, i32) {
    %c0_i32 = arith.constant 0 : i32
    %c0_i32_0 = arith.constant 0 : i32
    %c0_i32_1 = arith.constant 0 : i32
    return %arg0, %c0_i32, %c0_i32_0 : i32, i32, i32
  }
  func.func @transform_18(%arg0: i32) -> (i32, i32, i32) {
    %c0_i32 = arith.constant 0 : i32
    %c0_i32_0 = arith.constant 0 : i32
    %c0_i32_1 = arith.constant 0 : i32
    return %arg0, %c0_i32, %c0_i32_0 : i32, i32, i32
  }
  func.func @transform_19(%arg0: i32) -> (i32, i32, i32) {
    %c0_i32 = arith.constant 0 : i32
    %c0_i32_0 = arith.constant 0 : i32
    %c0_i32_1 = arith.constant 0 : i32
    return %arg0, %c0_i32, %c0_i32_0 : i32, i32, i32
  }
  func.func @transform_20(%arg0: i32) -> (i32, i32) {
    %c0_i32 = arith.constant 0 : i32
    %c0_i32_0 = arith.constant 0 : i32
    %c0_i32_1 = arith.constant 0 : i32
    return %c0_i32, %c0_i32_0 : i32, i32
  }
  func.func @transform_21(%arg0: i32) -> (i32, i32) {
    %c0_i32 = arith.constant 0 : i32
    %c0_i32_0 = arith.constant 0 : i32
    %c0_i32_1 = arith.constant 0 : i32
    return %c0_i32, %c0_i32_0 : i32, i32
  }
  func.func @transform_22(%arg0: i32) -> (i32, i32) {
    %c0_i32 = arith.constant 0 : i32
    %c0_i32_0 = arith.constant 0 : i32
    %c0_i32_1 = arith.constant 0 : i32
    return %c0_i32, %c0_i32_0 : i32, i32
  }
  func.func @transform_23(%arg0: i32) -> (i32, i32) {
    %c0_i32 = arith.constant 0 : i32
    %c0_i32_0 = arith.constant 0 : i32
    %c0_i32_1 = arith.constant 0 : i32
    return %c0_i32, %c0_i32_0 : i32, i32
  }
  func.func @transform_24(%arg0: i32) -> (i32, i32) {
    %c0_i32 = arith.constant 0 : i32
    %c0_i32_0 = arith.constant 0 : i32
    %c0_i32_1 = arith.constant 0 : i32
    return %c0_i32, %c0_i32_0 : i32, i32
  }
  func.func @transform_25(%arg0: i32) -> (i32, i32, i32) {
    %c0_i32 = arith.constant 0 : i32
    %c0_i32_0 = arith.constant 0 : i32
    %c0_i32_1 = arith.constant 0 : i32
    return %arg0, %c0_i32, %c0_i32_0 : i32, i32, i32
  }
  func.func @transform_26(%arg0: i32) -> (i32, i32, i32) {
    %c0_i32 = arith.constant 0 : i32
    %c0_i32_0 = arith.constant 0 : i32
    %c0_i32_1 = arith.constant 0 : i32
    return %arg0, %c0_i32, %c0_i32_0 : i32, i32, i32
  }
  func.func @transform_27(%arg0: i32) -> (i32, i32) {
    %c0_i32 = arith.constant 0 : i32
    %c0_i32_0 = arith.constant 0 : i32
    %c0_i32_1 = arith.constant 0 : i32
    return %c0_i32, %c0_i32_0 : i32, i32
  }
}

</mosaic_0001>

<llo_original>
// kernel: tiny_bert_forward.1
$region0: #{tiny_bert_forward.1}
  #allocation0 [shape = 'u32[]', space=smem, size = 0x4, offset = 0x4, fixed_abs, tag = 'smem constant byte address 0x4 - core index']
  #allocation1 [shape = 'u32[144,128]{1,0:T(1,128)}', space=vmem, size = 0x12000, scoped, tag = 'internal scratch']
  #allocation2 [shape = 'f32[16,32]{1,0:T(8,128)}', space=vmem, size = 0x2000, scoped, tag = 'scratch operand']
  %s0 = inlined_call_operand.vmem [shape: f32[16,32], index: 0, kind: input, shape index: {}]
  %s1 = inlined_call_operand.vmem [shape: f32[2,1,8], index: 1, kind: input, shape index: {}]
  %s2 = inlined_call_operand.vmem [shape: f32[1,32], index: 2, kind: input, shape index: {}]
  %s3 = inlined_call_operand.vmem [shape: f32[1,32], index: 3, kind: input, shape index: {}]
  %s4 = inlined_call_operand.vmem [shape: f32[32,48], index: 4, kind: input, shape index: {}]
  %s5 = inlined_call_operand.vmem [shape: f32[1,48], index: 5, kind: input, shape index: {}]
  %s6 = inlined_call_operand.vmem [shape: f32[2,32,96], index: 6, kind: input, shape index: {}]
  %s7 = inlined_call_operand.vmem [shape: f32[2,1,96], index: 7, kind: input, shape index: {}]
  %s8 = inlined_call_operand.vmem [shape: f32[2,32,32], index: 8, kind: input, shape index: {}]
  %s9 = inlined_call_operand.vmem [shape: f32[2,1,32], index: 9, kind: input, shape index: {}]
  %s10 = inlined_call_operand.vmem [shape: f32[2,1,32], index: 10, kind: input, shape index: {}]
  %s11 = inlined_call_operand.vmem [shape: f32[2,1,32], index: 11, kind: input, shape index: {}]
  %s12 = inlined_call_operand.vmem [shape: f32[2,32,64], index: 12, kind: input, shape index: {}]
  %s13 = inlined_call_operand.vmem [shape: f32[2,1,64], index: 13, kind: input, shape index: {}]
  %s14 = inlined_call_operand.vmem [shape: f32[2,64,32], index: 14, kind: input, shape index: {}]
  %s15 = inlined_call_operand.vmem [shape: f32[2,1,32], index: 15, kind: input, shape index: {}]
  %s16 = inlined_call_operand.vmem [shape: f32[2,1,32], index: 16, kind: input, shape index: {}]
  %s17 = inlined_call_operand.vmem [shape: f32[2,1,32], index: 17, kind: input, shape index: {}]
  %s18 = inlined_call_operand.vmem [shape: f32[2,32,48], index: 18, kind: input, shape index: {}]
  %s19 = inlined_call_operand.vmem [shape: f32[2,1,48], index: 19, kind: input, shape index: {}]
  %s20 = inlined_call_operand.vmem [shape: f32[32,32], index: 20, kind: input, shape index: {}]
  %s21 = inlined_call_operand.vmem [shape: f32[1,32], index: 21, kind: input, shape index: {}]
  %s22 = inlined_call_operand.vmem [shape: f32[32,3], index: 22, kind: input, shape index: {}]
  %s23 = inlined_call_operand.vmem [shape: f32[1,3], index: 23, kind: input, shape index: {}]
  %s24 = inlined_call_operand.hbm [shape: f32[16,48], index: 24, kind: output, shape index: {0}]
  %s25 = inlined_call_operand.vmem [shape: f32[2,16,32], index: 25, kind: output, shape index: {1}]
  %s26 = inlined_call_operand.vmem [shape: f32[2,16,48], index: 26, kind: output, shape index: {2}]
  %s27 = inlined_call_operand.hbm [shape: f32[2,3], index: 27, kind: output, shape index: {3}]
  %28 = xla_tuple %s24, %s25, %s26, %s27
  %s29 = sld [smem:[#allocation0]]
  $region161: #{tiny_bert_forward.1} parent=0
    _
  %s31 = ssub.s32 1, %s29
  %s32 = scalar_select 0, %s31, %s29
  $region1: #{tiny_bert_forward.1} parent=0
    #allocation3 [shape = 'u8[8192]{0}', space=vmem, size = 0x2000, scoped, tag = 'output window, operand 0, single buffered']
    #allocation4 [shape = 's32[2]{0}', space=sflag, size = 0x8, scoped, tag = 'scoped memory for tiny_bert_forward.1']
    #allocation5 [shape = 'u8[1024]{0}', space=vmem, size = 0x400, scoped, tag = 'output window, operand 3, single buffered']
    #allocation6 [shape = 's32[1]{0}', space=sflag, size = 0x4, scoped, tag = 'scoped memory for tiny_bert_forward.1']
    %33 = vsyncpa [#allocation4], 0
    %34 = vsyncpa [#allocation6], 0
    loop: start=0, step=1, limit=4
    $region2: #{tiny_bert_forward.1} parent=1 // loop_pre_header
      _
    $region3: #{tiny_bert_forward.1} parent=1 // loop_header
      %s36 = sphi 0, %s40
      %p37 = scmp.ge.s32.totalorder %s36, 4
      %s44 = sphi 0, %s44
      %s46 = sphi 0, %s44
      %s47 = sphi 0, %s46
      %s61 = sphi 0, %s47
      %s65 = sphi 0, %s65
      %s67 = sphi 0, %s65
      %s68 = sphi 0, %s67
      %s82 = sphi 0, %s68
      %s86 = sphi 0, %s86
      %s88 = sphi 0, %s86
      %s89 = sphi 0, %s88
      %s103 = sphi 0, %s89
      %s107 = sphi 0, %s107
      %s109 = sphi 0, %s107
      %s110 = sphi 0, %s109
      %s124 = sphi 0, %s110
      %s128 = sphi 0, %s128
      %s130 = sphi 0, %s128
      %s131 = sphi 0, %s130
      %s145 = sphi 0, %s131
      %s149 = sphi 0, %s149
      %s151 = sphi 0, %s149
      %s152 = sphi 0, %s151
      %s166 = sphi 0, %s152
      %s172 = sphi 0, %s174
      %s175 = sphi 0, %s172
      %s176 = sphi 0, %s175
      %s192 = sphi 0, %s176
      %s198 = sphi 0, %s200
      %s201 = sphi 0, %s198
      %s202 = sphi 0, %s201
      %s218 = sphi 0, %s202
      %s224 = sphi 0, %s226
      %s227 = sphi 0, %s224
      %s228 = sphi 0, %s227
      %s244 = sphi 0, %s228
      %s250 = sphi 0, %s252
      %s253 = sphi 0, %s250
      %s254 = sphi 0, %s253
      %s270 = sphi 0, %s254
      %s276 = sphi 0, %s278
      %s279 = sphi 0, %s276
      %s280 = sphi 0, %s279
      %s296 = sphi 0, %s280
      %s302 = sphi 0, %s304
      %s305 = sphi 0, %s302
      %s306 = sphi 0, %s305
      %s322 = sphi 0, %s306
      %s328 = sphi 0, %s330
      %s331 = sphi 0, %s328
      %s332 = sphi 0, %s331
      %s348 = sphi 0, %s332
      %s354 = sphi 0, %s356
      %s357 = sphi 0, %s354
      %s358 = sphi 0, %s357
      %s374 = sphi 0, %s358
      %s380 = sphi 0, %s382
      %s383 = sphi 0, %s380
      %s384 = sphi 0, %s383
      %s400 = sphi 0, %s384
      %s406 = sphi 0, %s408
      %s409 = sphi 0, %s406
      %s410 = sphi 0, %s409
      %s426 = sphi 0, %s410
      %s432 = sphi 0, %s434
      %s435 = sphi 0, %s432
      %s436 = sphi 0, %s435
      %s452 = sphi 0, %s436
      %s458 = sphi 0, %s460
      %s461 = sphi 0, %s458
      %s462 = sphi 0, %s461
      %s478 = sphi 0, %s462
      %s484 = sphi 0, %s486
      %s487 = sphi 0, %s484
      %s488 = sphi 0, %s487
      %s504 = sphi 0, %s488
      %s510 = sphi 0, %s512
      %s513 = sphi 0, %s510
      %s514 = sphi 0, %s513
      %s530 = sphi 0, %s514
      %s534 = sphi 0, %s534
      %s536 = sphi 0, %s534
      %s537 = sphi 0, %s536
      %s551 = sphi 0, %s537
      %s555 = sphi 0, %s555
      %s557 = sphi 0, %s555
      %s558 = sphi 0, %s557
      %s572 = sphi 0, %s558
      %s576 = sphi 0, %s576
      %s578 = sphi 0, %s576
      %s579 = sphi 0, %s578
      %s593 = sphi 0, %s579
      %s597 = sphi 0, %s597
      %s599 = sphi 0, %s597
      %s600 = sphi 0, %s599
      %s614 = sphi 0, %s600
      %s618 = sphi 0, %s618
      %s620 = sphi 0, %s618
      %s621 = sphi 0, %s620
      %s635 = sphi 0, %s621
      %s641 = sphi 0, %s643
      %s644 = sphi 0, %s641
      %s645 = sphi 0, %s644
      %s661 = sphi 0, %s645
      %s667 = sphi 0, %s669
      %s670 = sphi 0, %s667
      %s671 = sphi 0, %s670
      %s687 = sphi 0, %s671
      %s691 = sphi 0, %s691
      %s693 = sphi 0, %s691
      %s694 = sphi 0, %s693
      %s708 = sphi 0, %s694
    $region4: #{tiny_bert_forward.1} parent=1 // loop_header_branch
      %39 = sbr.rel (%p37) target = $region8
    $region5: #{tiny_bert_forward.1} parent=1 // loop_body
      %s41 = ssub.s32 %s36, 1
      %s42 = ssub.s32 %s36, 2
      %s43 = sadd.s32 %s36, 1
      %s45 = sadd.s32 %s44, 1
      %p48 = scmp.eq.s32.totalorder %s36, 1
      %p49 = scmp.ne.s32.totalorder %s44, %s46
      %p50 = scmp.eq.s32.totalorder %s36, 0
      %p51 = por %p49, %p50
      %p52 = scmp.ne.s32.totalorder %s44, %s46
      %p53 = scmp.eq.s32.totalorder %s41, 1
      %p54 = por %p52, %p53
      %p55 = scmp.ne.s32.totalorder %s46, %s47
      %p56 = scmp.eq.s32.totalorder %s41, 0
      %p57 = por %p55, %p56
      %p58 = scmp.ne.s32.totalorder %s46, %s47
      %p59 = scmp.eq.s32.totalorder %s42, 1
      %p60 = por %p58, %p59
      %p62 = scmp.ne.s32.totalorder %s47, %s61
      %p63 = scmp.eq.s32.totalorder %s42, 0
      %p64 = por %p62, %p63
      %s66 = sadd.s32 %s65, 1
      %p69 = scmp.eq.s32.totalorder %s36, 1
      %p70 = scmp.ne.s32.totalorder %s65, %s67
      %p71 = scmp.eq.s32.totalorder %s36, 0
      %p72 = por %p70, %p71
      %p73 = scmp.ne.s32.totalorder %s65, %s67
      %p74 = scmp.eq.s32.totalorder %s41, 1
      %p75 = por %p73, %p74
      %p76 = scmp.ne.s32.totalorder %s67, %s68
      %p77 = scmp.eq.s32.totalorder %s41, 0
      %p78 = por %p76, %p77
      %p79 = scmp.ne.s32.totalorder %s67, %s68
      %p80 = scmp.eq.s32.totalorder %s42, 1
      %p81 = por %p79, %p80
      %p83 = scmp.ne.s32.totalorder %s68, %s82
      %p84 = scmp.eq.s32.totalorder %s42, 0
      %p85 = por %p83, %p84
      %s87 = sadd.s32 %s86, 1
      %p90 = scmp.eq.s32.totalorder %s36, 1
      %p91 = scmp.ne.s32.totalorder %s86, %s88
      %p92 = scmp.eq.s32.totalorder %s36, 0
      %p93 = por %p91, %p92
      %p94 = scmp.ne.s32.totalorder %s86, %s88
      %p95 = scmp.eq.s32.totalorder %s41, 1
      %p96 = por %p94, %p95
      %p97 = scmp.ne.s32.totalorder %s88, %s89
      %p98 = scmp.eq.s32.totalorder %s41, 0
      %p99 = por %p97, %p98
      %p100 = scmp.ne.s32.totalorder %s88, %s89
      %p101 = scmp.eq.s32.totalorder %s42, 1
      %p102 = por %p100, %p101
      %p104 = scmp.ne.s32.totalorder %s89, %s103
      %p105 = scmp.eq.s32.totalorder %s42, 0
      %p106 = por %p104, %p105
      %s108 = sadd.s32 %s107, 1
      %p111 = scmp.eq.s32.totalorder %s36, 1
      %p112 = scmp.ne.s32.totalorder %s107, %s109
      %p113 = scmp.eq.s32.totalorder %s36, 0
      %p114 = por %p112, %p113
      %p115 = scmp.ne.s32.totalorder %s107, %s109
      %p116 = scmp.eq.s32.totalorder %s41, 1
      %p117 = por %p115, %p116
      %p118 = scmp.ne.s32.totalorder %s109, %s110
      %p119 = scmp.eq.s32.totalorder %s41, 0
      %p120 = por %p118, %p119
      %p121 = scmp.ne.s32.totalorder %s109, %s110
      %p122 = scmp.eq.s32.totalorder %s42, 1
      %p123 = por %p121, %p122
      %p125 = scmp.ne.s32.totalorder %s110, %s124
      %p126 = scmp.eq.s32.totalorder %s42, 0
      %p127 = por %p125, %p126
      %s129 = sadd.s32 %s128, 1
      %p132 = scmp.eq.s32.totalorder %s36, 1
      %p133 = scmp.ne.s32.totalorder %s128, %s130
      %p134 = scmp.eq.s32.totalorder %s36, 0
      %p135 = por %p133, %p134
      %p136 = scmp.ne.s32.totalorder %s128, %s130
      %p137 = scmp.eq.s32.totalorder %s41, 1
      %p138 = por %p136, %p137
      %p139 = scmp.ne.s32.totalorder %s130, %s131
      %p140 = scmp.eq.s32.totalorder %s41, 0
      %p141 = por %p139, %p140
      %p142 = scmp.ne.s32.totalorder %s130, %s131
      %p143 = scmp.eq.s32.totalorder %s42, 1
      %p144 = por %p142, %p143
      %p146 = scmp.ne.s32.totalorder %s131, %s145
      %p147 = scmp.eq.s32.totalorder %s42, 0
      %p148 = por %p146, %p147
      %s150 = sadd.s32 %s149, 1
      %p153 = scmp.eq.s32.totalorder %s36, 1
      %p154 = scmp.ne.s32.totalorder %s149, %s151
      %p155 = scmp.eq.s32.totalorder %s36, 0
      %p156 = por %p154, %p155
      %p157 = scmp.ne.s32.totalorder %s149, %s151
      %p158 = scmp.eq.s32.totalorder %s41, 1
      %p159 = por %p157, %p158
      %p160 = scmp.ne.s32.totalorder %s151, %s152
      %p161 = scmp.eq.s32.totalorder %s41, 0
      %p162 = por %p160, %p161
      %p163 = scmp.ne.s32.totalorder %s151, %s152
      %p164 = scmp.eq.s32.totalorder %s42, 1
      %p165 = por %p163, %p164
      %p167 = scmp.ne.s32.totalorder %s152, %s166
      %p168 = scmp.eq.s32.totalorder %s42, 0
      %p169 = por %p167, %p168
      %s170 = ssub.s32 %s36, %s43
      %p171 = scmp.eq.s32.totalorder %s170, 0
      %s173 = sadd.s32 %s172, 1
      %s174 = scalar_select %p171, %s172, %s173
      %p177 = pneg %p171
      %p178 = scmp.eq.s32.totalorder %s36, 1
      %p179 = por %p177, %p178
      %p180 = scmp.ne.s32.totalorder %s172, %s175
      %p181 = scmp.eq.s32.totalorder %s36, 0
      %p182 = por %p180, %p181
      %p183 = scmp.ne.s32.totalorder %s172, %s175
      %p184 = scmp.eq.s32.totalorder %s41, 1
      %p185 = por %p183, %p184
      %p186 = scmp.ne.s32.totalorder %s175, %s176
      %p187 = scmp.eq.s32.totalorder %s41, 0
      %p188 = por %p186, %p187
      %p189 = scmp.ne.s32.totalorder %s175, %s176
      %p190 = scmp.eq.s32.totalorder %s42, 1
      %p191 = por %p189, %p190
      %p193 = scmp.ne.s32.totalorder %s176, %s192
      %p194 = scmp.eq.s32.totalorder %s42, 0
      %p195 = por %p193, %p194
      %s196 = ssub.s32 %s36, %s43
      %p197 = scmp.eq.s32.totalorder %s196, 0
      %s199 = sadd.s32 %s198, 1
      %s200 = scalar_select %p197, %s198, %s199
      %p203 = pneg %p197
      %p204 = scmp.eq.s32.totalorder %s36, 1
      %p205 = por %p203, %p204
      %p206 = scmp.ne.s32.totalorder %s198, %s201
      %p207 = scmp.eq.s32.totalorder %s36, 0
      %p208 = por %p206, %p207
      %p209 = scmp.ne.s32.totalorder %s198, %s201
      %p210 = scmp.eq.s32.totalorder %s41, 1
      %p211 = por %p209, %p210
      %p212 = scmp.ne.s32.totalorder %s201, %s202
      %p213 = scmp.eq.s32.totalorder %s41, 0
      %p214 = por %p212, %p213
      %p215 = scmp.ne.s32.totalorder %s201, %s202
      %p216 = scmp.eq.s32.totalorder %s42, 1
      %p217 = por %p215, %p216
      %p219 = scmp.ne.s32.totalorder %s202, %s218
      %p220 = scmp.eq.s32.totalorder %s42, 0
      %p221 = por %p219, %p220
      %s222 = ssub.s32 %s36, %s43
      %p223 = scmp.eq.s32.totalorder %s222, 0
      %s225 = sadd.s32 %s224, 1
      %s226 = scalar_select %p223, %s224, %s225
      %p229 = pneg %p223
      %p230 = scmp.eq.s32.totalorder %s36, 1
      %p231 = por %p229, %p230
      %p232 = scmp.ne.s32.totalorder %s224, %s227
      %p233 = scmp.eq.s32.totalorder %s36, 0
      %p234 = por %p232, %p233
      %p235 = scmp.ne.s32.totalorder %s224, %s227
      %p236 = scmp.eq.s32.totalorder %s41, 1
      %p237 = por %p235, %p236
      %p238 = scmp.ne.s32.totalorder %s227, %s228
      %p239 = scmp.eq.s32.totalorder %s41, 0
      %p240 = por %p238, %p239
      %p241 = scmp.ne.s32.totalorder %s227, %s228
      %p242 = scmp.eq.s32.totalorder %s42, 1
      %p243 = por %p241, %p242
      %p245 = scmp.ne.s32.totalorder %s228, %s244
      %p246 = scmp.eq.s32.totalorder %s42, 0
      %p247 = por %p245, %p246
      %s248 = ssub.s32 %s36, %s43
      %p249 = scmp.eq.s32.totalorder %s248, 0
      %s251 = sadd.s32 %s250, 1
      %s252 = scalar_select %p249, %s250, %s251
      %p255 = pneg %p249
      %p256 = scmp.eq.s32.totalorder %s36, 1
      %p257 = por %p255, %p256
      %p258 = scmp.ne.s32.totalorder %s250, %s253
      %p259 = scmp.eq.s32.totalorder %s36, 0
      %p260 = por %p258, %p259
      %p261 = scmp.ne.s32.totalorder %s250, %s253
      %p262 = scmp.eq.s32.totalorder %s41, 1
      %p263 = por %p261, %p262
      %p264 = scmp.ne.s32.totalorder %s253, %s254
      %p265 = scmp.eq.s32.totalorder %s41, 0
      %p266 = por %p264, %p265
      %p267 = scmp.ne.s32.totalorder %s253, %s254
      %p268 = scmp.eq.s32.totalorder %s42, 1
      %p269 = por %p267, %p268
      %p271 = scmp.ne.s32.totalorder %s254, %s270
      %p272 = scmp.eq.s32.totalorder %s42, 0
      %p273 = por %p271, %p272
      %s274 = ssub.s32 %s36, %s43
      %p275 = scmp.eq.s32.totalorder %s274, 0
      %s277 = sadd.s32 %s276, 1
      %s278 = scalar_select %p275, %s276, %s277
      %p281 = pneg %p275
      %p282 = scmp.eq.s32.totalorder %s36, 1
      %p283 = por %p281, %p282
      %p284 = scmp.ne.s32.totalorder %s276, %s279
      %p285 = scmp.eq.s32.totalorder %s36, 0
      %p286 = por %p284, %p285
      %p287 = scmp.ne.s32.totalorder %s276, %s279
      %p288 = scmp.eq.s32.totalorder %s41, 1
      %p289 = por %p287, %p288
      %p290 = scmp.ne.s32.totalorder %s279, %s280
      %p291 = scmp.eq.s32.totalorder %s41, 0
      %p292 = por %p290, %p291
      %p293 = scmp.ne.s32.totalorder %s279, %s280
      %p294 = scmp.eq.s32.totalorder %s42, 1
      %p295 = por %p293, %p294
      %p297 = scmp.ne.s32.totalorder %s280, %s296
      %p298 = scmp.eq.s32.totalorder %s42, 0
      %p299 = por %p297, %p298
      %s300 = ssub.s32 %s36, %s43
      %p301 = scmp.eq.s32.totalorder %s300, 0
      %s303 = sadd.s32 %s302, 1
      %s304 = scalar_select %p301, %s302, %s303
      %p307 = pneg %p301
      %p308 = scmp.eq.s32.totalorder %s36, 1
      %p309 = por %p307, %p308
      %p310 = scmp.ne.s32.totalorder %s302, %s305
      %p311 = scmp.eq.s32.totalorder %s36, 0
      %p312 = por %p310, %p311
      %p313 = scmp.ne.s32.totalorder %s302, %s305
      %p314 = scmp.eq.s32.totalorder %s41, 1
      %p315 = por %p313, %p314
      %p316 = scmp.ne.s32.totalorder %s305, %s306
      %p317 = scmp.eq.s32.totalorder %s41, 0
      %p318 = por %p316, %p317
      %p319 = scmp.ne.s32.totalorder %s305, %s306
      %p320 = scmp.eq.s32.totalorder %s42, 1
      %p321 = por %p319, %p320
      %p323 = scmp.ne.s32.totalorder %s306, %s322
      %p324 = scmp.eq.s32.totalorder %s42, 0
      %p325 = por %p323, %p324
      %s326 = ssub.s32 %s36, %s43
      %p327 = scmp.eq.s32.totalorder %s326, 0
      %s329 = sadd.s32 %s328, 1
      %s330 = scalar_select %p327, %s328, %s329
      %p333 = pneg %p327
      %p334 = scmp.eq.s32.totalorder %s36, 1
      %p335 = por %p333, %p334
      %p336 = scmp.ne.s32.totalorder %s328, %s331
      %p337 = scmp.eq.s32.totalorder %s36, 0
      %p338 = por %p336, %p337
      %p339 = scmp.ne.s32.totalorder %s328, %s331
      %p340 = scmp.eq.s32.totalorder %s41, 1
      %p341 = por %p339, %p340
      %p342 = scmp.ne.s32.totalorder %s331, %s332
      %p343 = scmp.eq.s32.totalorder %s41, 0
      %p344 = por %p342, %p343
      %p345 = scmp.ne.s32.totalorder %s331, %s332
      %p346 = scmp.eq.s32.totalorder %s42, 1
      %p347 = por %p345, %p346
      %p349 = scmp.ne.s32.totalorder %s332, %s348
      %p350 = scmp.eq.s32.totalorder %s42, 0
      %p351 = por %p349, %p350
      %s352 = ssub.s32 %s36, %s43
      %p353 = scmp.eq.s32.totalorder %s352, 0
      %s355 = sadd.s32 %s354, 1
      %s356 = scalar_select %p353, %s354, %s355
      %p359 = pneg %p353
      %p360 = scmp.eq.s32.totalorder %s36, 1
      %p361 = por %p359, %p360
      %p362 = scmp.ne.s32.totalorder %s354, %s357
      %p363 = scmp.eq.s32.totalorder %s36, 0
      %p364 = por %p362, %p363
      %p365 = scmp.ne.s32.totalorder %s354, %s357
      %p366 = scmp.eq.s32.totalorder %s41, 1
      %p367 = por %p365, %p366
      %p368 = scmp.ne.s32.totalorder %s357, %s358
      %p369 = scmp.eq.s32.totalorder %s41, 0
      %p370 = por %p368, %p369
      %p371 = scmp.ne.s32.totalorder %s357, %s358
      %p372 = scmp.eq.s32.totalorder %s42, 1
      %p373 = por %p371, %p372
      %p375 = scmp.ne.s32.totalorder %s358, %s374
      %p376 = scmp.eq.s32.totalorder %s42, 0
      %p377 = por %p375, %p376
      %s378 = ssub.s32 %s36, %s43
      %p379 = scmp.eq.s32.totalorder %s378, 0
      %s381 = sadd.s32 %s380, 1
      %s382 = scalar_select %p379, %s380, %s381
      %p385 = pneg %p379
      %p386 = scmp.eq.s32.totalorder %s36, 1
      %p387 = por %p385, %p386
      %p388 = scmp.ne.s32.totalorder %s380, %s383
      %p389 = scmp.eq.s32.totalorder %s36, 0
      %p390 = por %p388, %p389
      %p391 = scmp.ne.s32.totalorder %s380, %s383
      %p392 = scmp.eq.s32.totalorder %s41, 1
      %p393 = por %p391, %p392
      %p394 = scmp.ne.s32.totalorder %s383, %s384
      %p395 = scmp.eq.s32.totalorder %s41, 0
      %p396 = por %p394, %p395
      %p397 = scmp.ne.s32.totalorder %s383, %s384
      %p398 = scmp.eq.s32.totalorder %s42, 1
      %p399 = por %p397, %p398
      %p401 = scmp.ne.s32.totalorder %s384, %s400
      %p402 = scmp.eq.s32.totalorder %s42, 0
      %p403 = por %p401, %p402
      %s404 = ssub.s32 %s36, %s43
      %p405 = scmp.eq.s32.totalorder %s404, 0
      %s407 = sadd.s32 %s406, 1
      %s408 = scalar_select %p405, %s406, %s407
      %p411 = pneg %p405
      %p412 = scmp.eq.s32.totalorder %s36, 1
      %p413 = por %p411, %p412
      %p414 = scmp.ne.s32.totalorder %s406, %s409
      %p415 = scmp.eq.s32.totalorder %s36, 0
      %p416 = por %p414, %p415
      %p417 = scmp.ne.s32.totalorder %s406, %s409
      %p418 = scmp.eq.s32.totalorder %s41, 1
      %p419 = por %p417, %p418
      %p420 = scmp.ne.s32.totalorder %s409, %s410
      %p421 = scmp.eq.s32.totalorder %s41, 0
      %p422 = por %p420, %p421
      %p423 = scmp.ne.s32.totalorder %s409, %s410
      %p424 = scmp.eq.s32.totalorder %s42, 1
      %p425 = por %p423, %p424
      %p427 = scmp.ne.s32.totalorder %s410, %s426
      %p428 = scmp.eq.s32.totalorder %s42, 0
      %p429 = por %p427, %p428
      %s430 = ssub.s32 %s36, %s43
      %p431 = scmp.eq.s32.totalorder %s430, 0
      %s433 = sadd.s32 %s432, 1
      %s434 = scalar_select %p431, %s432, %s433
      %p437 = pneg %p431
      %p438 = scmp.eq.s32.totalorder %s36, 1
      %p439 = por %p437, %p438
      %p440 = scmp.ne.s32.totalorder %s432, %s435
      %p441 = scmp.eq.s32.totalorder %s36, 0
      %p442 = por %p440, %p441
      %p443 = scmp.ne.s32.totalorder %s432, %s435
      %p444 = scmp.eq.s32.totalorder %s41, 1
      %p445 = por %p443, %p444
      %p446 = scmp.ne.s32.totalorder %s435, %s436
      %p447 = scmp.eq.s32.totalorder %s41, 0
      %p448 = por %p446, %p447
      %p449 = scmp.ne.s32.totalorder %s435, %s436
      %p450 = scmp.eq.s32.totalorder %s42, 1
      %p451 = por %p449, %p450
      %p453 = scmp.ne.s32.totalorder %s436, %s452
      %p454 = scmp.eq.s32.totalorder %s42, 0
      %p455 = por %p453, %p454
      %s456 = ssub.s32 %s36, %s43
      %p457 = scmp.eq.s32.totalorder %s456, 0
      %s459 = sadd.s32 %s458, 1
      %s460 = scalar_select %p457, %s458, %s459
      %p463 = pneg %p457
      %p464 = scmp.eq.s32.totalorder %s36, 1
      %p465 = por %p463, %p464
      %p466 = scmp.ne.s32.totalorder %s458, %s461
      %p467 = scmp.eq.s32.totalorder %s36, 0
      %p468 = por %p466, %p467
      %p469 = scmp.ne.s32.totalorder %s458, %s461
      %p470 = scmp.eq.s32.totalorder %s41, 1
      %p471 = por %p469, %p470
      %p472 = scmp.ne.s32.totalorder %s461, %s462
      %p473 = scmp.eq.s32.totalorder %s41, 0
      %p474 = por %p472, %p473
      %p475 = scmp.ne.s32.totalorder %s461, %s462
      %p476 = scmp.eq.s32.totalorder %s42, 1
      %p477 = por %p475, %p476
      %p479 = scmp.ne.s32.totalorder %s462, %s478
      %p480 = scmp.eq.s32.totalorder %s42, 0
      %p481 = por %p479, %p480
      %s482 = ssub.s32 %s36, %s43
      %p483 = scmp.eq.s32.totalorder %s482, 0
      %s485 = sadd.s32 %s484, 1
      %s486 = scalar_select %p483, %s484, %s485
      %p489 = pneg %p483
      %p490 = scmp.eq.s32.totalorder %s36, 1
      %p491 = por %p489, %p490
      %p492 = scmp.ne.s32.totalorder %s484, %s487
      %p493 = scmp.eq.s32.totalorder %s36, 0
      %p494 = por %p492, %p493
      %p495 = scmp.ne.s32.totalorder %s484, %s487
      %p496 = scmp.eq.s32.totalorder %s41, 1
      %p497 = por %p495, %p496
      %p498 = scmp.ne.s32.totalorder %s487, %s488
      %p499 = scmp.eq.s32.totalorder %s41, 0
      %p500 = por %p498, %p499
      %p501 = scmp.ne.s32.totalorder %s487, %s488
      %p502 = scmp.eq.s32.totalorder %s42, 1
      %p503 = por %p501, %p502
      %p505 = scmp.ne.s32.totalorder %s488, %s504
      %p506 = scmp.eq.s32.totalorder %s42, 0
      %p507 = por %p505, %p506
      %s508 = ssub.s32 %s36, %s43
      %p509 = scmp.eq.s32.totalorder %s508, 0
      %s511 = sadd.s32 %s510, 1
      %s512 = scalar_select %p509, %s510, %s511
      %p515 = pneg %p509
      %p516 = scmp.eq.s32.totalorder %s36, 1
      %p517 = por %p515, %p516
      %p518 = scmp.ne.s32.totalorder %s510, %s513
      %p519 = scmp.eq.s32.totalorder %s36, 0
      %p520 = por %p518, %p519
      %p521 = scmp.ne.s32.totalorder %s510, %s513
      %p522 = scmp.eq.s32.totalorder %s41, 1
      %p523 = por %p521, %p522
      %p524 = scmp.ne.s32.totalorder %s513, %s514
      %p525 = scmp.eq.s32.totalorder %s41, 0
      %p526 = por %p524, %p525
      %p527 = scmp.ne.s32.totalorder %s513, %s514
      %p528 = scmp.eq.s32.totalorder %s42, 1
      %p529 = por %p527, %p528
      %p531 = scmp.ne.s32.totalorder %s514, %s530
      %p532 = scmp.eq.s32.totalorder %s42, 0
      %p533 = por %p531, %p532
      %s535 = sadd.s32 %s534, 1
      %p538 = scmp.eq.s32.totalorder %s36, 1
      %p539 = scmp.ne.s32.totalorder %s534, %s536
      %p540 = scmp.eq.s32.totalorder %s36, 0
      %p541 = por %p539, %p540
      %p542 = scmp.ne.s32.totalorder %s534, %s536
      %p543 = scmp.eq.s32.totalorder %s41, 1
      %p544 = por %p542, %p543
      %p545 = scmp.ne.s32.totalorder %s536, %s537
      %p546 = scmp.eq.s32.totalorder %s41, 0
      %p547 = por %p545, %p546
      %p548 = scmp.ne.s32.totalorder %s536, %s537
      %p549 = scmp.eq.s32.totalorder %s42, 1
      %p550 = por %p548, %p549
      %p552 = scmp.ne.s32.totalorder %s537, %s551
      %p553 = scmp.eq.s32.totalorder %s42, 0
      %p554 = por %p552, %p553
      %s556 = sadd.s32 %s555, 1
      %p559 = scmp.eq.s32.totalorder %s36, 1
      %p560 = scmp.ne.s32.totalorder %s555, %s557
      %p561 = scmp.eq.s32.totalorder %s36, 0
      %p562 = por %p560, %p561
      %p563 = scmp.ne.s32.totalorder %s555, %s557
      %p564 = scmp.eq.s32.totalorder %s41, 1
      %p565 = por %p563, %p564
      %p566 = scmp.ne.s32.totalorder %s557, %s558
      %p567 = scmp.eq.s32.totalorder %s41, 0
      %p568 = por %p566, %p567
      %p569 = scmp.ne.s32.totalorder %s557, %s558
      %p570 = scmp.eq.s32.totalorder %s42, 1
      %p571 = por %p569, %p570
      %p573 = scmp.ne.s32.totalorder %s558, %s572
      %p574 = scmp.eq.s32.totalorder %s42, 0
      %p575 = por %p573, %p574
      %s577 = sadd.s32 %s576, 1
      %p580 = scmp.eq.s32.totalorder %s36, 1
      %p581 = scmp.ne.s32.totalorder %s576, %s578
      %p582 = scmp.eq.s32.totalorder %s36, 0
      %p583 = por %p581, %p582
      %p584 = scmp.ne.s32.totalorder %s576, %s578
      %p585 = scmp.eq.s32.totalorder %s41, 1
      %p586 = por %p584, %p585
      %p587 = scmp.ne.s32.totalorder %s578, %s579
      %p588 = scmp.eq.s32.totalorder %s41, 0
      %p589 = por %p587, %p588
      %p590 = scmp.ne.s32.totalorder %s578, %s579
      %p591 = scmp.eq.s32.totalorder %s42, 1
      %p592 = por %p590, %p591
      %p594 = scmp.ne.s32.totalorder %s579, %s593
      %p595 = scmp.eq.s32.totalorder %s42, 0
      %p596 = por %p594, %p595
      %s598 = sadd.s32 %s597, 1
      %p601 = scmp.eq.s32.totalorder %s36, 1
      %p602 = scmp.ne.s32.totalorder %s597, %s599
      %p603 = scmp.eq.s32.totalorder %s36, 0
      %p604 = por %p602, %p603
      %p605 = scmp.ne.s32.totalorder %s597, %s599
      %p606 = scmp.eq.s32.totalorder %s41, 1
      %p607 = por %p605, %p606
      %p608 = scmp.ne.s32.totalorder %s599, %s600
      %p609 = scmp.eq.s32.totalorder %s41, 0
      %p610 = por %p608, %p609
      %p611 = scmp.ne.s32.totalorder %s599, %s600
      %p612 = scmp.eq.s32.totalorder %s42, 1
      %p613 = por %p611, %p612
      %p615 = scmp.ne.s32.totalorder %s600, %s614
      %p616 = scmp.eq.s32.totalorder %s42, 0
      %p617 = por %p615, %p616
      %s619 = sadd.s32 %s618, 1
      %p622 = scmp.eq.s32.totalorder %s36, 1
      %p623 = scmp.ne.s32.totalorder %s618, %s620
      %p624 = scmp.eq.s32.totalorder %s36, 0
      %p625 = por %p623, %p624
      %p626 = scmp.ne.s32.totalorder %s618, %s620
      %p627 = scmp.eq.s32.totalorder %s41, 1
      %p628 = por %p626, %p627
      %p629 = scmp.ne.s32.totalorder %s620, %s621
      %p630 = scmp.eq.s32.totalorder %s41, 0
      %p631 = por %p629, %p630
      %p632 = scmp.ne.s32.totalorder %s620, %s621
      %p633 = scmp.eq.s32.totalorder %s42, 1
      %p634 = por %p632, %p633
      %p636 = scmp.ne.s32.totalorder %s621, %s635
      %p637 = scmp.eq.s32.totalorder %s42, 0
      %p638 = por %p636, %p637
      %s639 = ssub.s32 %s36, %s43
      %p640 = scmp.eq.s32.totalorder %s639, 0
      %s642 = sadd.s32 %s641, 1
      %s643 = scalar_select %p640, %s641, %s642
      %p646 = pneg %p640
      %p647 = scmp.eq.s32.totalorder %s36, 1
      %p648 = por %p646, %p647
      %p649 = scmp.ne.s32.totalorder %s641, %s644
      %p650 = scmp.eq.s32.totalorder %s36, 0
      %p651 = por %p649, %p650
      %p652 = scmp.ne.s32.totalorder %s641, %s644
      %p653 = scmp.eq.s32.totalorder %s41, 1
      %p654 = por %p652, %p653
      %p655 = scmp.ne.s32.totalorder %s644, %s645
      %p656 = scmp.eq.s32.totalorder %s41, 0
      %p657 = por %p655, %p656
      %p658 = scmp.ne.s32.totalorder %s644, %s645
      %p659 = scmp.eq.s32.totalorder %s42, 1
      %p660 = por %p658, %p659
      %p662 = scmp.ne.s32.totalorder %s645, %s661
      %p663 = scmp.eq.s32.totalorder %s42, 0
      %p664 = por %p662, %p663
      %s665 = ssub.s32 %s36, %s43
      %p666 = scmp.eq.s32.totalorder %s665, 0
      %s668 = sadd.s32 %s667, 1
      %s669 = scalar_select %p666, %s667, %s668
      %p672 = pneg %p666
      %p673 = scmp.eq.s32.totalorder %s36, 1
      %p674 = por %p672, %p673
      %p675 = scmp.ne.s32.totalorder %s667, %s670
      %p676 = scmp.eq.s32.totalorder %s36, 0
      %p677 = por %p675, %p676
      %p678 = scmp.ne.s32.totalorder %s667, %s670
      %p679 = scmp.eq.s32.totalorder %s41, 1
      %p680 = por %p678, %p679
      %p681 = scmp.ne.s32.totalorder %s670, %s671
      %p682 = scmp.eq.s32.totalorder %s41, 0
      %p683 = por %p681, %p682
      %p684 = scmp.ne.s32.totalorder %s670, %s671
      %p685 = scmp.eq.s32.totalorder %s42, 1
      %p686 = por %p684, %p685
      %p688 = scmp.ne.s32.totalorder %s671, %s687
      %p689 = scmp.eq.s32.totalorder %s42, 0
      %p690 = por %p688, %p689
      %s692 = sadd.s32 %s691, 1
      %p695 = scmp.eq.s32.totalorder %s36, 1
      %p696 = scmp.ne.s32.totalorder %s691, %s693
      %p697 = scmp.eq.s32.totalorder %s36, 0
      %p698 = por %p696, %p697
      %p699 = scmp.ne.s32.totalorder %s691, %s693
      %p700 = scmp.eq.s32.totalorder %s41, 1
      %p701 = por %p699, %p700
      %p702 = scmp.ne.s32.totalorder %s693, %s694
      %p703 = scmp.eq.s32.totalorder %s41, 0
      %p704 = por %p702, %p703
      %p705 = scmp.ne.s32.totalorder %s693, %s694
      %p706 = scmp.eq.s32.totalorder %s42, 1
      %p707 = por %p705, %p706
      %p709 = scmp.ne.s32.totalorder %s694, %s708
      %p710 = scmp.eq.s32.totalorder %s42, 0
      %p711 = por %p709, %p710
      %p712 = scmp.le.s32.totalorder 1, %s36
      %p713 = scmp.lt.s32.totalorder %s36, 3
      %p714 = pnand %p712, %p713
      %p715 = pneg %p714
      // Predicated region
      $region9: #{tiny_bert_forward.1} parent=5 // pred_check
        _
      $region10: #{tiny_bert_forward.1} parent=5 // pred_check_branch
        %717 = sbr.rel (%p714) target = $region12
      $region11: #{tiny_bert_forward.1} parent=5 // pred_region
        %s718 = ssub.s32 %s36, 1
        // Predicated region
        $region13: #{tiny_bert_forward.1} parent=11 // pred_check
          %p719 = pneg %p57
        $region14: #{tiny_bert_forward.1} parent=11 // pred_check_branch
          %721 = sbr.rel (%p719) target = $region16
        $region15: #{tiny_bert_forward.1} parent=11 // pred_region
          _
        $region16: #{tiny_bert_forward.1} parent=11 // pred_fallthru
          _
        // Predicated region
        $region17: #{tiny_bert_forward.1} parent=11 // pred_check
          %p722 = pneg %p78
        $region18: #{tiny_bert_forward.1} parent=11 // pred_check_branch
          %724 = sbr.rel (%p722) target = $region20
        $region19: #{tiny_bert_forward.1} parent=11 // pred_region
          _
        $region20: #{tiny_bert_forward.1} parent=11 // pred_fallthru
          _
        // Predicated region
        $region21: #{tiny_bert_forward.1} parent=11 // pred_check
          %p725 = pneg %p99
        $region22: #{tiny_bert_forward.1} parent=11 // pred_check_branch
          %727 = sbr.rel (%p725) target = $region24
        $region23: #{tiny_bert_forward.1} parent=11 // pred_region
          _
        $region24: #{tiny_bert_forward.1} parent=11 // pred_fallthru
          _
        // Predicated region
        $region25: #{tiny_bert_forward.1} parent=11 // pred_check
          %p728 = pneg %p120
        $region26: #{tiny_bert_forward.1} parent=11 // pred_check_branch
          %730 = sbr.rel (%p728) target = $region28
        $region27: #{tiny_bert_forward.1} parent=11 // pred_region
          _
        $region28: #{tiny_bert_forward.1} parent=11 // pred_fallthru
          _
        // Predicated region
        $region29: #{tiny_bert_forward.1} parent=11 // pred_check
          %p731 = pneg %p141
        $region30: #{tiny_bert_forward.1} parent=11 // pred_check_branch
          %733 = sbr.rel (%p731) target = $region32
        $region31: #{tiny_bert_forward.1} parent=11 // pred_region
          _
        $region32: #{tiny_bert_forward.1} parent=11 // pred_fallthru
          _
        // Predicated region
        $region33: #{tiny_bert_forward.1} parent=11 // pred_check
          %p734 = pneg %p162
        $region34: #{tiny_bert_forward.1} parent=11 // pred_check_branch
          %736 = sbr.rel (%p734) target = $region36
        $region35: #{tiny_bert_forward.1} parent=11 // pred_region
          _
        $region36: #{tiny_bert_forward.1} parent=11 // pred_fallthru
          _
        // Predicated region
        $region37: #{tiny_bert_forward.1} parent=11 // pred_check
          %p737 = pneg %p547
        $region38: #{tiny_bert_forward.1} parent=11 // pred_check_branch
          %739 = sbr.rel (%p737) target = $region40
        $region39: #{tiny_bert_forward.1} parent=11 // pred_region
          _
        $region40: #{tiny_bert_forward.1} parent=11 // pred_fallthru
          _
        // Predicated region
        $region41: #{tiny_bert_forward.1} parent=11 // pred_check
          %p740 = pneg %p568
        $region42: #{tiny_bert_forward.1} parent=11 // pred_check_branch
          %742 = sbr.rel (%p740) target = $region44
        $region43: #{tiny_bert_forward.1} parent=11 // pred_region
          _
        $region44: #{tiny_bert_forward.1} parent=11 // pred_fallthru
          _
        // Predicated region
        $region45: #{tiny_bert_forward.1} parent=11 // pred_check
          %p743 = pneg %p589
        $region46: #{tiny_bert_forward.1} parent=11 // pred_check_branch
          %745 = sbr.rel (%p743) target = $region48
        $region47: #{tiny_bert_forward.1} parent=11 // pred_region
          _
        $region48: #{tiny_bert_forward.1} parent=11 // pred_fallthru
          _
        // Predicated region
        $region49: #{tiny_bert_forward.1} parent=11 // pred_check
          %p746 = pneg %p610
        $region50: #{tiny_bert_forward.1} parent=11 // pred_check_branch
          %748 = sbr.rel (%p746) target = $region52
        $region51: #{tiny_bert_forward.1} parent=11 // pred_region
          _
        $region52: #{tiny_bert_forward.1} parent=11 // pred_fallthru
          _
      $region12: #{tiny_bert_forward.1} parent=5 // pred_fallthru
        _
      %p749 = scmp.lt.s32.totalorder %s36, 2
      // Predicated region
      $region53: #{tiny_bert_forward.1} parent=5 // pred_check
        %p750 = pneg %p749
      $region54: #{tiny_bert_forward.1} parent=5 // pred_check_branch
        %752 = sbr.rel (%p750) target = $region56
      $region55: #{tiny_bert_forward.1} parent=5 // pred_region
        // Predicated region
        $region57: #{tiny_bert_forward.1} parent=55 // pred_check
          %p753 = pneg %p182
        $region58: #{tiny_bert_forward.1} parent=55 // pred_check_branch
          %755 = sbr.rel (%p753) target = $region60
        $region59: #{tiny_bert_forward.1} parent=55 // pred_region
          %p756 = scmp.lt.s32.totalorder %s36, 1
          %s757 = scalar_select %p756, %s36, 1
          %s758 = smul.addr %s757, 4
          %s759 = smul.addr %s758, 8
          %s760 = scalar_lea.vmem %s6, %s759
        $region60: #{tiny_bert_forward.1} parent=55 // pred_fallthru
          _
        // Predicated region
        $region61: #{tiny_bert_forward.1} parent=55 // pred_check
          %p761 = pneg %p208
        $region62: #{tiny_bert_forward.1} parent=55 // pred_check_branch
          %763 = sbr.rel (%p761) target = $region64
        $region63: #{tiny_bert_forward.1} parent=55 // pred_region
          %p764 = scmp.lt.s32.totalorder %s36, 1
          %s765 = scalar_select %p764, %s36, 1
          %s766 = scalar_lea.vmem %s7, %s765
        $region64: #{tiny_bert_forward.1} parent=55 // pred_fallthru
          _
        // Predicated region
        $region65: #{tiny_bert_forward.1} parent=55 // pred_check
          %p767 = pneg %p234
        $region66: #{tiny_bert_forward.1} parent=55 // pred_check_branch
          %769 = sbr.rel (%p767) target = $region68
        $region67: #{tiny_bert_forward.1} parent=55 // pred_region
          %p770 = scmp.lt.s32.totalorder %s36, 1
          %s771 = scalar_select %p770, %s36, 1
          %s772 = smul.addr %s771, 4
          %s773 = smul.addr %s772, 8
          %s774 = scalar_lea.vmem %s8, %s773
        $region68: #{tiny_bert_forward.1} parent=55 // pred_fallthru
          _
        // Predicated region
        $region69: #{tiny_bert_forward.1} parent=55 // pred_check
          %p775 = pneg %p260
        $region70: #{tiny_bert_forward.1} parent=55 // pred_check_branch
          %777 = sbr.rel (%p775) target = $region72
        $region71: #{tiny_bert_forward.1} parent=55 // pred_region
          %p778 = scmp.lt.s32.totalorder %s36, 1
          %s779 = scalar_select %p778, %s36, 1
          %s780 = scalar_lea.vmem %s9, %s779
        $region72: #{tiny_bert_forward.1} parent=55 // pred_fallthru
          _
        // Predicated region
        $region73: #{tiny_bert_forward.1} parent=55 // pred_check
          %p781 = pneg %p286
        $region74: #{tiny_bert_forward.1} parent=55 // pred_check_branch
          %783 = sbr.rel (%p781) target = $region76
        $region75: #{tiny_bert_forward.1} parent=55 // pred_region
          %p784 = scmp.lt.s32.totalorder %s36, 1
          %s785 = scalar_select %p784, %s36, 1
          %s786 = scalar_lea.vmem %s10, %s785
        $region76: #{tiny_bert_forward.1} parent=55 // pred_fallthru
          _
        // Predicated region
        $region77: #{tiny_bert_forward.1} parent=55 // pred_check
          %p787 = pneg %p312
        $region78: #{tiny_bert_forward.1} parent=55 // pred_check_branch
          %789 = sbr.rel (%p787) target = $region80
        $region79: #{tiny_bert_forward.1} parent=55 // pred_region
          %p790 = scmp.lt.s32.totalorder %s36, 1
          %s791 = scalar_select %p790, %s36, 1
          %s792 = scalar_lea.vmem %s11, %s791
        $region80: #{tiny_bert_forward.1} parent=55 // pred_fallthru
          _
        // Predicated region
        $region81: #{tiny_bert_forward.1} parent=55 // pred_check
          %p793 = pneg %p338
        $region82: #{tiny_bert_forward.1} parent=55 // pred_check_branch
          %795 = sbr.rel (%p793) target = $region84
        $region83: #{tiny_bert_forward.1} parent=55 // pred_region
          %p796 = scmp.lt.s32.totalorder %s36, 1
          %s797 = scalar_select %p796, %s36, 1
          %s798 = smul.addr %s797, 4
          %s799 = smul.addr %s798, 8
          %s800 = scalar_lea.vmem %s12, %s799
        $region84: #{tiny_bert_forward.1} parent=55 // pred_fallthru
          _
        // Predicated region
        $region85: #{tiny_bert_forward.1} parent=55 // pred_check
          %p801 = pneg %p364
        $region86: #{tiny_bert_forward.1} parent=55 // pred_check_branch
          %803 = sbr.rel (%p801) target = $region88
        $region87: #{tiny_bert_forward.1} parent=55 // pred_region
          %p804 = scmp.lt.s32.totalorder %s36, 1
          %s805 = scalar_select %p804, %s36, 1
          %s806 = scalar_lea.vmem %s13, %s805
        $region88: #{tiny_bert_forward.1} parent=55 // pred_fallthru
          _
        // Predicated region
        $region89: #{tiny_bert_forward.1} parent=55 // pred_check
          %p807 = pneg %p390
        $region90: #{tiny_bert_forward.1} parent=55 // pred_check_branch
          %809 = sbr.rel (%p807) target = $region92
        $region91: #{tiny_bert_forward.1} parent=55 // pred_region
          %p810 = scmp.lt.s32.totalorder %s36, 1
          %s811 = scalar_select %p810, %s36, 1
          %s812 = smul.addr %s811, 8
          %s813 = smul.addr %s812, 8
          %s814 = scalar_lea.vmem %s14, %s813
        $region92: #{tiny_bert_forward.1} parent=55 // pred_fallthru
          _
        // Predicated region
        $region93: #{tiny_bert_forward.1} parent=55 // pred_check
          %p815 = pneg %p416
        $region94: #{tiny_bert_forward.1} parent=55 // pred_check_branch
          %817 = sbr.rel (%p815) target = $region96
        $region95: #{tiny_bert_forward.1} parent=55 // pred_region
          %p818 = scmp.lt.s32.totalorder %s36, 1
          %s819 = scalar_select %p818, %s36, 1
          %s820 = scalar_lea.vmem %s15, %s819
        $region96: #{tiny_bert_forward.1} parent=55 // pred_fallthru
          _
        // Predicated region
        $region97: #{tiny_bert_forward.1} parent=55 // pred_check
          %p821 = pneg %p442
        $region98: #{tiny_bert_forward.1} parent=55 // pred_check_branch
          %823 = sbr.rel (%p821) target = $region100
        $region99: #{tiny_bert_forward.1} parent=55 // pred_region
          %p824 = scmp.lt.s32.totalorder %s36, 1
          %s825 = scalar_select %p824, %s36, 1
          %s826 = scalar_lea.vmem %s16, %s825
        $region100: #{tiny_bert_forward.1} parent=55 // pred_fallthru
          _
        // Predicated region
        $region101: #{tiny_bert_forward.1} parent=55 // pred_check
          %p827 = pneg %p468
        $region102: #{tiny_bert_forward.1} parent=55 // pred_check_branch
          %829 = sbr.rel (%p827) target = $region104
        $region103: #{tiny_bert_forward.1} parent=55 // pred_region
          %p830 = scmp.lt.s32.totalorder %s36, 1
          %s831 = scalar_select %p830, %s36, 1
          %s832 = scalar_lea.vmem %s17, %s831
        $region104: #{tiny_bert_forward.1} parent=55 // pred_fallthru
          _
        // Predicated region
        $region105: #{tiny_bert_forward.1} parent=55 // pred_check
          %p833 = pneg %p494
        $region106: #{tiny_bert_forward.1} parent=55 // pred_check_branch
          %835 = sbr.rel (%p833) target = $region108
        $region107: #{tiny_bert_forward.1} parent=55 // pred_region
          %p836 = scmp.lt.s32.totalorder %s36, 1
          %s837 = scalar_select %p836, %s36, 1
          %s838 = smul.addr %s837, 4
          %s839 = smul.addr %s838, 8
          %s840 = scalar_lea.vmem %s18, %s839
        $region108: #{tiny_bert_forward.1} parent=55 // pred_fallthru
          _
        // Predicated region
        $region109: #{tiny_bert_forward.1} parent=55 // pred_check
          %p841 = pneg %p520
        $region110: #{tiny_bert_forward.1} parent=55 // pred_check_branch
          %843 = sbr.rel (%p841) target = $region112
        $region111: #{tiny_bert_forward.1} parent=55 // pred_region
          %p844 = scmp.lt.s32.totalorder %s36, 1
          %s845 = scalar_select %p844, %s36, 1
          %s846 = scalar_lea.vmem %s19, %s845
        $region112: #{tiny_bert_forward.1} parent=55 // pred_fallthru
          _
      $region56: #{tiny_bert_forward.1} parent=5 // pred_fallthru
        _
      %p847 = scmp.le.s32.totalorder 1, %s36
      %p848 = scmp.lt.s32.totalorder %s36, 3
      %p849 = pnand %p847, %p848
      %p850 = pneg %p849
      // Predicated region
      $region113: #{tiny_bert_forward.1} parent=5 // pred_check
        _
      $region114: #{tiny_bert_forward.1} parent=5 // pred_check_branch
        %852 = sbr.rel (%p849) target = $region116
      $region115: #{tiny_bert_forward.1} parent=5 // pred_region
        %s853 = ssub.s32 %s36, 1
        %p854 = pneg %p57
        %p855 = pneg %p54
        %p856 = pneg %p78
        %p857 = pneg %p75
        %p858 = pneg %p99
        %p859 = pneg %p96
        %p860 = pneg %p120
        %p861 = pneg %p117
        %p862 = pneg %p141
        %p863 = pneg %p138
        %p864 = pneg %p162
        %p865 = pneg %p159
        %p866 = scmp.lt.s32.totalorder %s41, 1
        %s867 = scalar_select %p866, %s41, 1
        %s868 = smul.addr %s867, 4
        %s869 = smul.addr %s868, 8
        %s870 = scalar_lea.vmem %s6, %s869
        %p871 = pneg %p188
        %p872 = pneg %p185
        %p873 = scmp.lt.s32.totalorder %s41, 1
        %s874 = scalar_select %p873, %s41, 1
        %s875 = scalar_lea.vmem %s7, %s874
        %p876 = pneg %p214
        %p877 = pneg %p211
        %p878 = scmp.lt.s32.totalorder %s41, 1
        %s879 = scalar_select %p878, %s41, 1
        %s880 = smul.addr %s879, 4
        %s881 = smul.addr %s880, 8
        %s882 = scalar_lea.vmem %s8, %s881
        %p883 = pneg %p240
        %p884 = pneg %p237
        %p885 = scmp.lt.s32.totalorder %s41, 1
        %s886 = scalar_select %p885, %s41, 1
        %s887 = scalar_lea.vmem %s9, %s886
        %p888 = pneg %p266
        %p889 = pneg %p263
        %p890 = scmp.lt.s32.totalorder %s41, 1
        %s891 = scalar_select %p890, %s41, 1
        %s892 = scalar_lea.vmem %s10, %s891
        %p893 = pneg %p292
        %p894 = pneg %p289
        %p895 = scmp.lt.s32.totalorder %s41, 1
        %s896 = scalar_select %p895, %s41, 1
        %s897 = scalar_lea.vmem %s11, %s896
        %p898 = pneg %p318
        %p899 = pneg %p315
        %p900 = scmp.lt.s32.totalorder %s41, 1
        %s901 = scalar_select %p900, %s41, 1
        %s902 = smul.addr %s901, 4
        %s903 = smul.addr %s902, 8
        %s904 = scalar_lea.vmem %s12, %s903
        %p905 = pneg %p344
        %p906 = pneg %p341
        %p907 = scmp.lt.s32.totalorder %s41, 1
        %s908 = scalar_select %p907, %s41, 1
        %s909 = scalar_lea.vmem %s13, %s908
        %p910 = pneg %p370
        %p911 = pneg %p367
        %p912 = scmp.lt.s32.totalorder %s41, 1
        %s913 = scalar_select %p912, %s41, 1
        %s914 = smul.addr %s913, 8
        %s915 = smul.addr %s914, 8
        %s916 = scalar_lea.vmem %s14, %s915
        %p917 = pneg %p396
        %p918 = pneg %p393
        %p919 = scmp.lt.s32.totalorder %s41, 1
        %s920 = scalar_select %p919, %s41, 1
        %s921 = scalar_lea.vmem %s15, %s920
        %p922 = pneg %p422
        %p923 = pneg %p419
        %p924 = scmp.lt.s32.totalorder %s41, 1
        %s925 = scalar_select %p924, %s41, 1
        %s926 = scalar_lea.vmem %s16, %s925
        %p927 = pneg %p448
        %p928 = pneg %p445
        %p929 = scmp.lt.s32.totalorder %s41, 1
        %s930 = scalar_select %p929, %s41, 1
        %s931 = scalar_lea.vmem %s17, %s930
        %p932 = pneg %p474
        %p933 = pneg %p471
        %p934 = scmp.lt.s32.totalorder %s41, 1
        %s935 = scalar_select %p934, %s41, 1
        %s936 = smul.addr %s935, 4
        %s937 = smul.addr %s936, 8
        %s938 = scalar_lea.vmem %s18, %s937
        %p939 = pneg %p500
        %p940 = pneg %p497
        %p941 = scmp.lt.s32.totalorder %s41, 1
        %s942 = scalar_select %p941, %s41, 1
        %s943 = scalar_lea.vmem %s19, %s942
        %p944 = pneg %p526
        %p945 = pneg %p523
        %p946 = pneg %p547
        %p947 = pneg %p544
        %p948 = pneg %p568
        %p949 = pneg %p565
        %p950 = pneg %p589
        %p951 = pneg %p586
        %p952 = pneg %p610
        %p953 = pneg %p607
        %p954 = pneg %p631
        %p955 = pneg %p628
        %p956 = pneg %p657
        %p957 = pneg %p654
        %p958 = scmp.lt.s32.totalorder %s41, 1
        %s959 = scalar_select %p958, %s41, 1
        %s960 = smul.addr %s959, 2
        %s961 = smul.addr %s960, 8
        %s962 = scalar_lea.vmem %s25, %s961
        %p963 = pneg %p683
        %p964 = pneg %p680
        %p965 = scmp.lt.s32.totalorder %s41, 1
        %s966 = scalar_select %p965, %s41, 1
        %s967 = smul.addr %s966, 2
        %s968 = smul.addr %s967, 8
        %s969 = scalar_lea.vmem %s26, %s968
        %p970 = pneg %p704
        %p971 = pneg %p701
        %p972 = scmp.lt.s32.totalorder %s41, 1
        %s973 = scalar_select %p972, %s41, 1
        %s974 = smul.addr %s973, 4
        %s975 = smul.addr %s974, 8
        %s976 = scalar_lea.vmem %s6, %s975
        %p977 = scmp.lt.s32.totalorder %s41, 1
        %s978 = scalar_select %p977, %s41, 1
        %s979 = scalar_lea.vmem %s7, %s978
        %p980 = scmp.lt.s32.totalorder %s41, 1
        %s981 = scalar_select %p980, %s41, 1
        %s982 = smul.addr %s981, 4
        %s983 = smul.addr %s982, 8
        %s984 = scalar_lea.vmem %s8, %s983
        %p985 = scmp.lt.s32.totalorder %s41, 1
        %s986 = scalar_select %p985, %s41, 1
        %s987 = scalar_lea.vmem %s9, %s986
        %p988 = scmp.lt.s32.totalorder %s41, 1
        %s989 = scalar_select %p988, %s41, 1
        %s990 = scalar_lea.vmem %s10, %s989
        %p991 = scmp.lt.s32.totalorder %s41, 1
        %s992 = scalar_select %p991, %s41, 1
        %s993 = scalar_lea.vmem %s11, %s992
        %p994 = scmp.lt.s32.totalorder %s41, 1
        %s995 = scalar_select %p994, %s41, 1
        %s996 = smul.addr %s995, 4
        %s997 = smul.addr %s996, 8
        %s998 = scalar_lea.vmem %s12, %s997
        %p999 = scmp.lt.s32.totalorder %s41, 1
        %s1000 = scalar_select %p999, %s41, 1
        %s1001 = scalar_lea.vmem %s13, %s1000
        %p1002 = scmp.lt.s32.totalorder %s41, 1
        %s1003 = scalar_select %p1002, %s41, 1
        %s1004 = smul.addr %s1003, 8
        %s1005 = smul.addr %s1004, 8
        %s1006 = scalar_lea.vmem %s14, %s1005
        %p1007 = scmp.lt.s32.totalorder %s41, 1
        %s1008 = scalar_select %p1007, %s41, 1
        %s1009 = scalar_lea.vmem %s15, %s1008
        %p1010 = scmp.lt.s32.totalorder %s41, 1
        %s1011 = scalar_select %p1010, %s41, 1
        %s1012 = scalar_lea.vmem %s16, %s1011
        %p1013 = scmp.lt.s32.totalorder %s41, 1
        %s1014 = scalar_select %p1013, %s41, 1
        %s1015 = scalar_lea.vmem %s17, %s1014
        %p1016 = scmp.lt.s32.totalorder %s41, 1
        %s1017 = scalar_select %p1016, %s41, 1
        %s1018 = smul.addr %s1017, 4
        %s1019 = smul.addr %s1018, 8
        %s1020 = scalar_lea.vmem %s18, %s1019
        %p1021 = scmp.lt.s32.totalorder %s41, 1
        %s1022 = scalar_select %p1021, %s41, 1
        %s1023 = scalar_lea.vmem %s19, %s1022
        %p1024 = scmp.lt.s32.totalorder %s41, 1
        %s1025 = scalar_select %p1024, %s41, 1
        %s1026 = smul.addr %s1025, 2
        %s1027 = smul.addr %s1026, 8
        %s1028 = scalar_lea.vmem %s25, %s1027
        %p1029 = scmp.lt.s32.totalorder %s41, 1
        %s1030 = scalar_select %p1029, %s41, 1
        %s1031 = smul.addr %s1030, 2
        %s1032 = smul.addr %s1031, 8
        %s1033 = scalar_lea.vmem %s26, %s1032
        %p1034 = scmp.eq.s32.totalorder %s41, 0
        // Predicated region
        $region117: #{tiny_bert_forward.1} parent=115 // pred_check
          %p1035 = pneg %p1034
        $region118: #{tiny_bert_forward.1} parent=115 // pred_check_branch
          %1037 = sbr.rel (%p1035) target = $region120
        $region119: #{tiny_bert_forward.1} parent=115 // pred_region
          %v1038 = vld [vmem:[%s0] sm:$0xff]
          %v1039 = vld [vmem:[%s0 + $0x8] sm:$0xff]
          %v1040 = vld [vmem:[%s2] sm:$0x1]
          %v1041 = vld [vmem:[%s3] sm:$0x1]
          %vm1042 = vcmask 261120
          %v1043 = vsel %vm1042, %v1038, 0.0
          %1044 = vadd.xlane.f32.xlu0 %v1043
          %v1045 = vpop.xlane.xlu0 %1044
          %v1046 = vsel %vm1042, %v1039, 0.0
          %1047 = vadd.xlane.f32.xlu0 %v1046
          %v1048 = vpop.xlane.xlu0 %1047
          %v1049 = vrcp.pop 32.0
          %v1050 = vmul.f32 %v1045, %v1049
          %v1051 = vmul.f32 %v1048, %v1049
          %v1052 = vsub.f32 %v1038, %v1050
          %v1053 = vsub.f32 %v1039, %v1051
          %v1054 = vmul.f32 %v1052, %v1052
          %v1055 = vmul.f32 %v1053, %v1053
          %v1056 = vsel %vm1042, %v1054, 0.0
          %1057 = vadd.xlane.f32.xlu0 %v1056
          %v1058 = vpop.xlane.xlu0 %1057
          %v1059 = vsel %vm1042, %v1055, 0.0
          %1060 = vadd.xlane.f32.xlu0 %v1059
          %v1061 = vpop.xlane.xlu0 %1060
          %v1062 = vmul.f32 %v1058, %v1049
          %v1063 = vmul.f32 %v1061, %v1049
          %v1064 = vadd.f32 %v1062, 1e-12
          %v1065 = vadd.f32 %v1063, 1e-12
          %v1066 = vrsqrt.pop %v1064
          %v1067 = vrsqrt.pop %v1065
          %v1068 = vmul.f32 %v1052, %v1066
          %v1069 = vmul.f32 %v1053, %v1067
          %v1071 = vlaneseq
          %v1072 = vshrl.u32 %v1071, 7
          %v1073 = vsub.s32 0, %v1072
          %v1074 = vrot.slane %v1040, %v1073
          %v1076 = vmul.f32 %v1068, %v1074
          %v1077 = vmul.f32 %v1069, %v1074
          %v1079 = vlaneseq
          %v1080 = vshrl.u32 %v1079, 7
          %v1081 = vsub.s32 0, %v1080
          %v1082 = vrot.slane %v1041, %v1081
          %v1084 = vadd.f32 %v1076, %v1082
          %v1085 = vadd.f32 %v1077, %v1082
          %1086 = vst.msk [vmem:[#allocation2] sm:$0xff] %vm1042, %v1084
          %1087 = vst.msk [vmem:[#allocation2 + $0x8] sm:$0xff] %vm1042, %v1085
          %v1088 = vld [vmem:[%s4] sm:$0xff]
          %v1089 = vld [vmem:[%s4 + $0x8] sm:$0xff]
          %v1090 = vld [vmem:[%s4 + $0x10] sm:$0xff]
          %v1091 = vld [vmem:[%s4 + $0x18] sm:$0xff]
          %v1092 = vld [vmem:[%s5] sm:$0x1]
          %v1094 = vlaneseq
          %v1095 = vshrl.u32 %v1094, 7
          %v1096 = vsub.s32 0, %v1095
          %v1097 = vrot.slane %v1092, %v1096
          %v1100 = vsel %vm1042, %v1084, 0
          %v1103 = vsel %vm1042, %v1085, 0
          %1105 = vmatprep.subr.mxu0 0.0
          %1106 = vmatpush1.msra.mxu0 %v1088
          %1107 = vmatprep.subr.mxu0 0.0
          %1108 = vmatpush1.msra.mxu0 %v1089
          %1109 = vmatprep.subr.mxu0 0.0
          %1110 = vmatpush1.msra.mxu0 %v1090
          %1111 = vmatprep.subr.mxu0 0.0
          %1112 = vmatpush1.msra.mxu0 %v1091
          %1113 = vmatprep.subr.mxu0 0.0
          %1114 = vmatpush1.msra.mxu0 0.0
          %1115 = vmatprep.subr.mxu0 0.0
          %1116 = vmatpush1.msra.mxu0 0.0
          %1117 = vmatprep.subr.mxu0 0.0
          %1118 = vmatpush1.msra.mxu0 0.0
          %1119 = vmatprep.subr.mxu0 0.0
          %1120 = vmatpush1.msra.mxu0 0.0
          %1121 = vmatprep.subr.mxu0 0.0
          %1122 = vmatpush1.msra.mxu0 0.0
          %1123 = vmatprep.subr.mxu0 0.0
          %1124 = vmatpush1.msra.mxu0 0.0
          %1125 = vmatprep.subr.mxu0 0.0
          %1126 = vmatpush1.msra.mxu0 0.0
          %1127 = vmatprep.subr.mxu0 0.0
          %1128 = vmatpush1.msra.mxu0 0.0
          %1129 = vmatprep.subr.mxu0 0.0
          %1130 = vmatpush1.msra.mxu0 0.0
          %1131 = vmatprep.subr.mxu0 0.0
          %1132 = vmatpush1.msra.mxu0 0.0
          %1133 = vmatprep.subr.mxu0 0.0
          %1134 = vmatpush1.msra.mxu0 0.0
          %1135 = vmatprep.subr.mxu0 0.0
          %1136 = vmatpush1.msra.mxu0 0.0
          %1137 = vmatprep.subr.mxu0 0.0
          %1138 = vmatpush1.msra.mxu0 0.0
          %1139 = vmatprep.subr.mxu0 0.0
          %1140 = vmatpush1.msra.mxu0 0.0
          %1141 = vmatprep.subr.mxu0 0.0
          %1142 = vmatpush1.msra.mxu0 0.0
          %1143 = vmatprep.subr.mxu0 0.0
          %1144 = vmatpush1.msra.mxu0 0.0
          %1145 = vmatprep.subr.mxu0 0.0
          %1146 = vmatpush1.msra.mxu0 0.0
          %1147 = vmatprep.subr.mxu0 0.0
          %1148 = vmatpush1.msra.mxu0 0.0
          %1149 = vmatprep.subr.mxu0 0.0
          %1150 = vmatpush1.msra.mxu0 0.0
          %1151 = vmatprep.subr.mxu0 0.0
          %1152 = vmatpush1.msra.mxu0 0.0
          %1153 = vmatprep.subr.mxu0 0.0
          %1154 = vmatpush1.msra.mxu0 0.0
          %1155 = vmatprep.subr.mxu0 0.0
          %1156 = vmatpush1.msra.mxu0 0.0
          %1157 = vmatprep.subr.mxu0 0.0
          %1158 = vmatpush1.msra.mxu0 0.0
          %1159 = vmatprep.subr.mxu0 0.0
          %1160 = vmatpush1.msra.mxu0 0.0
          %1161 = vmatprep.subr.mxu0 0.0
          %1162 = vmatpush1.msra.mxu0 0.0
          %1163 = vmatprep.subr.mxu0 0.0
          %1164 = vmatpush1.msra.mxu0 0.0
          %1165 = vmatprep.subr.mxu0 0.0
          %1166 = vmatpush1.msra.mxu0 0.0
          %1167 = vmatprep.subr.mxu0 0.0
          %1168 = vmatpush1.msra.mxu0 0.0
          %1169 = vmatprep.mubr.f32.mxu0 0.0
          %1170 = vmatmul.mubr.f32.gmra.mrb[0].mxu0 %v1100
          %v1171 = vpop.f32.mrb[0].mxu0
          %v1172 = vadd.f32 %v1097, %v1171
          %v1173 = vpop.f32.mrb[0].mxu0
          %1174 = vmatprep.mubr.f32.mxu0 0.0
          %1175 = vmatmul.mubr.f32.gmra.mrb[0].mxu0 %v1103
          %v1176 = vpop.f32.mrb[0].mxu0
          %v1177 = vadd.f32 %v1097, %v1176
          %v1178 = vpop.f32.mrb[0].mxu0
          %1179 = vdwg.mxu0
          %vm1180 = vcmask 392192
          %1181 = vst.msk [vmem:[#allocation3] sm:$0xff] %vm1180, %v1172
          %1182 = vst.msk [vmem:[#allocation3 + $0x8] sm:$0xff] %vm1180, %v1177
        $region120: #{tiny_bert_forward.1} parent=115 // pred_fallthru
          _
        %v1183 = vld [vmem:[#allocation2] sm:$0xff]
        %v1184 = vld [vmem:[#allocation2 + $0x8] sm:$0xff]
        %v1185 = vld [vmem:[%s1] sm:$0x1]
        %v1186 = vld [vmem:[%s1 + $0x1] sm:$0x1]
        %v1187 = vld [vmem:[%s976] sm:$0xff]
        %v1188 = vld [vmem:[%s976 + $0x8] sm:$0xff]
        %v1189 = vld [vmem:[%s976 + $0x10] sm:$0xff]
        %v1190 = vld [vmem:[%s976 + $0x18] sm:$0xff]
        %v1191 = vld [vmem:[%s979] sm:$0x1]
        %v1193 = vlaneseq
        %v1194 = vshrl.u32 %v1193, 7
        %v1195 = vsub.s32 0, %v1194
        %v1196 = vrot.slane %v1191, %v1195
        %vm1198 = vcmask 261120
        %v1200 = vsel %vm1198, %v1183, 0
        %v1203 = vsel %vm1198, %v1184, 0
        %1205 = vmatprep.subr.mxu0 0.0
        %1206 = vmatpush1.msra.mxu0 %v1187
        %1207 = vmatprep.subr.mxu0 0.0
        %1208 = vmatpush1.msra.mxu0 %v1188
        %1209 = vmatprep.subr.mxu0 0.0
        %1210 = vmatpush1.msra.mxu0 %v1189
        %1211 = vmatprep.subr.mxu0 0.0
        %1212 = vmatpush1.msra.mxu0 %v1190
        %1213 = vmatprep.subr.mxu0 0.0
        %1214 = vmatpush1.msra.mxu0 0.0
        %1215 = vmatprep.subr.mxu0 0.0
        %1216 = vmatpush1.msra.mxu0 0.0
        %1217 = vmatprep.subr.mxu0 0.0
        %1218 = vmatpush1.msra.mxu0 0.0
        %1219 = vmatprep.subr.mxu0 0.0
        %1220 = vmatpush1.msra.mxu0 0.0
        %1221 = vmatprep.subr.mxu0 0.0
        %1222 = vmatpush1.msra.mxu0 0.0
        %1223 = vmatprep.subr.mxu0 0.0
        %1224 = vmatpush1.msra.mxu0 0.0
        %1225 = vmatprep.subr.mxu0 0.0
        %1226 = vmatpush1.msra.mxu0 0.0
        %1227 = vmatprep.subr.mxu0 0.0
        %1228 = vmatpush1.msra.mxu0 0.0
        %1229 = vmatprep.subr.mxu0 0.0
        %1230 = vmatpush1.msra.mxu0 0.0
        %1231 = vmatprep.subr.mxu0 0.0
        %1232 = vmatpush1.msra.mxu0 0.0
        %1233 = vmatprep.subr.mxu0 0.0
        %1234 = vmatpush1.msra.mxu0 0.0
        %1235 = vmatprep.subr.mxu0 0.0
        %1236 = vmatpush1.msra.mxu0 0.0
        %1237 = vmatprep.subr.mxu0 0.0
        %1238 = vmatpush1.msra.mxu0 0.0
        %1239 = vmatprep.subr.mxu0 0.0
        %1240 = vmatpush1.msra.mxu0 0.0
        %1241 = vmatprep.subr.mxu0 0.0
        %1242 = vmatpush1.msra.mxu0 0.0
        %1243 = vmatprep.subr.mxu0 0.0
        %1244 = vmatpush1.msra.mxu0 0.0
        %1245 = vmatprep.subr.mxu0 0.0
        %1246 = vmatpush1.msra.mxu0 0.0
        %1247 = vmatprep.subr.mxu0 0.0
        %1248 = vmatpush1.msra.mxu0 0.0
        %1249 = vmatprep.subr.mxu0 0.0
        %1250 = vmatpush1.msra.mxu0 0.0
        %1251 = vmatprep.subr.mxu0 0.0
        %1252 = vmatpush1.msra.mxu0 0.0
        %1253 = vmatprep.subr.mxu0 0.0
        %1254 = vmatpush1.msra.mxu0 0.0
        %1255 = vmatprep.subr.mxu0 0.0
        %1256 = vmatpush1.msra.mxu0 0.0
        %1257 = vmatprep.subr.mxu0 0.0
        %1258 = vmatpush1.msra.mxu0 0.0
        %1259 = vmatprep.subr.mxu0 0.0
        %1260 = vmatpush1.msra.mxu0 0.0
        %1261 = vmatprep.subr.mxu0 0.0
        %1262 = vmatpush1.msra.mxu0 0.0
        %1263 = vmatprep.subr.mxu0 0.0
        %1264 = vmatpush1.msra.mxu0 0.0
        %1265 = vmatprep.subr.mxu0 0.0
        %1266 = vmatpush1.msra.mxu0 0.0
        %1267 = vmatprep.subr.mxu0 0.0
        %1268 = vmatpush1.msra.mxu0 0.0
        %1269 = vmatprep.mubr.f32.mxu0 0.0
        %1270 = vmatmul.mubr.f32.gmra.mrb[0].mxu0 %v1200
        %v1271 = vpop.f32.mrb[0].mxu0
        %v1272 = vadd.f32 %v1196, %v1271
        %v1273 = vpop.f32.mrb[0].mxu0
        %1274 = vmatprep.mubr.f32.mxu0 0.0
        %1275 = vmatmul.mubr.f32.gmra.mrb[0].mxu0 %v1203
        %v1276 = vpop.f32.mrb[0].mxu0
        %v1277 = vadd.f32 %v1196, %v1276
        %v1278 = vpop.f32.mrb[0].mxu0
        %1279 = vdwg.mxu0
        %v1280 = vld [vmem:[%s987] sm:$0x1]
        %1282 = vrot.lane.b32.xlu0 %v1272, 96
        %v1283 = vpop.permute.xlu0 %1282
        %vm1284 = vcmask 64512
        %v1285 = vsel %vm1284, %v1272, 0
        %v1287 = vsel %vm1284, %v1283, 0
        %1289 = vmatprep.subr.mxu0 0.0
        %1290 = vmatpush1.xpose.msra.mxu0 %v1287
        %1291 = vmatprep.subr.mxu0 0.0
        %1292 = vmatpush1.xpose.msra.mxu0 0.0
        %1293 = vmatprep.subr.mxu0 0.0
        %1294 = vmatpush1.xpose.msra.mxu0 0.0
        %1295 = vmatprep.subr.mxu0 0.0
        %1296 = vmatpush1.xpose.msra.mxu0 0.0
        %1297 = vmatprep.subr.mxu0 0.0
        %1298 = vmatpush1.xpose.msra.mxu0 0.0
        %1299 = vmatprep.subr.mxu0 0.0
        %1300 = vmatpush1.xpose.msra.mxu0 0.0
        %1301 = vmatprep.subr.mxu0 0.0
        %1302 = vmatpush1.xpose.msra.mxu0 0.0
        %1303 = vmatprep.subr.mxu0 0.0
        %1304 = vmatpush1.xpose.msra.mxu0 0.0
        %1305 = vmatprep.subr.mxu0 0.0
        %1306 = vmatpush1.xpose.msra.mxu0 0.0
        %1307 = vmatprep.subr.mxu0 0.0
        %1308 = vmatpush1.xpose.msra.mxu0 0.0
        %1309 = vmatprep.subr.mxu0 0.0
        %1310 = vmatpush1.xpose.msra.mxu0 0.0
        %1311 = vmatprep.subr.mxu0 0.0
        %1312 = vmatpush1.xpose.msra.mxu0 0.0
        %1313 = vmatprep.subr.mxu0 0.0
        %1314 = vmatpush1.xpose.msra.mxu0 0.0
        %1315 = vmatprep.subr.mxu0 0.0
        %1316 = vmatpush1.xpose.msra.mxu0 0.0
        %1317 = vmatprep.subr.mxu0 0.0
        %1318 = vmatpush1.xpose.msra.mxu0 0.0
        %1319 = vmatprep.subr.mxu0 0.0
        %1320 = vmatpush1.xpose.msra.mxu0 0.0
        %1321 = vmatprep.subr.mxu0 0.0
        %1322 = vmatpush1.xpose.msra.mxu0 0.0
        %1323 = vmatprep.subr.mxu0 0.0
        %1324 = vmatpush1.xpose.msra.mxu0 0.0
        %1325 = vmatprep.subr.mxu0 0.0
        %1326 = vmatpush1.xpose.msra.mxu0 0.0
        %1327 = vmatprep.subr.mxu0 0.0
        %1328 = vmatpush1.xpose.msra.mxu0 0.0
        %1329 = vmatprep.subr.mxu0 0.0
        %1330 = vmatpush1.xpose.msra.mxu0 0.0
        %1331 = vmatprep.subr.mxu0 0.0
        %1332 = vmatpush1.xpose.msra.mxu0 0.0
        %1333 = vmatprep.subr.mxu0 0.0
        %1334 = vmatpush1.xpose.msra.mxu0 0.0
        %1335 = vmatprep.subr.mxu0 0.0
        %1336 = vmatpush1.xpose.msra.mxu0 0.0
        %1337 = vmatprep.subr.mxu0 0.0
        %1338 = vmatpush1.xpose.msra.mxu0 0.0
        %1339 = vmatprep.subr.mxu0 0.0
        %1340 = vmatpush1.xpose.msra.mxu0 0.0
        %1341 = vmatprep.subr.mxu0 0.0
        %1342 = vmatpush1.xpose.msra.mxu0 0.0
        %1343 = vmatprep.subr.mxu0 0.0
        %1344 = vmatpush1.xpose.msra.mxu0 0.0
        %1345 = vmatprep.subr.mxu0 0.0
        %1346 = vmatpush1.xpose.msra.mxu0 0.0
        %1347 = vmatprep.subr.mxu0 0.0
        %1348 = vmatpush1.xpose.msra.mxu0 0.0
        %1349 = vmatprep.subr.mxu0 0.0
        %1350 = vmatpush1.xpose.msra.mxu0 0.0
        %1351 = vmatprep.subr.mxu0 0.0
        %1352 = vmatpush1.xpose.msra.mxu0 0.0
        %1353 = vmatprep.mubr.f32.mxu0 0.0
        %1354 = vmatmul.mubr.f32.gmra.mrb[0].mxu0 %v1285
        %v1355 = vpop.f32.mrb[0].mxu0
        %v1356 = vadd.f32 0.0, %v1355
        %v1357 = vpop.f32.mrb[0].mxu0
        %1358 = vdwg.mxu0
        %1360 = vrot.lane.b32.xlu0 %v1277, 96
        %v1361 = vpop.permute.xlu0 %1360
        %v1362 = vsel %vm1284, %v1277, 0
        %v1364 = vsel %vm1284, %v1361, 0
        %1366 = vmatprep.subr.mxu0 0.0
        %1367 = vmatpush1.xpose.msra.mxu0 %v1364
        %1368 = vmatprep.subr.mxu0 0.0
        %1369 = vmatpush1.xpose.msra.mxu0 0.0
        %1370 = vmatprep.subr.mxu0 0.0
        %1371 = vmatpush1.xpose.msra.mxu0 0.0
        %1372 = vmatprep.subr.mxu0 0.0
        %1373 = vmatpush1.xpose.msra.mxu0 0.0
        %1374 = vmatprep.subr.mxu0 0.0
        %1375 = vmatpush1.xpose.msra.mxu0 0.0
        %1376 = vmatprep.subr.mxu0 0.0
        %1377 = vmatpush1.xpose.msra.mxu0 0.0
        %1378 = vmatprep.subr.mxu0 0.0
        %1379 = vmatpush1.xpose.msra.mxu0 0.0
        %1380 = vmatprep.subr.mxu0 0.0
        %1381 = vmatpush1.xpose.msra.mxu0 0.0
        %1382 = vmatprep.subr.mxu0 0.0
        %1383 = vmatpush1.xpose.msra.mxu0 0.0
        %1384 = vmatprep.subr.mxu0 0.0
        %1385 = vmatpush1.xpose.msra.mxu0 0.0
        %1386 = vmatprep.subr.mxu0 0.0
        %1387 = vmatpush1.xpose.msra.mxu0 0.0
        %1388 = vmatprep.subr.mxu0 0.0
        %1389 = vmatpush1.xpose.msra.mxu0 0.0
        %1390 = vmatprep.subr.mxu0 0.0
        %1391 = vmatpush1.xpose.msra.mxu0 0.0
        %1392 = vmatprep.subr.mxu0 0.0
        %1393 = vmatpush1.xpose.msra.mxu0 0.0
        %1394 = vmatprep.subr.mxu0 0.0
        %1395 = vmatpush1.xpose.msra.mxu0 0.0
        %1396 = vmatprep.subr.mxu0 0.0
        %1397 = vmatpush1.xpose.msra.mxu0 0.0
        %1398 = vmatprep.subr.mxu0 0.0
        %1399 = vmatpush1.xpose.msra.mxu0 0.0
        %1400 = vmatprep.subr.mxu0 0.0
        %1401 = vmatpush1.xpose.msra.mxu0 0.0
        %1402 = vmatprep.subr.mxu0 0.0
        %1403 = vmatpush1.xpose.msra.mxu0 0.0
        %1404 = vmatprep.subr.mxu0 0.0
        %1405 = vmatpush1.xpose.msra.mxu0 0.0
        %1406 = vmatprep.subr.mxu0 0.0
        %1407 = vmatpush1.xpose.msra.mxu0 0.0
        %1408 = vmatprep.subr.mxu0 0.0
        %1409 = vmatpush1.xpose.msra.mxu0 0.0
        %1410 = vmatprep.subr.mxu0 0.0
        %1411 = vmatpush1.xpose.msra.mxu0 0.0
        %1412 = vmatprep.subr.mxu0 0.0
        %1413 = vmatpush1.xpose.msra.mxu0 0.0
        %1414 = vmatprep.subr.mxu0 0.0
        %1415 = vmatpush1.xpose.msra.mxu0 0.0
        %1416 = vmatprep.subr.mxu0 0.0
        %1417 = vmatpush1.xpose.msra.mxu0 0.0
        %1418 = vmatprep.subr.mxu0 0.0
        %1419 = vmatpush1.xpose.msra.mxu0 0.0
        %1420 = vmatprep.subr.mxu0 0.0
        %1421 = vmatpush1.xpose.msra.mxu0 0.0
        %1422 = vmatprep.subr.mxu0 0.0
        %1423 = vmatpush1.xpose.msra.mxu0 0.0
        %1424 = vmatprep.subr.mxu0 0.0
        %1425 = vmatpush1.xpose.msra.mxu0 0.0
        %1426 = vmatprep.subr.mxu0 0.0
        %1427 = vmatpush1.xpose.msra.mxu0 0.0
        %1428 = vmatprep.subr.mxu0 0.0
        %1429 = vmatpush1.xpose.msra.mxu0 0.0
        %1430 = vmatprep.mubr.f32.mxu0 0.0
        %1431 = vmatmul.mubr.f32.gmra.mrb[0].mxu0 %v1362
        %v1432 = vpop.f32.mrb[0].mxu0
        %v1433 = vadd.f32 0.0, %v1432
        %v1434 = vpop.f32.mrb[0].mxu0
        %1435 = vdwg.mxu0
        %v1436 = vmul.f32 %v1356, 0.35355338
        %v1437 = vmul.f32 %v1433, 0.35355338
        %v1440 = vlaneseq
        %v1441 = vshrl.u32 %v1440, 7
        %v1442 = vsub.s32 0, %v1441
        %v1443 = vrot.slane %v1185, %v1442
        %v1444 = vlaneseq
        %v1445 = vshrl.u32 %v1444, 7
        %v1446 = vsub.s32 0, %v1445
        %v1447 = vrot.slane %v1186, %v1446
        %v1450 = vadd.f32 %v1436, %v1443
        %v1451 = vadd.f32 %v1437, %v1447
        %1452 = vst.msk [vmem:[%s1028] sm:$0xff] %vm1284, %v1450
        %1453 = vst.msk [vmem:[%s1028 + $0x8] sm:$0xff] %vm1284, %v1451
        %v1454 = vsel %vm1284, %v1450, -inf
        %1455 = vmax.xlane.f32.xlu0 %v1454
        %v1456 = vpop.xlane.xlu0 %1455
        %v1457 = vsel %vm1284, %v1451, -inf
        %1458 = vmax.xlane.f32.xlu0 %v1457
        %v1459 = vpop.xlane.xlu0 %1458
        %v1460 = vsub.f32 %v1450, %v1456
        %v1461 = vsub.f32 %v1451, %v1459
        %v1462 = vmul.f32 %v1460, 1.442695
        %v1463 = vpow.pop %v1462
        %v1464 = vmul.f32 %v1461, 1.442695
        %v1465 = vpow.pop %v1464
        %v1466 = vsel %vm1284, %v1463, 0.0
        %1467 = vadd.xlane.f32.xlu0 %v1466
        %v1468 = vpop.xlane.xlu0 %1467
        %v1469 = vsel %vm1284, %v1465, 0.0
        %1470 = vadd.xlane.f32.xlu0 %v1469
        %v1471 = vpop.xlane.xlu0 %1470
        %v1472 = vrcp.pop %v1468
        %v1473 = vrcp.pop %v1471
        %v1474 = vmul.f32 %v1463, %v1472
        %v1475 = vmul.f32 %v1465, %v1473
        %1476 = vrot.lane.b32.xlu0 %v1272, 64
        %v1477 = vpop.permute.xlu0 %1476
        %v1480 = vsel %vm1284, %v1474, 0
        %1482 = vmatprep.subr.mxu0 0.0
        %1483 = vmatpush1.msra.mxu0 %v1477
        %1484 = vmatprep.subr.mxu0 0.0
        %1485 = vmatpush1.msra.mxu0 0.0
        %1486 = vmatprep.subr.mxu0 0.0
        %1487 = vmatpush1.msra.mxu0 0.0
        %1488 = vmatprep.subr.mxu0 0.0
        %1489 = vmatpush1.msra.mxu0 0.0
        %1490 = vmatprep.subr.mxu0 0.0
        %1491 = vmatpush1.msra.mxu0 0.0
        %1492 = vmatprep.subr.mxu0 0.0
        %1493 = vmatpush1.msra.mxu0 0.0
        %1494 = vmatprep.subr.mxu0 0.0
        %1495 = vmatpush1.msra.mxu0 0.0
        %1496 = vmatprep.subr.mxu0 0.0
        %1497 = vmatpush1.msra.mxu0 0.0
        %1498 = vmatprep.subr.mxu0 0.0
        %1499 = vmatpush1.msra.mxu0 0.0
        %1500 = vmatprep.subr.mxu0 0.0
        %1501 = vmatpush1.msra.mxu0 0.0
        %1502 = vmatprep.subr.mxu0 0.0
        %1503 = vmatpush1.msra.mxu0 0.0
        %1504 = vmatprep.subr.mxu0 0.0
        %1505 = vmatpush1.msra.mxu0 0.0
        %1506 = vmatprep.subr.mxu0 0.0
        %1507 = vmatpush1.msra.mxu0 0.0
        %1508 = vmatprep.subr.mxu0 0.0
        %1509 = vmatpush1.msra.mxu0 0.0
        %1510 = vmatprep.subr.mxu0 0.0
        %1511 = vmatpush1.msra.mxu0 0.0
        %1512 = vmatprep.subr.mxu0 0.0
        %1513 = vmatpush1.msra.mxu0 0.0
        %1514 = vmatprep.subr.mxu0 0.0
        %1515 = vmatpush1.msra.mxu0 0.0
        %1516 = vmatprep.subr.mxu0 0.0
        %1517 = vmatpush1.msra.mxu0 0.0
        %1518 = vmatprep.subr.mxu0 0.0
        %1519 = vmatpush1.msra.mxu0 0.0
        %1520 = vmatprep.subr.mxu0 0.0
        %1521 = vmatpush1.msra.mxu0 0.0
        %1522 = vmatprep.subr.mxu0 0.0
        %1523 = vmatpush1.msra.mxu0 0.0
        %1524 = vmatprep.subr.mxu0 0.0
        %1525 = vmatpush1.msra.mxu0 0.0
        %1526 = vmatprep.subr.mxu0 0.0
        %1527 = vmatpush1.msra.mxu0 0.0
        %1528 = vmatprep.subr.mxu0 0.0
        %1529 = vmatpush1.msra.mxu0 0.0
        %1530 = vmatprep.subr.mxu0 0.0
        %1531 = vmatpush1.msra.mxu0 0.0
        %1532 = vmatprep.subr.mxu0 0.0
        %1533 = vmatpush1.msra.mxu0 0.0
        %1534 = vmatprep.subr.mxu0 0.0
        %1535 = vmatpush1.msra.mxu0 0.0
        %1536 = vmatprep.subr.mxu0 0.0
        %1537 = vmatpush1.msra.mxu0 0.0
        %1538 = vmatprep.subr.mxu0 0.0
        %1539 = vmatpush1.msra.mxu0 0.0
        %1540 = vmatprep.subr.mxu0 0.0
        %1541 = vmatpush1.msra.mxu0 0.0
        %1542 = vmatprep.subr.mxu0 0.0
        %1543 = vmatpush1.msra.mxu0 0.0
        %1544 = vmatprep.subr.mxu0 0.0
        %1545 = vmatpush1.msra.mxu0 0.0
        %1546 = vmatprep.mubr.f32.mxu0 0.0
        %1547 = vmatmul.mubr.f32.gmra.mrb[0].mxu0 %v1480
        %v1548 = vpop.f32.mrb[0].mxu0
        %v1549 = vadd.f32 0.0, %v1548
        %v1550 = vpop.f32.mrb[0].mxu0
        %1551 = vdwg.mxu0
        %1552 = vrot.lane.b32.xlu0 %v1277, 64
        %v1553 = vpop.permute.xlu0 %1552
        %v1556 = vsel %vm1284, %v1475, 0
        %1558 = vmatprep.subr.mxu0 0.0
        %1559 = vmatpush1.msra.mxu0 %v1553
        %1560 = vmatprep.subr.mxu0 0.0
        %1561 = vmatpush1.msra.mxu0 0.0
        %1562 = vmatprep.subr.mxu0 0.0
        %1563 = vmatpush1.msra.mxu0 0.0
        %1564 = vmatprep.subr.mxu0 0.0
        %1565 = vmatpush1.msra.mxu0 0.0
        %1566 = vmatprep.subr.mxu0 0.0
        %1567 = vmatpush1.msra.mxu0 0.0
        %1568 = vmatprep.subr.mxu0 0.0
        %1569 = vmatpush1.msra.mxu0 0.0
        %1570 = vmatprep.subr.mxu0 0.0
        %1571 = vmatpush1.msra.mxu0 0.0
        %1572 = vmatprep.subr.mxu0 0.0
        %1573 = vmatpush1.msra.mxu0 0.0
        %1574 = vmatprep.subr.mxu0 0.0
        %1575 = vmatpush1.msra.mxu0 0.0
        %1576 = vmatprep.subr.mxu0 0.0
        %1577 = vmatpush1.msra.mxu0 0.0
        %1578 = vmatprep.subr.mxu0 0.0
        %1579 = vmatpush1.msra.mxu0 0.0
        %1580 = vmatprep.subr.mxu0 0.0
        %1581 = vmatpush1.msra.mxu0 0.0
        %1582 = vmatprep.subr.mxu0 0.0
        %1583 = vmatpush1.msra.mxu0 0.0
        %1584 = vmatprep.subr.mxu0 0.0
        %1585 = vmatpush1.msra.mxu0 0.0
        %1586 = vmatprep.subr.mxu0 0.0
        %1587 = vmatpush1.msra.mxu0 0.0
        %1588 = vmatprep.subr.mxu0 0.0
        %1589 = vmatpush1.msra.mxu0 0.0
        %1590 = vmatprep.subr.mxu0 0.0
        %1591 = vmatpush1.msra.mxu0 0.0
        %1592 = vmatprep.subr.mxu0 0.0
        %1593 = vmatpush1.msra.mxu0 0.0
        %1594 = vmatprep.subr.mxu0 0.0
        %1595 = vmatpush1.msra.mxu0 0.0
        %1596 = vmatprep.subr.mxu0 0.0
        %1597 = vmatpush1.msra.mxu0 0.0
        %1598 = vmatprep.subr.mxu0 0.0
        %1599 = vmatpush1.msra.mxu0 0.0
        %1600 = vmatprep.subr.mxu0 0.0
        %1601 = vmatpush1.msra.mxu0 0.0
        %1602 = vmatprep.subr.mxu0 0.0
        %1603 = vmatpush1.msra.mxu0 0.0
        %1604 = vmatprep.subr.mxu0 0.0
        %1605 = vmatpush1.msra.mxu0 0.0
        %1606 = vmatprep.subr.mxu0 0.0
        %1607 = vmatpush1.msra.mxu0 0.0
        %1608 = vmatprep.subr.mxu0 0.0
        %1609 = vmatpush1.msra.mxu0 0.0
        %1610 = vmatprep.subr.mxu0 0.0
        %1611 = vmatpush1.msra.mxu0 0.0
        %1612 = vmatprep.subr.mxu0 0.0
        %1613 = vmatpush1.msra.mxu0 0.0
        %1614 = vmatprep.subr.mxu0 0.0
        %1615 = vmatpush1.msra.mxu0 0.0
        %1616 = vmatprep.subr.mxu0 0.0
        %1617 = vmatpush1.msra.mxu0 0.0
        %1618 = vmatprep.subr.mxu0 0.0
        %1619 = vmatpush1.msra.mxu0 0.0
        %1620 = vmatprep.subr.mxu0 0.0
        %1621 = vmatpush1.msra.mxu0 0.0
        %1622 = vmatprep.mubr.f32.mxu0 0.0
        %1623 = vmatmul.mubr.f32.gmra.mrb[0].mxu0 %v1556
        %v1624 = vpop.f32.mrb[0].mxu0
        %v1625 = vadd.f32 0.0, %v1624
        %v1626 = vpop.f32.mrb[0].mxu0
        %1627 = vdwg.mxu0
        %v1628 = vld [vmem:[%s984] sm:$0xff]
        %v1630 = vsel %vm1284, %v1549, 0
        %v1633 = vsel %vm1284, %v1625, 0
        %1635 = vmatprep.subr.mxu0 0.0
        %1636 = vmatpush1.msra.mxu0 %v1628
        %1637 = vmatprep.subr.mxu0 0.0
        %1638 = vmatpush1.msra.mxu0 0.0
        %1639 = vmatprep.subr.mxu0 0.0
        %1640 = vmatpush1.msra.mxu0 0.0
        %1641 = vmatprep.subr.mxu0 0.0
        %1642 = vmatpush1.msra.mxu0 0.0
        %1643 = vmatprep.subr.mxu0 0.0
        %1644 = vmatpush1.msra.mxu0 0.0
        %1645 = vmatprep.subr.mxu0 0.0
        %1646 = vmatpush1.msra.mxu0 0.0
        %1647 = vmatprep.subr.mxu0 0.0
        %1648 = vmatpush1.msra.mxu0 0.0
        %1649 = vmatprep.subr.mxu0 0.0
        %1650 = vmatpush1.msra.mxu0 0.0
        %1651 = vmatprep.subr.mxu0 0.0
        %1652 = vmatpush1.msra.mxu0 0.0
        %1653 = vmatprep.subr.mxu0 0.0
        %1654 = vmatpush1.msra.mxu0 0.0
        %1655 = vmatprep.subr.mxu0 0.0
        %1656 = vmatpush1.msra.mxu0 0.0
        %1657 = vmatprep.subr.mxu0 0.0
        %1658 = vmatpush1.msra.mxu0 0.0
        %1659 = vmatprep.subr.mxu0 0.0
        %1660 = vmatpush1.msra.mxu0 0.0
        %1661 = vmatprep.subr.mxu0 0.0
        %1662 = vmatpush1.msra.mxu0 0.0
        %1663 = vmatprep.subr.mxu0 0.0
        %1664 = vmatpush1.msra.mxu0 0.0
        %1665 = vmatprep.subr.mxu0 0.0
        %1666 = vmatpush1.msra.mxu0 0.0
        %1667 = vmatprep.subr.mxu0 0.0
        %1668 = vmatpush1.msra.mxu0 0.0
        %1669 = vmatprep.subr.mxu0 0.0
        %1670 = vmatpush1.msra.mxu0 0.0
        %1671 = vmatprep.subr.mxu0 0.0
        %1672 = vmatpush1.msra.mxu0 0.0
        %1673 = vmatprep.subr.mxu0 0.0
        %1674 = vmatpush1.msra.mxu0 0.0
        %1675 = vmatprep.subr.mxu0 0.0
        %1676 = vmatpush1.msra.mxu0 0.0
        %1677 = vmatprep.subr.mxu0 0.0
        %1678 = vmatpush1.msra.mxu0 0.0
        %1679 = vmatprep.subr.mxu0 0.0
        %1680 = vmatpush1.msra.mxu0 0.0
        %1681 = vmatprep.subr.mxu0 0.0
        %1682 = vmatpush1.msra.mxu0 0.0
        %1683 = vmatprep.subr.mxu0 0.0
        %1684 = vmatpush1.msra.mxu0 0.0
        %1685 = vmatprep.subr.mxu0 0.0
        %1686 = vmatpush1.msra.mxu0 0.0
        %1687 = vmatprep.subr.mxu0 0.0
        %1688 = vmatpush1.msra.mxu0 0.0
        %1689 = vmatprep.subr.mxu0 0.0
        %1690 = vmatpush1.msra.mxu0 0.0
        %1691 = vmatprep.subr.mxu0 0.0
        %1692 = vmatpush1.msra.mxu0 0.0
        %1693 = vmatprep.subr.mxu0 0.0
        %1694 = vmatpush1.msra.mxu0 0.0
        %1695 = vmatprep.subr.mxu0 0.0
        %1696 = vmatpush1.msra.mxu0 0.0
        %1697 = vmatprep.subr.mxu0 0.0
        %1698 = vmatpush1.msra.mxu0 0.0
        %1699 = vmatprep.mubr.f32.mxu0 0.0
        %1700 = vmatmul.mubr.f32.gmra.mrb[0].mxu0 %v1630
        %v1701 = vpop.f32.mrb[0].mxu0
        %v1702 = vadd.f32 0.0, %v1701
        %v1703 = vpop.f32.mrb[0].mxu0
        %1704 = vmatprep.mubr.f32.mxu0 0.0
        %1705 = vmatmul.mubr.f32.gmra.mrb[0].mxu0 %v1633
        %v1706 = vpop.f32.mrb[0].mxu0
        %v1707 = vadd.f32 0.0, %v1706
        %v1708 = vpop.f32.mrb[0].mxu0
        %1709 = vdwg.mxu0
        %v1711 = vlaneseq
        %v1712 = vshrl.u32 %v1711, 7
        %v1713 = vsub.s32 0, %v1712
        %v1714 = vrot.slane %v1280, %v1713
        %v1716 = vadd.f32 %v1714, %v1702
        %v1717 = vadd.f32 %v1714, %v1707
        %1718 = vrot.lane.b32.xlu0 %v1272, 120
        %v1719 = vpop.permute.xlu0 %1718
        %1720 = vrot.lane.b32.xlu0 %v1272, 88
        %v1721 = vpop.permute.xlu0 %1720
        %v1722 = vsel %vm1284, %v1719, 0
        %v1724 = vsel %vm1284, %v1721, 0
        %1726 = vmatprep.subr.mxu0 0.0
        %1727 = vmatpush1.xpose.msra.mxu0 %v1724
        %1728 = vmatprep.subr.mxu0 0.0
        %1729 = vmatpush1.xpose.msra.mxu0 0.0
        %1730 = vmatprep.subr.mxu0 0.0
        %1731 = vmatpush1.xpose.msra.mxu0 0.0
        %1732 = vmatprep.subr.mxu0 0.0
        %1733 = vmatpush1.xpose.msra.mxu0 0.0
        %1734 = vmatprep.subr.mxu0 0.0
        %1735 = vmatpush1.xpose.msra.mxu0 0.0
        %1736 = vmatprep.subr.mxu0 0.0
        %1737 = vmatpush1.xpose.msra.mxu0 0.0
        %1738 = vmatprep.subr.mxu0 0.0
        %1739 = vmatpush1.xpose.msra.mxu0 0.0
        %1740 = vmatprep.subr.mxu0 0.0
        %1741 = vmatpush1.xpose.msra.mxu0 0.0
        %1742 = vmatprep.subr.mxu0 0.0
        %1743 = vmatpush1.xpose.msra.mxu0 0.0
        %1744 = vmatprep.subr.mxu0 0.0
        %1745 = vmatpush1.xpose.msra.mxu0 0.0
        %1746 = vmatprep.subr.mxu0 0.0
        %1747 = vmatpush1.xpose.msra.mxu0 0.0
        %1748 = vmatprep.subr.mxu0 0.0
        %1749 = vmatpush1.xpose.msra.mxu0 0.0
        %1750 = vmatprep.subr.mxu0 0.0
        %1751 = vmatpush1.xpose.msra.mxu0 0.0
        %1752 = vmatprep.subr.mxu0 0.0
        %1753 = vmatpush1.xpose.msra.mxu0 0.0
        %1754 = vmatprep.subr.mxu0 0.0
        %1755 = vmatpush1.xpose.msra.mxu0 0.0
        %1756 = vmatprep.subr.mxu0 0.0
        %1757 = vmatpush1.xpose.msra.mxu0 0.0
        %1758 = vmatprep.subr.mxu0 0.0
        %1759 = vmatpush1.xpose.msra.mxu0 0.0
        %1760 = vmatprep.subr.mxu0 0.0
        %1761 = vmatpush1.xpose.msra.mxu0 0.0
        %1762 = vmatprep.subr.mxu0 0.0
        %1763 = vmatpush1.xpose.msra.mxu0 0.0
        %1764 = vmatprep.subr.mxu0 0.0
        %1765 = vmatpush1.xpose.msra.mxu0 0.0
        %1766 = vmatprep.subr.mxu0 0.0
        %1767 = vmatpush1.xpose.msra.mxu0 0.0
        %1768 = vmatprep.subr.mxu0 0.0
        %1769 = vmatpush1.xpose.msra.mxu0 0.0
        %1770 = vmatprep.subr.mxu0 0.0
        %1771 = vmatpush1.xpose.msra.mxu0 0.0
        %1772 = vmatprep.subr.mxu0 0.0
        %1773 = vmatpush1.xpose.msra.mxu0 0.0
        %1774 = vmatprep.subr.mxu0 0.0
        %1775 = vmatpush1.xpose.msra.mxu0 0.0
        %1776 = vmatprep.subr.mxu0 0.0
        %1777 = vmatpush1.xpose.msra.mxu0 0.0
        %1778 = vmatprep.subr.mxu0 0.0
        %1779 = vmatpush1.xpose.msra.mxu0 0.0
        %1780 = vmatprep.subr.mxu0 0.0
        %1781 = vmatpush1.xpose.msra.mxu0 0.0
        %1782 = vmatprep.subr.mxu0 0.0
        %1783 = vmatpush1.xpose.msra.mxu0 0.0
        %1784 = vmatprep.subr.mxu0 0.0
        %1785 = vmatpush1.xpose.msra.mxu0 0.0
        %1786 = vmatprep.subr.mxu0 0.0
        %1787 = vmatpush1.xpose.msra.mxu0 0.0
        %1788 = vmatprep.subr.mxu0 0.0
        %1789 = vmatpush1.xpose.msra.mxu0 0.0
        %1790 = vmatprep.mubr.f32.mxu0 0.0
        %1791 = vmatmul.mubr.f32.gmra.mrb[0].mxu0 %v1722
        %v1792 = vpop.f32.mrb[0].mxu0
        %v1793 = vadd.f32 0.0, %v1792
        %v1794 = vpop.f32.mrb[0].mxu0
        %1795 = vdwg.mxu0
        %1796 = vrot.lane.b32.xlu0 %v1277, 120
        %v1797 = vpop.permute.xlu0 %1796
        %1798 = vrot.lane.b32.xlu0 %v1277, 88
        %v1799 = vpop.permute.xlu0 %1798
        %v1800 = vsel %vm1284, %v1797, 0
        %v1802 = vsel %vm1284, %v1799, 0
        %1804 = vmatprep.subr.mxu0 0.0
        %1805 = vmatpush1.xpose.msra.mxu0 %v1802
        %1806 = vmatprep.subr.mxu0 0.0
        %1807 = vmatpush1.xpose.msra.mxu0 0.0
        %1808 = vmatprep.subr.mxu0 0.0
        %1809 = vmatpush1.xpose.msra.mxu0 0.0
        %1810 = vmatprep.subr.mxu0 0.0
        %1811 = vmatpush1.xpose.msra.mxu0 0.0
        %1812 = vmatprep.subr.mxu0 0.0
        %1813 = vmatpush1.xpose.msra.mxu0 0.0
        %1814 = vmatprep.subr.mxu0 0.0
        %1815 = vmatpush1.xpose.msra.mxu0 0.0
        %1816 = vmatprep.subr.mxu0 0.0
        %1817 = vmatpush1.xpose.msra.mxu0 0.0
        %1818 = vmatprep.subr.mxu0 0.0
        %1819 = vmatpush1.xpose.msra.mxu0 0.0
        %1820 = vmatprep.subr.mxu0 0.0
        %1821 = vmatpush1.xpose.msra.mxu0 0.0
        %1822 = vmatprep.subr.mxu0 0.0
        %1823 = vmatpush1.xpose.msra.mxu0 0.0
        %1824 = vmatprep.subr.mxu0 0.0
        %1825 = vmatpush1.xpose.msra.mxu0 0.0
        %1826 = vmatprep.subr.mxu0 0.0
        %1827 = vmatpush1.xpose.msra.mxu0 0.0
        %1828 = vmatprep.subr.mxu0 0.0
        %1829 = vmatpush1.xpose.msra.mxu0 0.0
        %1830 = vmatprep.subr.mxu0 0.0
        %1831 = vmatpush1.xpose.msra.mxu0 0.0
        %1832 = vmatprep.subr.mxu0 0.0
        %1833 = vmatpush1.xpose.msra.mxu0 0.0
        %1834 = vmatprep.subr.mxu0 0.0
        %1835 = vmatpush1.xpose.msra.mxu0 0.0
        %1836 = vmatprep.subr.mxu0 0.0
        %1837 = vmatpush1.xpose.msra.mxu0 0.0
        %1838 = vmatprep.subr.mxu0 0.0
        %1839 = vmatpush1.xpose.msra.mxu0 0.0
        %1840 = vmatprep.subr.mxu0 0.0
        %1841 = vmatpush1.xpose.msra.mxu0 0.0
        %1842 = vmatprep.subr.mxu0 0.0
        %1843 = vmatpush1.xpose.msra.mxu0 0.0
        %1844 = vmatprep.subr.mxu0 0.0
        %1845 = vmatpush1.xpose.msra.mxu0 0.0
        %1846 = vmatprep.subr.mxu0 0.0
        %1847 = vmatpush1.xpose.msra.mxu0 0.0
        %1848 = vmatprep.subr.mxu0 0.0
        %1849 = vmatpush1.xpose.msra.mxu0 0.0
        %1850 = vmatprep.subr.mxu0 0.0
        %1851 = vmatpush1.xpose.msra.mxu0 0.0
        %1852 = vmatprep.subr.mxu0 0.0
        %1853 = vmatpush1.xpose.msra.mxu0 0.0
        %1854 = vmatprep.subr.mxu0 0.0
        %1855 = vmatpush1.xpose.msra.mxu0 0.0
        %1856 = vmatprep.subr.mxu0 0.0
        %1857 = vmatpush1.xpose.msra.mxu0 0.0
        %1858 = vmatprep.subr.mxu0 0.0
        %1859 = vmatpush1.xpose.msra.mxu0 0.0
        %1860 = vmatprep.subr.mxu0 0.0
        %1861 = vmatpush1.xpose.msra.mxu0 0.0
        %1862 = vmatprep.subr.mxu0 0.0
        %1863 = vmatpush1.xpose.msra.mxu0 0.0
        %1864 = vmatprep.subr.mxu0 0.0
        %1865 = vmatpush1.xpose.msra.mxu0 0.0
        %1866 = vmatprep.subr.mxu0 0.0
        %1867 = vmatpush1.xpose.msra.mxu0 0.0
        %1868 = vmatprep.mubr.f32.mxu0 0.0
        %1869 = vmatmul.mubr.f32.gmra.mrb[0].mxu0 %v1800
        %v1870 = vpop.f32.mrb[0].mxu0
        %v1871 = vadd.f32 0.0, %v1870
        %v1872 = vpop.f32.mrb[0].mxu0
        %1873 = vdwg.mxu0
        %v1874 = vmul.f32 %v1793, 0.35355338
        %v1875 = vmul.f32 %v1871, 0.35355338
        %v1876 = vadd.f32 %v1874, %v1443
        %v1877 = vadd.f32 %v1875, %v1447
        %1880 = vrot.lane.b32.xlu0 %v1876, 8
        %v1881 = vpop.permute.xlu0 %1880
        %1882 = vrot.lane.b32.xlu0 %v1877, 8
        %v1883 = vpop.permute.xlu0 %1882
        %vm1886 = vcmask 130112
        %1887 = vst.msk [vmem:[%s1028] sm:$0xff] %vm1886, %v1881
        %1888 = vst.msk [vmem:[%s1028 + $0x8] sm:$0xff] %vm1886, %v1883
        %v1889 = vsel %vm1284, %v1876, -inf
        %1890 = vmax.xlane.f32.xlu0 %v1889
        %v1891 = vpop.xlane.xlu0 %1890
        %v1892 = vsel %vm1284, %v1877, -inf
        %1893 = vmax.xlane.f32.xlu0 %v1892
        %v1894 = vpop.xlane.xlu0 %1893
        %v1895 = vsub.f32 %v1876, %v1891
        %v1896 = vsub.f32 %v1877, %v1894
        %v1897 = vmul.f32 %v1895, 1.442695
        %v1898 = vpow.pop %v1897
        %v1899 = vmul.f32 %v1896, 1.442695
        %v1900 = vpow.pop %v1899
        %v1901 = vsel %vm1284, %v1898, 0.0
        %1902 = vadd.xlane.f32.xlu0 %v1901
        %v1903 = vpop.xlane.xlu0 %1902
        %v1904 = vsel %vm1284, %v1900, 0.0
        %1905 = vadd.xlane.f32.xlu0 %v1904
        %v1906 = vpop.xlane.xlu0 %1905
        %v1907 = vrcp.pop %v1903
        %v1908 = vrcp.pop %v1906
        %v1909 = vmul.f32 %v1898, %v1907
        %v1910 = vmul.f32 %v1900, %v1908
        %1911 = vrot.lane.b32.xlu0 %v1272, 56
        %v1912 = vpop.permute.xlu0 %1911
        %v1915 = vsel %vm1284, %v1909, 0
        %1917 = vmatprep.subr.mxu0 0.0
        %1918 = vmatpush1.msra.mxu0 %v1912
        %1919 = vmatprep.subr.mxu0 0.0
        %1920 = vmatpush1.msra.mxu0 0.0
        %1921 = vmatprep.subr.mxu0 0.0
        %1922 = vmatpush1.msra.mxu0 0.0
        %1923 = vmatprep.subr.mxu0 0.0
        %1924 = vmatpush1.msra.mxu0 0.0
        %1925 = vmatprep.subr.mxu0 0.0
        %1926 = vmatpush1.msra.mxu0 0.0
        %1927 = vmatprep.subr.mxu0 0.0
        %1928 = vmatpush1.msra.mxu0 0.0
        %1929 = vmatprep.subr.mxu0 0.0
        %1930 = vmatpush1.msra.mxu0 0.0
        %1931 = vmatprep.subr.mxu0 0.0
        %1932 = vmatpush1.msra.mxu0 0.0
        %1933 = vmatprep.subr.mxu0 0.0
        %1934 = vmatpush1.msra.mxu0 0.0
        %1935 = vmatprep.subr.mxu0 0.0
        %1936 = vmatpush1.msra.mxu0 0.0
        %1937 = vmatprep.subr.mxu0 0.0
        %1938 = vmatpush1.msra.mxu0 0.0
        %1939 = vmatprep.subr.mxu0 0.0
        %1940 = vmatpush1.msra.mxu0 0.0
        %1941 = vmatprep.subr.mxu0 0.0
        %1942 = vmatpush1.msra.mxu0 0.0
        %1943 = vmatprep.subr.mxu0 0.0
        %1944 = vmatpush1.msra.mxu0 0.0
        %1945 = vmatprep.subr.mxu0 0.0
        %1946 = vmatpush1.msra.mxu0 0.0
        %1947 = vmatprep.subr.mxu0 0.0
        %1948 = vmatpush1.msra.mxu0 0.0
        %1949 = vmatprep.subr.mxu0 0.0
        %1950 = vmatpush1.msra.mxu0 0.0
        %1951 = vmatprep.subr.mxu0 0.0
        %1952 = vmatpush1.msra.mxu0 0.0
        %1953 = vmatprep.subr.mxu0 0.0
        %1954 = vmatpush1.msra.mxu0 0.0
        %1955 = vmatprep.subr.mxu0 0.0
        %1956 = vmatpush1.msra.mxu0 0.0
        %1957 = vmatprep.subr.mxu0 0.0
        %1958 = vmatpush1.msra.mxu0 0.0
        %1959 = vmatprep.subr.mxu0 0.0
        %1960 = vmatpush1.msra.mxu0 0.0
        %1961 = vmatprep.subr.mxu0 0.0
        %1962 = vmatpush1.msra.mxu0 0.0
        %1963 = vmatprep.subr.mxu0 0.0
        %1964 = vmatpush1.msra.mxu0 0.0
        %1965 = vmatprep.subr.mxu0 0.0
        %1966 = vmatpush1.msra.mxu0 0.0
        %1967 = vmatprep.subr.mxu0 0.0
        %1968 = vmatpush1.msra.mxu0 0.0
        %1969 = vmatprep.subr.mxu0 0.0
        %1970 = vmatpush1.msra.mxu0 0.0
        %1971 = vmatprep.subr.mxu0 0.0
        %1972 = vmatpush1.msra.mxu0 0.0
        %1973 = vmatprep.subr.mxu0 0.0
        %1974 = vmatpush1.msra.mxu0 0.0
        %1975 = vmatprep.subr.mxu0 0.0
        %1976 = vmatpush1.msra.mxu0 0.0
        %1977 = vmatprep.subr.mxu0 0.0
        %1978 = vmatpush1.msra.mxu0 0.0
        %1979 = vmatprep.subr.mxu0 0.0
        %1980 = vmatpush1.msra.mxu0 0.0
        %1981 = vmatprep.mubr.f32.mxu0 0.0
        %1982 = vmatmul.mubr.f32.gmra.mrb[0].mxu0 %v1915
        %v1983 = vpop.f32.mrb[0].mxu0
        %v1984 = vadd.f32 0.0, %v1983
        %v1985 = vpop.f32.mrb[0].mxu0
        %1986 = vdwg.mxu0
        %1987 = vrot.lane.b32.xlu0 %v1277, 56
        %v1988 = vpop.permute.xlu0 %1987
        %v1991 = vsel %vm1284, %v1910, 0
        %1993 = vmatprep.subr.mxu0 0.0
        %1994 = vmatpush1.msra.mxu0 %v1988
        %1995 = vmatprep.subr.mxu0 0.0
        %1996 = vmatpush1.msra.mxu0 0.0
        %1997 = vmatprep.subr.mxu0 0.0
        %1998 = vmatpush1.msra.mxu0 0.0
        %1999 = vmatprep.subr.mxu0 0.0
        %2000 = vmatpush1.msra.mxu0 0.0
        %2001 = vmatprep.subr.mxu0 0.0
        %2002 = vmatpush1.msra.mxu0 0.0
        %2003 = vmatprep.subr.mxu0 0.0
        %2004 = vmatpush1.msra.mxu0 0.0
        %2005 = vmatprep.subr.mxu0 0.0
        %2006 = vmatpush1.msra.mxu0 0.0
        %2007 = vmatprep.subr.mxu0 0.0
        %2008 = vmatpush1.msra.mxu0 0.0
        %2009 = vmatprep.subr.mxu0 0.0
        %2010 = vmatpush1.msra.mxu0 0.0
        %2011 = vmatprep.subr.mxu0 0.0
        %2012 = vmatpush1.msra.mxu0 0.0
        %2013 = vmatprep.subr.mxu0 0.0
        %2014 = vmatpush1.msra.mxu0 0.0
        %2015 = vmatprep.subr.mxu0 0.0
        %2016 = vmatpush1.msra.mxu0 0.0
        %2017 = vmatprep.subr.mxu0 0.0
        %2018 = vmatpush1.msra.mxu0 0.0
        %2019 = vmatprep.subr.mxu0 0.0
        %2020 = vmatpush1.msra.mxu0 0.0
        %2021 = vmatprep.subr.mxu0 0.0
        %2022 = vmatpush1.msra.mxu0 0.0
        %2023 = vmatprep.subr.mxu0 0.0
        %2024 = vmatpush1.msra.mxu0 0.0
        %2025 = vmatprep.subr.mxu0 0.0
        %2026 = vmatpush1.msra.mxu0 0.0
        %2027 = vmatprep.subr.mxu0 0.0
        %2028 = vmatpush1.msra.mxu0 0.0
        %2029 = vmatprep.subr.mxu0 0.0
        %2030 = vmatpush1.msra.mxu0 0.0
        %2031 = vmatprep.subr.mxu0 0.0
        %2032 = vmatpush1.msra.mxu0 0.0
        %2033 = vmatprep.subr.mxu0 0.0
        %2034 = vmatpush1.msra.mxu0 0.0
        %2035 = vmatprep.subr.mxu0 0.0
        %2036 = vmatpush1.msra.mxu0 0.0
        %2037 = vmatprep.subr.mxu0 0.0
        %2038 = vmatpush1.msra.mxu0 0.0
        %2039 = vmatprep.subr.mxu0 0.0
        %2040 = vmatpush1.msra.mxu0 0.0
        %2041 = vmatprep.subr.mxu0 0.0
        %2042 = vmatpush1.msra.mxu0 0.0
        %2043 = vmatprep.subr.mxu0 0.0
        %2044 = vmatpush1.msra.mxu0 0.0
        %2045 = vmatprep.subr.mxu0 0.0
        %2046 = vmatpush1.msra.mxu0 0.0
        %2047 = vmatprep.subr.mxu0 0.0
        %2048 = vmatpush1.msra.mxu0 0.0
        %2049 = vmatprep.subr.mxu0 0.0
        %2050 = vmatpush1.msra.mxu0 0.0
        %2051 = vmatprep.subr.mxu0 0.0
        %2052 = vmatpush1.msra.mxu0 0.0
        %2053 = vmatprep.subr.mxu0 0.0
        %2054 = vmatpush1.msra.mxu0 0.0
        %2055 = vmatprep.subr.mxu0 0.0
        %2056 = vmatpush1.msra.mxu0 0.0
        %2057 = vmatprep.mubr.f32.mxu0 0.0
        %2058 = vmatmul.mubr.f32.gmra.mrb[0].mxu0 %v1991
        %v2059 = vpop.f32.mrb[0].mxu0
        %v2060 = vadd.f32 0.0, %v2059
        %v2061 = vpop.f32.mrb[0].mxu0
        %2062 = vdwg.mxu0
        %v2063 = vld [vmem:[%s984 + $0x8] sm:$0xff]
        %v2065 = vsel %vm1284, %v1984, 0
        %v2068 = vsel %vm1284, %v2060, 0
        %2070 = vmatprep.subr.mxu0 0.0
        %2071 = vmatpush1.msra.mxu0 %v2063
        %2072 = vmatprep.subr.mxu0 0.0
        %2073 = vmatpush1.msra.mxu0 0.0
        %2074 = vmatprep.subr.mxu0 0.0
        %2075 = vmatpush1.msra.mxu0 0.0
        %2076 = vmatprep.subr.mxu0 0.0
        %2077 = vmatpush1.msra.mxu0 0.0
        %2078 = vmatprep.subr.mxu0 0.0
        %2079 = vmatpush1.msra.mxu0 0.0
        %2080 = vmatprep.subr.mxu0 0.0
        %2081 = vmatpush1.msra.mxu0 0.0
        %2082 = vmatprep.subr.mxu0 0.0
        %2083 = vmatpush1.msra.mxu0 0.0
        %2084 = vmatprep.subr.mxu0 0.0
        %2085 = vmatpush1.msra.mxu0 0.0
        %2086 = vmatprep.subr.mxu0 0.0
        %2087 = vmatpush1.msra.mxu0 0.0
        %2088 = vmatprep.subr.mxu0 0.0
        %2089 = vmatpush1.msra.mxu0 0.0
        %2090 = vmatprep.subr.mxu0 0.0
        %2091 = vmatpush1.msra.mxu0 0.0
        %2092 = vmatprep.subr.mxu0 0.0
        %2093 = vmatpush1.msra.mxu0 0.0
        %2094 = vmatprep.subr.mxu0 0.0
        %2095 = vmatpush1.msra.mxu0 0.0
        %2096 = vmatprep.subr.mxu0 0.0
        %2097 = vmatpush1.msra.mxu0 0.0
        %2098 = vmatprep.subr.mxu0 0.0
        %2099 = vmatpush1.msra.mxu0 0.0
        %2100 = vmatprep.subr.mxu0 0.0
        %2101 = vmatpush1.msra.mxu0 0.0
        %2102 = vmatprep.subr.mxu0 0.0
        %2103 = vmatpush1.msra.mxu0 0.0
        %2104 = vmatprep.subr.mxu0 0.0
        %2105 = vmatpush1.msra.mxu0 0.0
        %2106 = vmatprep.subr.mxu0 0.0
        %2107 = vmatpush1.msra.mxu0 0.0
        %2108 = vmatprep.subr.mxu0 0.0
        %2109 = vmatpush1.msra.mxu0 0.0
        %2110 = vmatprep.subr.mxu0 0.0
        %2111 = vmatpush1.msra.mxu0 0.0
        %2112 = vmatprep.subr.mxu0 0.0
        %2113 = vmatpush1.msra.mxu0 0.0
        %2114 = vmatprep.subr.mxu0 0.0
        %2115 = vmatpush1.msra.mxu0 0.0
        %2116 = vmatprep.subr.mxu0 0.0
        %2117 = vmatpush1.msra.mxu0 0.0
        %2118 = vmatprep.subr.mxu0 0.0
        %2119 = vmatpush1.msra.mxu0 0.0
        %2120 = vmatprep.subr.mxu0 0.0
        %2121 = vmatpush1.msra.mxu0 0.0
        %2122 = vmatprep.subr.mxu0 0.0
        %2123 = vmatpush1.msra.mxu0 0.0
        %2124 = vmatprep.subr.mxu0 0.0
        %2125 = vmatpush1.msra.mxu0 0.0
        %2126 = vmatprep.subr.mxu0 0.0
        %2127 = vmatpush1.msra.mxu0 0.0
        %2128 = vmatprep.subr.mxu0 0.0
        %2129 = vmatpush1.msra.mxu0 0.0
        %2130 = vmatprep.subr.mxu0 0.0
        %2131 = vmatpush1.msra.mxu0 0.0
        %2132 = vmatprep.subr.mxu0 0.0
        %2133 = vmatpush1.msra.mxu0 0.0
        %2134 = vmatprep.mubr.f32.mxu0 0.0
        %2135 = vmatmul.mubr.f32.gmra.mrb[0].mxu0 %v2065
        %v2136 = vpop.f32.mrb[0].mxu0
        %v2137 = vadd.f32 0.0, %v2136
        %v2138 = vpop.f32.mrb[0].mxu0
        %2139 = vmatprep.mubr.f32.mxu0 0.0
        %2140 = vmatmul.mubr.f32.gmra.mrb[0].mxu0 %v2068
        %v2141 = vpop.f32.mrb[0].mxu0
        %v2142 = vadd.f32 0.0, %v2141
        %v2143 = vpop.f32.mrb[0].mxu0
        %2144 = vdwg.mxu0
        %v2145 = vadd.f32 %v1716, %v2137
        %v2146 = vadd.f32 %v1717, %v2142
        %2147 = vrot.lane.b32.xlu0 %v1272, 112
        %v2148 = vpop.permute.xlu0 %2147
        %2149 = vrot.lane.b32.xlu0 %v1272, 80
        %v2150 = vpop.permute.xlu0 %2149
        %v2151 = vsel %vm1284, %v2148, 0
        %v2153 = vsel %vm1284, %v2150, 0
        %2155 = vmatprep.subr.mxu0 0.0
        %2156 = vmatpush1.xpose.msra.mxu0 %v2153
        %2157 = vmatprep.subr.mxu0 0.0
        %2158 = vmatpush1.xpose.msra.mxu0 0.0
        %2159 = vmatprep.subr.mxu0 0.0
        %2160 = vmatpush1.xpose.msra.mxu0 0.0
        %2161 = vmatprep.subr.mxu0 0.0
        %2162 = vmatpush1.xpose.msra.mxu0 0.0
        %2163 = vmatprep.subr.mxu0 0.0
        %2164 = vmatpush1.xpose.msra.mxu0 0.0
        %2165 = vmatprep.subr.mxu0 0.0
        %2166 = vmatpush1.xpose.msra.mxu0 0.0
        %2167 = vmatprep.subr.mxu0 0.0
        %2168 = vmatpush1.xpose.msra.mxu0 0.0
        %2169 = vmatprep.subr.mxu0 0.0
        %2170 = vmatpush1.xpose.msra.mxu0 0.0
        %2171 = vmatprep.subr.mxu0 0.0
        %2172 = vmatpush1.xpose.msra.mxu0 0.0
        %2173 = vmatprep.subr.mxu0 0.0
        %2174 = vmatpush1.xpose.msra.mxu0 0.0
        %2175 = vmatprep.subr.mxu0 0.0
        %2176 = vmatpush1.xpose.msra.mxu0 0.0
        %2177 = vmatprep.subr.mxu0 0.0
        %2178 = vmatpush1.xpose.msra.mxu0 0.0
        %2179 = vmatprep.subr.mxu0 0.0
        %2180 = vmatpush1.xpose.msra.mxu0 0.0
        %2181 = vmatprep.subr.mxu0 0.0
        %2182 = vmatpush1.xpose.msra.mxu0 0.0
        %2183 = vmatprep.subr.mxu0 0.0
        %2184 = vmatpush1.xpose.msra.mxu0 0.0
        %2185 = vmatprep.subr.mxu0 0.0
        %2186 = vmatpush1.xpose.msra.mxu0 0.0
        %2187 = vmatprep.subr.mxu0 0.0
        %2188 = vmatpush1.xpose.msra.mxu0 0.0
        %2189 = vmatprep.subr.mxu0 0.0
        %2190 = vmatpush1.xpose.msra.mxu0 0.0
        %2191 = vmatprep.subr.mxu0 0.0
        %2192 = vmatpush1.xpose.msra.mxu0 0.0
        %2193 = vmatprep.subr.mxu0 0.0
        %2194 = vmatpush1.xpose.msra.mxu0 0.0
        %2195 = vmatprep.subr.mxu0 0.0
        %2196 = vmatpush1.xpose.msra.mxu0 0.0
        %2197 = vmatprep.subr.mxu0 0.0
        %2198 = vmatpush1.xpose.msra.mxu0 0.0
        %2199 = vmatprep.subr.mxu0 0.0
        %2200 = vmatpush1.xpose.msra.mxu0 0.0
        %2201 = vmatprep.subr.mxu0 0.0
        %2202 = vmatpush1.xpose.msra.mxu0 0.0
        %2203 = vmatprep.subr.mxu0 0.0
        %2204 = vmatpush1.xpose.msra.mxu0 0.0
        %2205 = vmatprep.subr.mxu0 0.0
        %2206 = vmatpush1.xpose.msra.mxu0 0.0
        %2207 = vmatprep.subr.mxu0 0.0
        %2208 = vmatpush1.xpose.msra.mxu0 0.0
        %2209 = vmatprep.subr.mxu0 0.0
        %2210 = vmatpush1.xpose.msra.mxu0 0.0
        %2211 = vmatprep.subr.mxu0 0.0
        %2212 = vmatpush1.xpose.msra.mxu0 0.0
        %2213 = vmatprep.subr.mxu0 0.0
        %2214 = vmatpush1.xpose.msra.mxu0 0.0
        %2215 = vmatprep.subr.mxu0 0.0
        %2216 = vmatpush1.xpose.msra.mxu0 0.0
        %2217 = vmatprep.subr.mxu0 0.0
        %2218 = vmatpush1.xpose.msra.mxu0 0.0
        %2219 = vmatprep.mubr.f32.mxu0 0.0
        %2220 = vmatmul.mubr.f32.gmra.mrb[0].mxu0 %v2151
        %v2221 = vpop.f32.mrb[0].mxu0
        %v2222 = vadd.f32 0.0, %v2221
        %v2223 = vpop.f32.mrb[0].mxu0
        %2224 = vdwg.mxu0
        %2225 = vrot.lane.b32.xlu0 %v1277, 112
        %v2226 = vpop.permute.xlu0 %2225
        %2227 = vrot.lane.b32.xlu0 %v1277, 80
        %v2228 = vpop.permute.xlu0 %2227
        %v2229 = vsel %vm1284, %v2226, 0
        %v2231 = vsel %vm1284, %v2228, 0
        %2233 = vmatprep.subr.mxu0 0.0
        %2234 = vmatpush1.xpose.msra.mxu0 %v2231
        %2235 = vmatprep.subr.mxu0 0.0
        %2236 = vmatpush1.xpose.msra.mxu0 0.0
        %2237 = vmatprep.subr.mxu0 0.0
        %2238 = vmatpush1.xpose.msra.mxu0 0.0
        %2239 = vmatprep.subr.mxu0 0.0
        %2240 = vmatpush1.xpose.msra.mxu0 0.0
        %2241 = vmatprep.subr.mxu0 0.0
        %2242 = vmatpush1.xpose.msra.mxu0 0.0
        %2243 = vmatprep.subr.mxu0 0.0
        %2244 = vmatpush1.xpose.msra.mxu0 0.0
        %2245 = vmatprep.subr.mxu0 0.0
        %2246 = vmatpush1.xpose.msra.mxu0 0.0
        %2247 = vmatprep.subr.mxu0 0.0
        %2248 = vmatpush1.xpose.msra.mxu0 0.0
        %2249 = vmatprep.subr.mxu0 0.0
        %2250 = vmatpush1.xpose.msra.mxu0 0.0
        %2251 = vmatprep.subr.mxu0 0.0
        %2252 = vmatpush1.xpose.msra.mxu0 0.0
        %2253 = vmatprep.subr.mxu0 0.0
        %2254 = vmatpush1.xpose.msra.mxu0 0.0
        %2255 = vmatprep.subr.mxu0 0.0
        %2256 = vmatpush1.xpose.msra.mxu0 0.0
        %2257 = vmatprep.subr.mxu0 0.0
        %2258 = vmatpush1.xpose.msra.mxu0 0.0
        %2259 = vmatprep.subr.mxu0 0.0
        %2260 = vmatpush1.xpose.msra.mxu0 0.0
        %2261 = vmatprep.subr.mxu0 0.0
        %2262 = vmatpush1.xpose.msra.mxu0 0.0
        %2263 = vmatprep.subr.mxu0 0.0
        %2264 = vmatpush1.xpose.msra.mxu0 0.0
        %2265 = vmatprep.subr.mxu0 0.0
        %2266 = vmatpush1.xpose.msra.mxu0 0.0
        %2267 = vmatprep.subr.mxu0 0.0
        %2268 = vmatpush1.xpose.msra.mxu0 0.0
        %2269 = vmatprep.subr.mxu0 0.0
        %2270 = vmatpush1.xpose.msra.mxu0 0.0
        %2271 = vmatprep.subr.mxu0 0.0
        %2272 = vmatpush1.xpose.msra.mxu0 0.0
        %2273 = vmatprep.subr.mxu0 0.0
        %2274 = vmatpush1.xpose.msra.mxu0 0.0
        %2275 = vmatprep.subr.mxu0 0.0
        %2276 = vmatpush1.xpose.msra.mxu0 0.0
        %2277 = vmatprep.subr.mxu0 0.0
        %2278 = vmatpush1.xpose.msra.mxu0 0.0
        %2279 = vmatprep.subr.mxu0 0.0
        %2280 = vmatpush1.xpose.msra.mxu0 0.0
        %2281 = vmatprep.subr.mxu0 0.0
        %2282 = vmatpush1.xpose.msra.mxu0 0.0
        %2283 = vmatprep.subr.mxu0 0.0
        %2284 = vmatpush1.xpose.msra.mxu0 0.0
        %2285 = vmatprep.subr.mxu0 0.0
        %2286 = vmatpush1.xpose.msra.mxu0 0.0
        %2287 = vmatprep.subr.mxu0 0.0
        %2288 = vmatpush1.xpose.msra.mxu0 0.0
        %2289 = vmatprep.subr.mxu0 0.0
        %2290 = vmatpush1.xpose.msra.mxu0 0.0
        %2291 = vmatprep.subr.mxu0 0.0
        %2292 = vmatpush1.xpose.msra.mxu0 0.0
        %2293 = vmatprep.subr.mxu0 0.0
        %2294 = vmatpush1.xpose.msra.mxu0 0.0
        %2295 = vmatprep.subr.mxu0 0.0
        %2296 = vmatpush1.xpose.msra.mxu0 0.0
        %2297 = vmatprep.mubr.f32.mxu0 0.0
        %2298 = vmatmul.mubr.f32.gmra.mrb[0].mxu0 %v2229
        %v2299 = vpop.f32.mrb[0].mxu0
        %v2300 = vadd.f32 0.0, %v2299
        %v2301 = vpop.f32.mrb[0].mxu0
        %2302 = vdwg.mxu0
        %v2303 = vmul.f32 %v2222, 0.35355338
        %v2304 = vmul.f32 %v2300, 0.35355338
        %v2305 = vadd.f32 %v2303, %v1443
        %v2306 = vadd.f32 %v2304, %v1447
        %2309 = vrot.lane.b32.xlu0 %v2305, 16
        %v2310 = vpop.permute.xlu0 %2309
        %2311 = vrot.lane.b32.xlu0 %v2306, 16
        %v2312 = vpop.permute.xlu0 %2311
        %vm2315 = vcmask 195712
        %2316 = vst.msk [vmem:[%s1028] sm:$0xff] %vm2315, %v2310
        %2317 = vst.msk [vmem:[%s1028 + $0x8] sm:$0xff] %vm2315, %v2312
        %v2318 = vsel %vm1284, %v2305, -inf
        %2319 = vmax.xlane.f32.xlu0 %v2318
        %v2320 = vpop.xlane.xlu0 %2319
        %v2321 = vsel %vm1284, %v2306, -inf
        %2322 = vmax.xlane.f32.xlu0 %v2321
        %v2323 = vpop.xlane.xlu0 %2322
        %v2324 = vsub.f32 %v2305, %v2320
        %v2325 = vsub.f32 %v2306, %v2323
        %v2326 = vmul.f32 %v2324, 1.442695
        %v2327 = vpow.pop %v2326
        %v2328 = vmul.f32 %v2325, 1.442695
        %v2329 = vpow.pop %v2328
        %v2330 = vsel %vm1284, %v2327, 0.0
        %2331 = vadd.xlane.f32.xlu0 %v2330
        %v2332 = vpop.xlane.xlu0 %2331
        %v2333 = vsel %vm1284, %v2329, 0.0
        %2334 = vadd.xlane.f32.xlu0 %v2333
        %v2335 = vpop.xlane.xlu0 %2334
        %v2336 = vrcp.pop %v2332
        %v2337 = vrcp.pop %v2335
        %v2338 = vmul.f32 %v2327, %v2336
        %v2339 = vmul.f32 %v2329, %v2337
        %2340 = vrot.lane.b32.xlu0 %v1272, 48
        %v2341 = vpop.permute.xlu0 %2340
        %v2344 = vsel %vm1284, %v2338, 0
        %2346 = vmatprep.subr.mxu0 0.0
        %2347 = vmatpush1.msra.mxu0 %v2341
        %2348 = vmatprep.subr.mxu0 0.0
        %2349 = vmatpush1.msra.mxu0 0.0
        %2350 = vmatprep.subr.mxu0 0.0
        %2351 = vmatpush1.msra.mxu0 0.0
        %2352 = vmatprep.subr.mxu0 0.0
        %2353 = vmatpush1.msra.mxu0 0.0
        %2354 = vmatprep.subr.mxu0 0.0
        %2355 = vmatpush1.msra.mxu0 0.0
        %2356 = vmatprep.subr.mxu0 0.0
        %2357 = vmatpush1.msra.mxu0 0.0
        %2358 = vmatprep.subr.mxu0 0.0
        %2359 = vmatpush1.msra.mxu0 0.0
        %2360 = vmatprep.subr.mxu0 0.0
        %2361 = vmatpush1.msra.mxu0 0.0
        %2362 = vmatprep.subr.mxu0 0.0
        %2363 = vmatpush1.msra.mxu0 0.0
        %2364 = vmatprep.subr.mxu0 0.0
        %2365 = vmatpush1.msra.mxu0 0.0
        %2366 = vmatprep.subr.mxu0 0.0
        %2367 = vmatpush1.msra.mxu0 0.0
        %2368 = vmatprep.subr.mxu0 0.0
        %2369 = vmatpush1.msra.mxu0 0.0
        %2370 = vmatprep.subr.mxu0 0.0
        %2371 = vmatpush1.msra.mxu0 0.0
        %2372 = vmatprep.subr.mxu0 0.0
        %2373 = vmatpush1.msra.mxu0 0.0
        %2374 = vmatprep.subr.mxu0 0.0
        %2375 = vmatpush1.msra.mxu0 0.0
        %2376 = vmatprep.subr.mxu0 0.0
        %2377 = vmatpush1.msra.mxu0 0.0
        %2378 = vmatprep.subr.mxu0 0.0
        %2379 = vmatpush1.msra.mxu0 0.0
        %2380 = vmatprep.subr.mxu0 0.0
        %2381 = vmatpush1.msra.mxu0 0.0
        %2382 = vmatprep.subr.mxu0 0.0
        %2383 = vmatpush1.msra.mxu0 0.0
        %2384 = vmatprep.subr.mxu0 0.0
        %2385 = vmatpush1.msra.mxu0 0.0
        %2386 = vmatprep.subr.mxu0 0.0
        %2387 = vmatpush1.msra.mxu0 0.0
        %2388 = vmatprep.subr.mxu0 0.0
        %2389 = vmatpush1.msra.mxu0 0.0
        %2390 = vmatprep.subr.mxu0 0.0
        %2391 = vmatpush1.msra.mxu0 0.0
        %2392 = vmatprep.subr.mxu0 0.0
        %2393 = vmatpush1.msra.mxu0 0.0
        %2394 = vmatprep.subr.mxu0 0.0
        %2395 = vmatpush1.msra.mxu0 0.0
        %2396 = vmatprep.subr.mxu0 0.0
        %2397 = vmatpush1.msra.mxu0 0.0
        %2398 = vmatprep.subr.mxu0 0.0
        %2399 = vmatpush1.msra.mxu0 0.0
        %2400 = vmatprep.subr.mxu0 0.0
        %2401 = vmatpush1.msra.mxu0 0.0
        %2402 = vmatprep.subr.mxu0 0.0
        %2403 = vmatpush1.msra.mxu0 0.0
        %2404 = vmatprep.subr.mxu0 0.0
        %2405 = vmatpush1.msra.mxu0 0.0
        %2406 = vmatprep.subr.mxu0 0.0
        %2407 = vmatpush1.msra.mxu0 0.0
        %2408 = vmatprep.subr.mxu0 0.0
        %2409 = vmatpush1.msra.mxu0 0.0
        %2410 = vmatprep.mubr.f32.mxu0 0.0
        %2411 = vmatmul.mubr.f32.gmra.mrb[0].mxu0 %v2344
        %v2412 = vpop.f32.mrb[0].mxu0
        %v2413 = vadd.f32 0.0, %v2412
        %v2414 = vpop.f32.mrb[0].mxu0
        %2415 = vdwg.mxu0
        %2416 = vrot.lane.b32.xlu0 %v1277, 48
        %v2417 = vpop.permute.xlu0 %2416
        %v2420 = vsel %vm1284, %v2339, 0
        %2422 = vmatprep.subr.mxu0 0.0
        %2423 = vmatpush1.msra.mxu0 %v2417
        %2424 = vmatprep.subr.mxu0 0.0
        %2425 = vmatpush1.msra.mxu0 0.0
        %2426 = vmatprep.subr.mxu0 0.0
        %2427 = vmatpush1.msra.mxu0 0.0
        %2428 = vmatprep.subr.mxu0 0.0
        %2429 = vmatpush1.msra.mxu0 0.0
        %2430 = vmatprep.subr.mxu0 0.0
        %2431 = vmatpush1.msra.mxu0 0.0
        %2432 = vmatprep.subr.mxu0 0.0
        %2433 = vmatpush1.msra.mxu0 0.0
        %2434 = vmatprep.subr.mxu0 0.0
        %2435 = vmatpush1.msra.mxu0 0.0
        %2436 = vmatprep.subr.mxu0 0.0
        %2437 = vmatpush1.msra.mxu0 0.0
        %2438 = vmatprep.subr.mxu0 0.0
        %2439 = vmatpush1.msra.mxu0 0.0
        %2440 = vmatprep.subr.mxu0 0.0
        %2441 = vmatpush1.msra.mxu0 0.0
        %2442 = vmatprep.subr.mxu0 0.0
        %2443 = vmatpush1.msra.mxu0 0.0
        %2444 = vmatprep.subr.mxu0 0.0
        %2445 = vmatpush1.msra.mxu0 0.0
        %2446 = vmatprep.subr.mxu0 0.0
        %2447 = vmatpush1.msra.mxu0 0.0
        %2448 = vmatprep.subr.mxu0 0.0
        %2449 = vmatpush1.msra.mxu0 0.0
        %2450 = vmatprep.subr.mxu0 0.0
        %2451 = vmatpush1.msra.mxu0 0.0
        %2452 = vmatprep.subr.mxu0 0.0
        %2453 = vmatpush1.msra.mxu0 0.0
        %2454 = vmatprep.subr.mxu0 0.0
        %2455 = vmatpush1.msra.mxu0 0.0
        %2456 = vmatprep.subr.mxu0 0.0
        %2457 = vmatpush1.msra.mxu0 0.0
        %2458 = vmatprep.subr.mxu0 0.0
        %2459 = vmatpush1.msra.mxu0 0.0
        %2460 = vmatprep.subr.mxu0 0.0
        %2461 = vmatpush1.msra.mxu0 0.0
        %2462 = vmatprep.subr.mxu0 0.0
        %2463 = vmatpush1.msra.mxu0 0.0
        %2464 = vmatprep.subr.mxu0 0.0
        %2465 = vmatpush1.msra.mxu0 0.0
        %2466 = vmatprep.subr.mxu0 0.0
        %2467 = vmatpush1.msra.mxu0 0.0
        %2468 = vmatprep.subr.mxu0 0.0
        %2469 = vmatpush1.msra.mxu0 0.0
        %2470 = vmatprep.subr.mxu0 0.0
        %2471 = vmatpush1.msra.mxu0 0.0
        %2472 = vmatprep.subr.mxu0 0.0
        %2473 = vmatpush1.msra.mxu0 0.0
        %2474 = vmatprep.subr.mxu0 0.0
        %2475 = vmatpush1.msra.mxu0 0.0
        %2476 = vmatprep.subr.mxu0 0.0
        %2477 = vmatpush1.msra.mxu0 0.0
        %2478 = vmatprep.subr.mxu0 0.0
        %2479 = vmatpush1.msra.mxu0 0.0
        %2480 = vmatprep.subr.mxu0 0.0
        %2481 = vmatpush1.msra.mxu0 0.0
        %2482 = vmatprep.subr.mxu0 0.0
        %2483 = vmatpush1.msra.mxu0 0.0
        %2484 = vmatprep.subr.mxu0 0.0
        %2485 = vmatpush1.msra.mxu0 0.0
        %2486 = vmatprep.mubr.f32.mxu0 0.0
        %2487 = vmatmul.mubr.f32.gmra.mrb[0].mxu0 %v2420
        %v2488 = vpop.f32.mrb[0].mxu0
        %v2489 = vadd.f32 0.0, %v2488
        %v2490 = vpop.f32.mrb[0].mxu0
        %2491 = vdwg.mxu0
        %v2492 = vld [vmem:[%s984 + $0x10] sm:$0xff]
        %v2494 = vsel %vm1284, %v2413, 0
        %v2497 = vsel %vm1284, %v2489, 0
        %2499 = vmatprep.subr.mxu0 0.0
        %2500 = vmatpush1.msra.mxu0 %v2492
        %2501 = vmatprep.subr.mxu0 0.0
        %2502 = vmatpush1.msra.mxu0 0.0
        %2503 = vmatprep.subr.mxu0 0.0
        %2504 = vmatpush1.msra.mxu0 0.0
        %2505 = vmatprep.subr.mxu0 0.0
        %2506 = vmatpush1.msra.mxu0 0.0
        %2507 = vmatprep.subr.mxu0 0.0
        %2508 = vmatpush1.msra.mxu0 0.0
        %2509 = vmatprep.subr.mxu0 0.0
        %2510 = vmatpush1.msra.mxu0 0.0
        %2511 = vmatprep.subr.mxu0 0.0
        %2512 = vmatpush1.msra.mxu0 0.0
        %2513 = vmatprep.subr.mxu0 0.0
        %2514 = vmatpush1.msra.mxu0 0.0
        %2515 = vmatprep.subr.mxu0 0.0
        %2516 = vmatpush1.msra.mxu0 0.0
        %2517 = vmatprep.subr.mxu0 0.0
        %2518 = vmatpush1.msra.mxu0 0.0
        %2519 = vmatprep.subr.mxu0 0.0
        %2520 = vmatpush1.msra.mxu0 0.0
        %2521 = vmatprep.subr.mxu0 0.0
        %2522 = vmatpush1.msra.mxu0 0.0
        %2523 = vmatprep.subr.mxu0 0.0
        %2524 = vmatpush1.msra.mxu0 0.0
        %2525 = vmatprep.subr.mxu0 0.0
        %2526 = vmatpush1.msra.mxu0 0.0
        %2527 = vmatprep.subr.mxu0 0.0
        %2528 = vmatpush1.msra.mxu0 0.0
        %2529 = vmatprep.subr.mxu0 0.0
        %2530 = vmatpush1.msra.mxu0 0.0
        %2531 = vmatprep.subr.mxu0 0.0
        %2532 = vmatpush1.msra.mxu0 0.0
        %2533 = vmatprep.subr.mxu0 0.0
        %2534 = vmatpush1.msra.mxu0 0.0
        %2535 = vmatprep.subr.mxu0 0.0
        %2536 = vmatpush1.msra.mxu0 0.0
        %2537 = vmatprep.subr.mxu0 0.0
        %2538 = vmatpush1.msra.mxu0 0.0
        %2539 = vmatprep.subr.mxu0 0.0
        %2540 = vmatpush1.msra.mxu0 0.0
        %2541 = vmatprep.subr.mxu0 0.0
        %2542 = vmatpush1.msra.mxu0 0.0
        %2543 = vmatprep.subr.mxu0 0.0
        %2544 = vmatpush1.msra.mxu0 0.0
        %2545 = vmatprep.subr.mxu0 0.0
        %2546 = vmatpush1.msra.mxu0 0.0
        %2547 = vmatprep.subr.mxu0 0.0
        %2548 = vmatpush1.msra.mxu0 0.0
        %2549 = vmatprep.subr.mxu0 0.0
        %2550 = vmatpush1.msra.mxu0 0.0
        %2551 = vmatprep.subr.mxu0 0.0
        %2552 = vmatpush1.msra.mxu0 0.0
        %2553 = vmatprep.subr.mxu0 0.0
        %2554 = vmatpush1.msra.mxu0 0.0
        %2555 = vmatprep.subr.mxu0 0.0
        %2556 = vmatpush1.msra.mxu0 0.0
        %2557 = vmatprep.subr.mxu0 0.0
        %2558 = vmatpush1.msra.mxu0 0.0
        %2559 = vmatprep.subr.mxu0 0.0
        %2560 = vmatpush1.msra.mxu0 0.0
        %2561 = vmatprep.subr.mxu0 0.0
        %2562 = vmatpush1.msra.mxu0 0.0
        %2563 = vmatprep.mubr.f32.mxu0 0.0
        %2564 = vmatmul.mubr.f32.gmra.mrb[0].mxu0 %v2494
        %v2565 = vpop.f32.mrb[0].mxu0
        %v2566 = vadd.f32 0.0, %v2565
        %v2567 = vpop.f32.mrb[0].mxu0
        %2568 = vmatprep.mubr.f32.mxu0 0.0
        %2569 = vmatmul.mubr.f32.gmra.mrb[0].mxu0 %v2497
        %v2570 = vpop.f32.mrb[0].mxu0
        %v2571 = vadd.f32 0.0, %v2570
        %v2572 = vpop.f32.mrb[0].mxu0
        %2573 = vdwg.mxu0
        %v2574 = vadd.f32 %v2145, %v2566
        %v2575 = vadd.f32 %v2146, %v2571
        %2576 = vrot.lane.b32.xlu0 %v1272, 104
        %v2577 = vpop.permute.xlu0 %2576
        %2578 = vrot.lane.b32.xlu0 %v1272, 72
        %v2579 = vpop.permute.xlu0 %2578
        %v2580 = vsel %vm1284, %v2577, 0
        %v2582 = vsel %vm1284, %v2579, 0
        %2584 = vmatprep.subr.mxu0 0.0
        %2585 = vmatpush1.xpose.msra.mxu0 %v2582
        %2586 = vmatprep.subr.mxu0 0.0
        %2587 = vmatpush1.xpose.msra.mxu0 0.0
        %2588 = vmatprep.subr.mxu0 0.0
        %2589 = vmatpush1.xpose.msra.mxu0 0.0
        %2590 = vmatprep.subr.mxu0 0.0
        %2591 = vmatpush1.xpose.msra.mxu0 0.0
        %2592 = vmatprep.subr.mxu0 0.0
        %2593 = vmatpush1.xpose.msra.mxu0 0.0
        %2594 = vmatprep.subr.mxu0 0.0
        %2595 = vmatpush1.xpose.msra.mxu0 0.0
        %2596 = vmatprep.subr.mxu0 0.0
        %2597 = vmatpush1.xpose.msra.mxu0 0.0
        %2598 = vmatprep.subr.mxu0 0.0
        %2599 = vmatpush1.xpose.msra.mxu0 0.0
        %2600 = vmatprep.subr.mxu0 0.0
        %2601 = vmatpush1.xpose.msra.mxu0 0.0
        %2602 = vmatprep.subr.mxu0 0.0
        %2603 = vmatpush1.xpose.msra.mxu0 0.0
        %2604 = vmatprep.subr.mxu0 0.0
        %2605 = vmatpush1.xpose.msra.mxu0 0.0
        %2606 = vmatprep.subr.mxu0 0.0
        %2607 = vmatpush1.xpose.msra.mxu0 0.0
        %2608 = vmatprep.subr.mxu0 0.0
        %2609 = vmatpush1.xpose.msra.mxu0 0.0
        %2610 = vmatprep.subr.mxu0 0.0
        %2611 = vmatpush1.xpose.msra.mxu0 0.0
        %2612 = vmatprep.subr.mxu0 0.0
        %2613 = vmatpush1.xpose.msra.mxu0 0.0
        %2614 = vmatprep.subr.mxu0 0.0
        %2615 = vmatpush1.xpose.msra.mxu0 0.0
        %2616 = vmatprep.subr.mxu0 0.0
        %2617 = vmatpush1.xpose.msra.mxu0 0.0
        %2618 = vmatprep.subr.mxu0 0.0
        %2619 = vmatpush1.xpose.msra.mxu0 0.0
        %2620 = vmatprep.subr.mxu0 0.0
        %2621 = vmatpush1.xpose.msra.mxu0 0.0
        %2622 = vmatprep.subr.mxu0 0.0
        %2623 = vmatpush1.xpose.msra.mxu0 0.0
        %2624 = vmatprep.subr.mxu0 0.0
        %2625 = vmatpush1.xpose.msra.mxu0 0.0
        %2626 = vmatprep.subr.mxu0 0.0
        %2627 = vmatpush1.xpose.msra.mxu0 0.0
        %2628 = vmatprep.subr.mxu0 0.0
        %2629 = vmatpush1.xpose.msra.mxu0 0.0
        %2630 = vmatprep.subr.mxu0 0.0
        %2631 = vmatpush1.xpose.msra.mxu0 0.0
        %2632 = vmatprep.subr.mxu0 0.0
        %2633 = vmatpush1.xpose.msra.mxu0 0.0
        %2634 = vmatprep.subr.mxu0 0.0
        %2635 = vmatpush1.xpose.msra.mxu0 0.0
        %2636 = vmatprep.subr.mxu0 0.0
        %2637 = vmatpush1.xpose.msra.mxu0 0.0
        %2638 = vmatprep.subr.mxu0 0.0
        %2639 = vmatpush1.xpose.msra.mxu0 0.0
        %2640 = vmatprep.subr.mxu0 0.0
        %2641 = vmatpush1.xpose.msra.mxu0 0.0
        %2642 = vmatprep.subr.mxu0 0.0
        %2643 = vmatpush1.xpose.msra.mxu0 0.0
        %2644 = vmatprep.subr.mxu0 0.0
        %2645 = vmatpush1.xpose.msra.mxu0 0.0
        %2646 = vmatprep.subr.mxu0 0.0
        %2647 = vmatpush1.xpose.msra.mxu0 0.0
        %2648 = vmatprep.mubr.f32.mxu0 0.0
        %2649 = vmatmul.mubr.f32.gmra.mrb[0].mxu0 %v2580
        %v2650 = vpop.f32.mrb[0].mxu0
        %v2651 = vadd.f32 0.0, %v2650
        %v2652 = vpop.f32.mrb[0].mxu0
        %2653 = vdwg.mxu0
        %2654 = vrot.lane.b32.xlu0 %v1277, 104
        %v2655 = vpop.permute.xlu0 %2654
        %2656 = vrot.lane.b32.xlu0 %v1277, 72
        %v2657 = vpop.permute.xlu0 %2656
        %v2658 = vsel %vm1284, %v2655, 0
        %v2660 = vsel %vm1284, %v2657, 0
        %2662 = vmatprep.subr.mxu0 0.0
        %2663 = vmatpush1.xpose.msra.mxu0 %v2660
        %2664 = vmatprep.subr.mxu0 0.0
        %2665 = vmatpush1.xpose.msra.mxu0 0.0
        %2666 = vmatprep.subr.mxu0 0.0
        %2667 = vmatpush1.xpose.msra.mxu0 0.0
        %2668 = vmatprep.subr.mxu0 0.0
        %2669 = vmatpush1.xpose.msra.mxu0 0.0
        %2670 = vmatprep.subr.mxu0 0.0
        %2671 = vmatpush1.xpose.msra.mxu0 0.0
        %2672 = vmatprep.subr.mxu0 0.0
        %2673 = vmatpush1.xpose.msra.mxu0 0.0
        %2674 = vmatprep.subr.mxu0 0.0
        %2675 = vmatpush1.xpose.msra.mxu0 0.0
        %2676 = vmatprep.subr.mxu0 0.0
        %2677 = vmatpush1.xpose.msra.mxu0 0.0
        %2678 = vmatprep.subr.mxu0 0.0
        %2679 = vmatpush1.xpose.msra.mxu0 0.0
        %2680 = vmatprep.subr.mxu0 0.0
        %2681 = vmatpush1.xpose.msra.mxu0 0.0
        %2682 = vmatprep.subr.mxu0 0.0
        %2683 = vmatpush1.xpose.msra.mxu0 0.0
        %2684 = vmatprep.subr.mxu0 0.0
        %2685 = vmatpush1.xpose.msra.mxu0 0.0
        %2686 = vmatprep.subr.mxu0 0.0
        %2687 = vmatpush1.xpose.msra.mxu0 0.0
        %2688 = vmatprep.subr.mxu0 0.0
        %2689 = vmatpush1.xpose.msra.mxu0 0.0
        %2690 = vmatprep.subr.mxu0 0.0
        %2691 = vmatpush1.xpose.msra.mxu0 0.0
        %2692 = vmatprep.subr.mxu0 0.0
        %2693 = vmatpush1.xpose.msra.mxu0 0.0
        %2694 = vmatprep.subr.mxu0 0.0
        %2695 = vmatpush1.xpose.msra.mxu0 0.0
        %2696 = vmatprep.subr.mxu0 0.0
        %2697 = vmatpush1.xpose.msra.mxu0 0.0
        %2698 = vmatprep.subr.mxu0 0.0
        %2699 = vmatpush1.xpose.msra.mxu0 0.0
        %2700 = vmatprep.subr.mxu0 0.0
        %2701 = vmatpush1.xpose.msra.mxu0 0.0
        %2702 = vmatprep.subr.mxu0 0.0
        %2703 = vmatpush1.xpose.msra.mxu0 0.0
        %2704 = vmatprep.subr.mxu0 0.0
        %2705 = vmatpush1.xpose.msra.mxu0 0.0
        %2706 = vmatprep.subr.mxu0 0.0
        %2707 = vmatpush1.xpose.msra.mxu0 0.0
        %2708 = vmatprep.subr.mxu0 0.0
        %2709 = vmatpush1.xpose.msra.mxu0 0.0
        %2710 = vmatprep.subr.mxu0 0.0
        %2711 = vmatpush1.xpose.msra.mxu0 0.0
        %2712 = vmatprep.subr.mxu0 0.0
        %2713 = vmatpush1.xpose.msra.mxu0 0.0
        %2714 = vmatprep.subr.mxu0 0.0
        %2715 = vmatpush1.xpose.msra.mxu0 0.0
        %2716 = vmatprep.subr.mxu0 0.0
        %2717 = vmatpush1.xpose.msra.mxu0 0.0
        %2718 = vmatprep.subr.mxu0 0.0
        %2719 = vmatpush1.xpose.msra.mxu0 0.0
        %2720 = vmatprep.subr.mxu0 0.0
        %2721 = vmatpush1.xpose.msra.mxu0 0.0
        %2722 = vmatprep.subr.mxu0 0.0
        %2723 = vmatpush1.xpose.msra.mxu0 0.0
        %2724 = vmatprep.subr.mxu0 0.0
        %2725 = vmatpush1.xpose.msra.mxu0 0.0
        %2726 = vmatprep.mubr.f32.mxu0 0.0
        %2727 = vmatmul.mubr.f32.gmra.mrb[0].mxu0 %v2658
        %v2728 = vpop.f32.mrb[0].mxu0
        %v2729 = vadd.f32 0.0, %v2728
        %v2730 = vpop.f32.mrb[0].mxu0
        %2731 = vdwg.mxu0
        %v2732 = vmul.f32 %v2651, 0.35355338
        %v2733 = vmul.f32 %v2729, 0.35355338
        %v2734 = vadd.f32 %v2732, %v1443
        %v2735 = vadd.f32 %v2733, %v1447
        %2738 = vrot.lane.b32.xlu0 %v2734, 24
        %v2739 = vpop.permute.xlu0 %2738
        %2740 = vrot.lane.b32.xlu0 %v2735, 24
        %v2741 = vpop.permute.xlu0 %2740
        %vm2744 = vcmask 261312
        %2745 = vst.msk [vmem:[%s1028] sm:$0xff] %vm2744, %v2739
        %2746 = vst.msk [vmem:[%s1028 + $0x8] sm:$0xff] %vm2744, %v2741
        %v2747 = vsel %vm1284, %v2734, -inf
        %2748 = vmax.xlane.f32.xlu0 %v2747
        %v2749 = vpop.xlane.xlu0 %2748
        %v2750 = vsel %vm1284, %v2735, -inf
        %2751 = vmax.xlane.f32.xlu0 %v2750
        %v2752 = vpop.xlane.xlu0 %2751
        %v2753 = vsub.f32 %v2734, %v2749
        %v2754 = vsub.f32 %v2735, %v2752
        %v2755 = vmul.f32 %v2753, 1.442695
        %v2756 = vpow.pop %v2755
        %v2757 = vmul.f32 %v2754, 1.442695
        %v2758 = vpow.pop %v2757
        %v2759 = vsel %vm1284, %v2756, 0.0
        %2760 = vadd.xlane.f32.xlu0 %v2759
        %v2761 = vpop.xlane.xlu0 %2760
        %v2762 = vsel %vm1284, %v2758, 0.0
        %2763 = vadd.xlane.f32.xlu0 %v2762
        %v2764 = vpop.xlane.xlu0 %2763
        %v2765 = vrcp.pop %v2761
        %v2766 = vrcp.pop %v2764
        %v2767 = vmul.f32 %v2756, %v2765
        %v2768 = vmul.f32 %v2758, %v2766
        %2769 = vrot.lane.b32.xlu0 %v1272, 40
        %v2770 = vpop.permute.xlu0 %2769
        %v2773 = vsel %vm1284, %v2767, 0
        %2775 = vmatprep.subr.mxu0 0.0
        %2776 = vmatpush1.msra.mxu0 %v2770
        %2777 = vmatprep.subr.mxu0 0.0
        %2778 = vmatpush1.msra.mxu0 0.0
        %2779 = vmatprep.subr.mxu0 0.0
        %2780 = vmatpush1.msra.mxu0 0.0
        %2781 = vmatprep.subr.mxu0 0.0
        %2782 = vmatpush1.msra.mxu0 0.0
        %2783 = vmatprep.subr.mxu0 0.0
        %2784 = vmatpush1.msra.mxu0 0.0
        %2785 = vmatprep.subr.mxu0 0.0
        %2786 = vmatpush1.msra.mxu0 0.0
        %2787 = vmatprep.subr.mxu0 0.0
        %2788 = vmatpush1.msra.mxu0 0.0
        %2789 = vmatprep.subr.mxu0 0.0
        %2790 = vmatpush1.msra.mxu0 0.0
        %2791 = vmatprep.subr.mxu0 0.0
        %2792 = vmatpush1.msra.mxu0 0.0
        %2793 = vmatprep.subr.mxu0 0.0
        %2794 = vmatpush1.msra.mxu0 0.0
        %2795 = vmatprep.subr.mxu0 0.0
        %2796 = vmatpush1.msra.mxu0 0.0
        %2797 = vmatprep.subr.mxu0 0.0
        %2798 = vmatpush1.msra.mxu0 0.0
        %2799 = vmatprep.subr.mxu0 0.0
        %2800 = vmatpush1.msra.mxu0 0.0
        %2801 = vmatprep.subr.mxu0 0.0
        %2802 = vmatpush1.msra.mxu0 0.0
        %2803 = vmatprep.subr.mxu0 0.0
        %2804 = vmatpush1.msra.mxu0 0.0
        %2805 = vmatprep.subr.mxu0 0.0
        %2806 = vmatpush1.msra.mxu0 0.0
        %2807 = vmatprep.subr.mxu0 0.0
        %2808 = vmatpush1.msra.mxu0 0.0
        %2809 = vmatprep.subr.mxu0 0.0
        %2810 = vmatpush1.msra.mxu0 0.0
        %2811 = vmatprep.subr.mxu0 0.0
        %2812 = vmatpush1.msra.mxu0 0.0
        %2813 = vmatprep.subr.mxu0 0.0
        %2814 = vmatpush1.msra.mxu0 0.0
        %2815 = vmatprep.subr.mxu0 0.0
        %2816 = vmatpush1.msra.mxu0 0.0
        %2817 = vmatprep.subr.mxu0 0.0
        %2818 = vmatpush1.msra.mxu0 0.0
        %2819 = vmatprep.subr.mxu0 0.0
        %2820 = vmatpush1.msra.mxu0 0.0
        %2821 = vmatprep.subr.mxu0 0.0
        %2822 = vmatpush1.msra.mxu0 0.0
        %2823 = vmatprep.subr.mxu0 0.0
        %2824 = vmatpush1.msra.mxu0 0.0
        %2825 = vmatprep.subr.mxu0 0.0
        %2826 = vmatpush1.msra.mxu0 0.0
        %2827 = vmatprep.subr.mxu0 0.0
        %2828 = vmatpush1.msra.mxu0 0.0
        %2829 = vmatprep.subr.mxu0 0.0
        %2830 = vmatpush1.msra.mxu0 0.0
        %2831 = vmatprep.subr.mxu0 0.0
        %2832 = vmatpush1.msra.mxu0 0.0
        %2833 = vmatprep.subr.mxu0 0.0
        %2834 = vmatpush1.msra.mxu0 0.0
        %2835 = vmatprep.subr.mxu0 0.0
        %2836 = vmatpush1.msra.mxu0 0.0
        %2837 = vmatprep.subr.mxu0 0.0
        %2838 = vmatpush1.msra.mxu0 0.0
        %2839 = vmatprep.mubr.f32.mxu0 0.0
        %2840 = vmatmul.mubr.f32.gmra.mrb[0].mxu0 %v2773
        %v2841 = vpop.f32.mrb[0].mxu0
        %v2842 = vadd.f32 0.0, %v2841
        %v2843 = vpop.f32.mrb[0].mxu0
        %2844 = vdwg.mxu0
        %2845 = vrot.lane.b32.xlu0 %v1277, 40
        %v2846 = vpop.permute.xlu0 %2845
        %v2849 = vsel %vm1284, %v2768, 0
        %2851 = vmatprep.subr.mxu0 0.0
        %2852 = vmatpush1.msra.mxu0 %v2846
        %2853 = vmatprep.subr.mxu0 0.0
        %2854 = vmatpush1.msra.mxu0 0.0
        %2855 = vmatprep.subr.mxu0 0.0
        %2856 = vmatpush1.msra.mxu0 0.0
        %2857 = vmatprep.subr.mxu0 0.0
        %2858 = vmatpush1.msra.mxu0 0.0
        %2859 = vmatprep.subr.mxu0 0.0
        %2860 = vmatpush1.msra.mxu0 0.0
        %2861 = vmatprep.subr.mxu0 0.0
        %2862 = vmatpush1.msra.mxu0 0.0
        %2863 = vmatprep.subr.mxu0 0.0
        %2864 = vmatpush1.msra.mxu0 0.0
        %2865 = vmatprep.subr.mxu0 0.0
        %2866 = vmatpush1.msra.mxu0 0.0
        %2867 = vmatprep.subr.mxu0 0.0
        %2868 = vmatpush1.msra.mxu0 0.0
        %2869 = vmatprep.subr.mxu0 0.0
        %2870 = vmatpush1.msra.mxu0 0.0
        %2871 = vmatprep.subr.mxu0 0.0
        %2872 = vmatpush1.msra.mxu0 0.0
        %2873 = vmatprep.subr.mxu0 0.0
        %2874 = vmatpush1.msra.mxu0 0.0
        %2875 = vmatprep.subr.mxu0 0.0
        %2876 = vmatpush1.msra.mxu0 0.0
        %2877 = vmatprep.subr.mxu0 0.0
        %2878 = vmatpush1.msra.mxu0 0.0
        %2879 = vmatprep.subr.mxu0 0.0
        %2880 = vmatpush1.msra.mxu0 0.0
        %2881 = vmatprep.subr.mxu0 0.0
        %2882 = vmatpush1.msra.mxu0 0.0
        %2883 = vmatprep.subr.mxu0 0.0
        %2884 = vmatpush1.msra.mxu0 0.0
        %2885 = vmatprep.subr.mxu0 0.0
        %2886 = vmatpush1.msra.mxu0 0.0
        %2887 = vmatprep.subr.mxu0 0.0
        %2888 = vmatpush1.msra.mxu0 0.0
        %2889 = vmatprep.subr.mxu0 0.0
        %2890 = vmatpush1.msra.mxu0 0.0
        %2891 = vmatprep.subr.mxu0 0.0
        %2892 = vmatpush1.msra.mxu0 0.0
        %2893 = vmatprep.subr.mxu0 0.0
        %2894 = vmatpush1.msra.mxu0 0.0
        %2895 = vmatprep.subr.mxu0 0.0
        %2896 = vmatpush1.msra.mxu0 0.0
        %2897 = vmatprep.subr.mxu0 0.0
        %2898 = vmatpush1.msra.mxu0 0.0
        %2899 = vmatprep.subr.mxu0 0.0
        %2900 = vmatpush1.msra.mxu0 0.0
        %2901 = vmatprep.subr.mxu0 0.0
        %2902 = vmatpush1.msra.mxu0 0.0
        %2903 = vmatprep.subr.mxu0 0.0
        %2904 = vmatpush1.msra.mxu0 0.0
        %2905 = vmatprep.subr.mxu0 0.0
        %2906 = vmatpush1.msra.mxu0 0.0
        %2907 = vmatprep.subr.mxu0 0.0
        %2908 = vmatpush1.msra.mxu0 0.0
        %2909 = vmatprep.subr.mxu0 0.0
        %2910 = vmatpush1.msra.mxu0 0.0
        %2911 = vmatprep.subr.mxu0 0.0
        %2912 = vmatpush1.msra.mxu0 0.0
        %2913 = vmatprep.subr.mxu0 0.0
        %2914 = vmatpush1.msra.mxu0 0.0
        %2915 = vmatprep.mubr.f32.mxu0 0.0
        %2916 = vmatmul.mubr.f32.gmra.mrb[0].mxu0 %v2849
        %v2917 = vpop.f32.mrb[0].mxu0
        %v2918 = vadd.f32 0.0, %v2917
        %v2919 = vpop.f32.mrb[0].mxu0
        %2920 = vdwg.mxu0
        %v2921 = vld [vmem:[%s984 + $0x18] sm:$0xff]
        %v2923 = vsel %vm1284, %v2842, 0
        %v2926 = vsel %vm1284, %v2918, 0
        %2928 = vmatprep.subr.mxu0 0.0
        %2929 = vmatpush1.msra.mxu0 %v2921
        %2930 = vmatprep.subr.mxu0 0.0
        %2931 = vmatpush1.msra.mxu0 0.0
        %2932 = vmatprep.subr.mxu0 0.0
        %2933 = vmatpush1.msra.mxu0 0.0
        %2934 = vmatprep.subr.mxu0 0.0
        %2935 = vmatpush1.msra.mxu0 0.0
        %2936 = vmatprep.subr.mxu0 0.0
        %2937 = vmatpush1.msra.mxu0 0.0
        %2938 = vmatprep.subr.mxu0 0.0
        %2939 = vmatpush1.msra.mxu0 0.0
        %2940 = vmatprep.subr.mxu0 0.0
        %2941 = vmatpush1.msra.mxu0 0.0
        %2942 = vmatprep.subr.mxu0 0.0
        %2943 = vmatpush1.msra.mxu0 0.0
        %2944 = vmatprep.subr.mxu0 0.0
        %2945 = vmatpush1.msra.mxu0 0.0
        %2946 = vmatprep.subr.mxu0 0.0
        %2947 = vmatpush1.msra.mxu0 0.0
        %2948 = vmatprep.subr.mxu0 0.0
        %2949 = vmatpush1.msra.mxu0 0.0
        %2950 = vmatprep.subr.mxu0 0.0
        %2951 = vmatpush1.msra.mxu0 0.0
        %2952 = vmatprep.subr.mxu0 0.0
        %2953 = vmatpush1.msra.mxu0 0.0
        %2954 = vmatprep.subr.mxu0 0.0
        %2955 = vmatpush1.msra.mxu0 0.0
        %2956 = vmatprep.subr.mxu0 0.0
        %2957 = vmatpush1.msra.mxu0 0.0
        %2958 = vmatprep.subr.mxu0 0.0
        %2959 = vmatpush1.msra.mxu0 0.0
        %2960 = vmatprep.subr.mxu0 0.0
        %2961 = vmatpush1.msra.mxu0 0.0
        %2962 = vmatprep.subr.mxu0 0.0
        %2963 = vmatpush1.msra.mxu0 0.0
        %2964 = vmatprep.subr.mxu0 0.0
        %2965 = vmatpush1.msra.mxu0 0.0
        %2966 = vmatprep.subr.mxu0 0.0
        %2967 = vmatpush1.msra.mxu0 0.0
        %2968 = vmatprep.subr.mxu0 0.0
        %2969 = vmatpush1.msra.mxu0 0.0
        %2970 = vmatprep.subr.mxu0 0.0
        %2971 = vmatpush1.msra.mxu0 0.0
        %2972 = vmatprep.subr.mxu0 0.0
        %2973 = vmatpush1.msra.mxu0 0.0
        %2974 = vmatprep.subr.mxu0 0.0
        %2975 = vmatpush1.msra.mxu0 0.0
        %2976 = vmatprep.subr.mxu0 0.0
        %2977 = vmatpush1.msra.mxu0 0.0
        %2978 = vmatprep.subr.mxu0 0.0
        %2979 = vmatpush1.msra.mxu0 0.0
        %2980 = vmatprep.subr.mxu0 0.0
        %2981 = vmatpush1.msra.mxu0 0.0
        %2982 = vmatprep.subr.mxu0 0.0
        %2983 = vmatpush1.msra.mxu0 0.0
        %2984 = vmatprep.subr.mxu0 0.0
        %2985 = vmatpush1.msra.mxu0 0.0
        %2986 = vmatprep.subr.mxu0 0.0
        %2987 = vmatpush1.msra.mxu0 0.0
        %2988 = vmatprep.subr.mxu0 0.0
        %2989 = vmatpush1.msra.mxu0 0.0
        %2990 = vmatprep.subr.mxu0 0.0
        %2991 = vmatpush1.msra.mxu0 0.0
        %2992 = vmatprep.mubr.f32.mxu0 0.0
        %2993 = vmatmul.mubr.f32.gmra.mrb[0].mxu0 %v2923
        %v2994 = vpop.f32.mrb[0].mxu0
        %v2995 = vadd.f32 0.0, %v2994
        %v2996 = vpop.f32.mrb[0].mxu0
        %2997 = vmatprep.mubr.f32.mxu0 0.0
        %2998 = vmatmul.mubr.f32.gmra.mrb[0].mxu0 %v2926
        %v2999 = vpop.f32.mrb[0].mxu0
        %v3000 = vadd.f32 0.0, %v2999
        %v3001 = vpop.f32.mrb[0].mxu0
        %3002 = vdwg.mxu0
        %v3003 = vadd.f32 %v2574, %v2995
        %v3004 = vadd.f32 %v2575, %v3000
        %v3005 = vadd.f32 %v3003, %v1183
        %v3006 = vadd.f32 %v3004, %v1184
        %v3007 = vld [vmem:[%s990] sm:$0x1]
        %v3008 = vld [vmem:[%s993] sm:$0x1]
        %v3009 = vsel %vm1198, %v3005, 0.0
        %3010 = vadd.xlane.f32.xlu0 %v3009
        %v3011 = vpop.xlane.xlu0 %3010
        %v3012 = vsel %vm1198, %v3006, 0.0
        %3013 = vadd.xlane.f32.xlu0 %v3012
        %v3014 = vpop.xlane.xlu0 %3013
        %v3015 = vrcp.pop 32.0
        %v3016 = vmul.f32 %v3011, %v3015
        %v3017 = vmul.f32 %v3014, %v3015
        %v3018 = vsub.f32 %v3005, %v3016
        %v3019 = vsub.f32 %v3006, %v3017
        %v3020 = vmul.f32 %v3018, %v3018
        %v3021 = vmul.f32 %v3019, %v3019
        %v3022 = vsel %vm1198, %v3020, 0.0
        %3023 = vadd.xlane.f32.xlu0 %v3022
        %v3024 = vpop.xlane.xlu0 %3023
        %v3025 = vsel %vm1198, %v3021, 0.0
        %3026 = vadd.xlane.f32.xlu0 %v3025
        %v3027 = vpop.xlane.xlu0 %3026
        %v3028 = vmul.f32 %v3024, %v3015
        %v3029 = vmul.f32 %v3027, %v3015
        %v3030 = vadd.f32 %v3028, 1e-12
        %v3031 = vadd.f32 %v3029, 1e-12
        %v3032 = vrsqrt.pop %v3030
        %v3033 = vrsqrt.pop %v3031
        %v3034 = vmul.f32 %v3018, %v3032
        %v3035 = vmul.f32 %v3019, %v3033
        %v3037 = vlaneseq
        %v3038 = vshrl.u32 %v3037, 7
        %v3039 = vsub.s32 0, %v3038
        %v3040 = vrot.slane %v3007, %v3039
        %v3042 = vmul.f32 %v3034, %v3040
        %v3043 = vmul.f32 %v3035, %v3040
        %v3045 = vlaneseq
        %v3046 = vshrl.u32 %v3045, 7
        %v3047 = vsub.s32 0, %v3046
        %v3048 = vrot.slane %v3008, %v3047
        %v3050 = vadd.f32 %v3042, %v3048
        %v3051 = vadd.f32 %v3043, %v3048
        %v3052 = vld [vmem:[%s998] sm:$0xff]
        %v3053 = vld [vmem:[%s998 + $0x8] sm:$0xff]
        %v3054 = vld [vmem:[%s998 + $0x10] sm:$0xff]
        %v3055 = vld [vmem:[%s998 + $0x18] sm:$0xff]
        %v3056 = vld [vmem:[%s1001] sm:$0x1]
        %v3058 = vlaneseq
        %v3059 = vshrl.u32 %v3058, 7
        %v3060 = vsub.s32 0, %v3059
        %v3061 = vrot.slane %v3056, %v3060
        %v3064 = vsel %vm1198, %v3050, 0
        %v3067 = vsel %vm1198, %v3051, 0
        %3069 = vmatprep.subr.mxu0 0.0
        %3070 = vmatpush1.msra.mxu0 %v3052
        %3071 = vmatprep.subr.mxu0 0.0
        %3072 = vmatpush1.msra.mxu0 %v3053
        %3073 = vmatprep.subr.mxu0 0.0
        %3074 = vmatpush1.msra.mxu0 %v3054
        %3075 = vmatprep.subr.mxu0 0.0
        %3076 = vmatpush1.msra.mxu0 %v3055
        %3077 = vmatprep.subr.mxu0 0.0
        %3078 = vmatpush1.msra.mxu0 0.0
        %3079 = vmatprep.subr.mxu0 0.0
        %3080 = vmatpush1.msra.mxu0 0.0
        %3081 = vmatprep.subr.mxu0 0.0
        %3082 = vmatpush1.msra.mxu0 0.0
        %3083 = vmatprep.subr.mxu0 0.0
        %3084 = vmatpush1.msra.mxu0 0.0
        %3085 = vmatprep.subr.mxu0 0.0
        %3086 = vmatpush1.msra.mxu0 0.0
        %3087 = vmatprep.subr.mxu0 0.0
        %3088 = vmatpush1.msra.mxu0 0.0
        %3089 = vmatprep.subr.mxu0 0.0
        %3090 = vmatpush1.msra.mxu0 0.0
        %3091 = vmatprep.subr.mxu0 0.0
        %3092 = vmatpush1.msra.mxu0 0.0
        %3093 = vmatprep.subr.mxu0 0.0
        %3094 = vmatpush1.msra.mxu0 0.0
        %3095 = vmatprep.subr.mxu0 0.0
        %3096 = vmatpush1.msra.mxu0 0.0
        %3097 = vmatprep.subr.mxu0 0.0
        %3098 = vmatpush1.msra.mxu0 0.0
        %3099 = vmatprep.subr.mxu0 0.0
        %3100 = vmatpush1.msra.mxu0 0.0
        %3101 = vmatprep.subr.mxu0 0.0
        %3102 = vmatpush1.msra.mxu0 0.0
        %3103 = vmatprep.subr.mxu0 0.0
        %3104 = vmatpush1.msra.mxu0 0.0
        %3105 = vmatprep.subr.mxu0 0.0
        %3106 = vmatpush1.msra.mxu0 0.0
        %3107 = vmatprep.subr.mxu0 0.0
        %3108 = vmatpush1.msra.mxu0 0.0
        %3109 = vmatprep.subr.mxu0 0.0
        %3110 = vmatpush1.msra.mxu0 0.0
        %3111 = vmatprep.subr.mxu0 0.0
        %3112 = vmatpush1.msra.mxu0 0.0
        %3113 = vmatprep.subr.mxu0 0.0
        %3114 = vmatpush1.msra.mxu0 0.0
        %3115 = vmatprep.subr.mxu0 0.0
        %3116 = vmatpush1.msra.mxu0 0.0
        %3117 = vmatprep.subr.mxu0 0.0
        %3118 = vmatpush1.msra.mxu0 0.0
        %3119 = vmatprep.subr.mxu0 0.0
        %3120 = vmatpush1.msra.mxu0 0.0
        %3121 = vmatprep.subr.mxu0 0.0
        %3122 = vmatpush1.msra.mxu0 0.0
        %3123 = vmatprep.subr.mxu0 0.0
        %3124 = vmatpush1.msra.mxu0 0.0
        %3125 = vmatprep.subr.mxu0 0.0
        %3126 = vmatpush1.msra.mxu0 0.0
        %3127 = vmatprep.subr.mxu0 0.0
        %3128 = vmatpush1.msra.mxu0 0.0
        %3129 = vmatprep.subr.mxu0 0.0
        %3130 = vmatpush1.msra.mxu0 0.0
        %3131 = vmatprep.subr.mxu0 0.0
        %3132 = vmatpush1.msra.mxu0 0.0
        %3133 = vmatprep.mubr.f32.mxu0 0.0
        %3134 = vmatmul.mubr.f32.gmra.mrb[0].mxu0 %v3064
        %v3135 = vpop.f32.mrb[0].mxu0
        %v3136 = vadd.f32 %v3061, %v3135
        %v3137 = vpop.f32.mrb[0].mxu0
        %3138 = vmatprep.mubr.f32.mxu0 0.0
        %3139 = vmatmul.mubr.f32.gmra.mrb[0].mxu0 %v3067
        %v3140 = vpop.f32.mrb[0].mxu0
        %v3141 = vadd.f32 %v3061, %v3140
        %v3142 = vpop.f32.mrb[0].mxu0
        %3143 = vdwg.mxu0
        %v3144 = vmul.f32 %v3136, %v3136
        %v3145 = vmul.f32 %v3141, %v3141
        %v3146 = vmul.f32 %v3136, %v3144
        %v3147 = vmul.f32 %v3141, %v3145
        %v3148 = vmul.f32 %v3146, 0.044715
        %v3149 = vmul.f32 %v3147, 0.044715
        %v3150 = vadd.f32 %v3136, %v3148
        %v3151 = vadd.f32 %v3141, %v3149
        %v3152 = vmul.f32 %v3150, 0.7978846
        %v3153 = vmul.f32 %v3151, 0.7978846
        %v3154 = vtanh.pop %v3152
        %v3155 = vtanh.pop %v3153
        %v3156 = vadd.f32 %v3154, 1.0
        %v3157 = vadd.f32 %v3155, 1.0
        %v3158 = vmul.f32 %v3156, 0.5
        %v3159 = vmul.f32 %v3157, 0.5
        %v3160 = vmul.f32 %v3136, %v3158
        %v3161 = vmul.f32 %v3141, %v3159
        %v3162 = vld [vmem:[%s1006] sm:$0xff]
        %v3163 = vld [vmem:[%s1006 + $0x8] sm:$0xff]
        %v3164 = vld [vmem:[%s1006 + $0x10] sm:$0xff]
        %v3165 = vld [vmem:[%s1006 + $0x18] sm:$0xff]
        %v3166 = vld [vmem:[%s1006 + $0x20] sm:$0xff]
        %v3167 = vld [vmem:[%s1006 + $0x28] sm:$0xff]
        %v3168 = vld [vmem:[%s1006 + $0x30] sm:$0xff]
        %v3169 = vld [vmem:[%s1006 + $0x38] sm:$0xff]
        %v3170 = vld [vmem:[%s1009] sm:$0x1]
        %v3172 = vlaneseq
        %v3173 = vshrl.u32 %v3172, 7
        %v3174 = vsub.s32 0, %v3173
        %v3175 = vrot.slane %v3170, %v3174
        %vm3177 = vcmask 523264
        %v3179 = vsel %vm3177, %v3160, 0
        %v3182 = vsel %vm3177, %v3161, 0
        %3184 = vmatprep.subr.mxu0 0.0
        %3185 = vmatpush1.msra.mxu0 %v3162
        %3186 = vmatprep.subr.mxu0 0.0
        %3187 = vmatpush1.msra.mxu0 %v3163
        %3188 = vmatprep.subr.mxu0 0.0
        %3189 = vmatpush1.msra.mxu0 %v3164
        %3190 = vmatprep.subr.mxu0 0.0
        %3191 = vmatpush1.msra.mxu0 %v3165
        %3192 = vmatprep.subr.mxu0 0.0
        %3193 = vmatpush1.msra.mxu0 %v3166
        %3194 = vmatprep.subr.mxu0 0.0
        %3195 = vmatpush1.msra.mxu0 %v3167
        %3196 = vmatprep.subr.mxu0 0.0
        %3197 = vmatpush1.msra.mxu0 %v3168
        %3198 = vmatprep.subr.mxu0 0.0
        %3199 = vmatpush1.msra.mxu0 %v3169
        %3200 = vmatprep.subr.mxu0 0.0
        %3201 = vmatpush1.msra.mxu0 0.0
        %3202 = vmatprep.subr.mxu0 0.0
        %3203 = vmatpush1.msra.mxu0 0.0
        %3204 = vmatprep.subr.mxu0 0.0
        %3205 = vmatpush1.msra.mxu0 0.0
        %3206 = vmatprep.subr.mxu0 0.0
        %3207 = vmatpush1.msra.mxu0 0.0
        %3208 = vmatprep.subr.mxu0 0.0
        %3209 = vmatpush1.msra.mxu0 0.0
        %3210 = vmatprep.subr.mxu0 0.0
        %3211 = vmatpush1.msra.mxu0 0.0
        %3212 = vmatprep.subr.mxu0 0.0
        %3213 = vmatpush1.msra.mxu0 0.0
        %3214 = vmatprep.subr.mxu0 0.0
        %3215 = vmatpush1.msra.mxu0 0.0
        %3216 = vmatprep.subr.mxu0 0.0
        %3217 = vmatpush1.msra.mxu0 0.0
        %3218 = vmatprep.subr.mxu0 0.0
        %3219 = vmatpush1.msra.mxu0 0.0
        %3220 = vmatprep.subr.mxu0 0.0
        %3221 = vmatpush1.msra.mxu0 0.0
        %3222 = vmatprep.subr.mxu0 0.0
        %3223 = vmatpush1.msra.mxu0 0.0
        %3224 = vmatprep.subr.mxu0 0.0
        %3225 = vmatpush1.msra.mxu0 0.0
        %3226 = vmatprep.subr.mxu0 0.0
        %3227 = vmatpush1.msra.mxu0 0.0
        %3228 = vmatprep.subr.mxu0 0.0
        %3229 = vmatpush1.msra.mxu0 0.0
        %3230 = vmatprep.subr.mxu0 0.0
        %3231 = vmatpush1.msra.mxu0 0.0
        %3232 = vmatprep.subr.mxu0 0.0
        %3233 = vmatpush1.msra.mxu0 0.0
        %3234 = vmatprep.subr.mxu0 0.0
        %3235 = vmatpush1.msra.mxu0 0.0
        %3236 = vmatprep.subr.mxu0 0.0
        %3237 = vmatpush1.msra.mxu0 0.0
        %3238 = vmatprep.subr.mxu0 0.0
        %3239 = vmatpush1.msra.mxu0 0.0
        %3240 = vmatprep.subr.mxu0 0.0
        %3241 = vmatpush1.msra.mxu0 0.0
        %3242 = vmatprep.subr.mxu0 0.0
        %3243 = vmatpush1.msra.mxu0 0.0
        %3244 = vmatprep.subr.mxu0 0.0
        %3245 = vmatpush1.msra.mxu0 0.0
        %3246 = vmatprep.subr.mxu0 0.0
        %3247 = vmatpush1.msra.mxu0 0.0
        %3248 = vmatprep.mubr.f32.mxu0 0.0
        %3249 = vmatmul.mubr.f32.gmra.mrb[0].mxu0 %v3179
        %v3250 = vpop.f32.mrb[0].mxu0
        %v3251 = vadd.f32 %v3175, %v3250
        %v3252 = vpop.f32.mrb[0].mxu0
        %3253 = vmatprep.mubr.f32.mxu0 0.0
        %3254 = vmatmul.mubr.f32.gmra.mrb[0].mxu0 %v3182
        %v3255 = vpop.f32.mrb[0].mxu0
        %v3256 = vadd.f32 %v3175, %v3255
        %v3257 = vpop.f32.mrb[0].mxu0
        %3258 = vdwg.mxu0
        %v3259 = vadd.f32 %v3251, %v3050
        %v3260 = vadd.f32 %v3256, %v3051
        %v3261 = vld [vmem:[%s1012] sm:$0x1]
        %v3262 = vld [vmem:[%s1015] sm:$0x1]
        %v3263 = vsel %vm1198, %v3259, 0.0
        %3264 = vadd.xlane.f32.xlu0 %v3263
        %v3265 = vpop.xlane.xlu0 %3264
        %v3266 = vsel %vm1198, %v3260, 0.0
        %3267 = vadd.xlane.f32.xlu0 %v3266
        %v3268 = vpop.xlane.xlu0 %3267
        %v3269 = vmul.f32 %v3265, %v3015
        %v3270 = vmul.f32 %v3268, %v3015
        %v3271 = vsub.f32 %v3259, %v3269
        %v3272 = vsub.f32 %v3260, %v3270
        %v3273 = vmul.f32 %v3271, %v3271
        %v3274 = vmul.f32 %v3272, %v3272
        %v3275 = vsel %vm1198, %v3273, 0.0
        %3276 = vadd.xlane.f32.xlu0 %v3275
        %v3277 = vpop.xlane.xlu0 %3276
        %v3278 = vsel %vm1198, %v3274, 0.0
        %3279 = vadd.xlane.f32.xlu0 %v3278
        %v3280 = vpop.xlane.xlu0 %3279
        %v3281 = vmul.f32 %v3277, %v3015
        %v3282 = vmul.f32 %v3280, %v3015
        %v3283 = vadd.f32 %v3281, 1e-12
        %v3284 = vadd.f32 %v3282, 1e-12
        %v3285 = vrsqrt.pop %v3283
        %v3286 = vrsqrt.pop %v3284
        %v3287 = vmul.f32 %v3271, %v3285
        %v3288 = vmul.f32 %v3272, %v3286
        %v3290 = vlaneseq
        %v3291 = vshrl.u32 %v3290, 7
        %v3292 = vsub.s32 0, %v3291
        %v3293 = vrot.slane %v3261, %v3292
        %v3295 = vmul.f32 %v3287, %v3293
        %v3296 = vmul.f32 %v3288, %v3293
        %v3298 = vlaneseq
        %v3299 = vshrl.u32 %v3298, 7
        %v3300 = vsub.s32 0, %v3299
        %v3301 = vrot.slane %v3262, %v3300
        %v3303 = vadd.f32 %v3295, %v3301
        %v3304 = vadd.f32 %v3296, %v3301
        %3305 = vst.msk [vmem:[#allocation2] sm:$0xff] %vm1198, %v3303
        %3306 = vst.msk [vmem:[#allocation2 + $0x8] sm:$0xff] %vm1198, %v3304
        %v3307 = vld [vmem:[%s1020] sm:$0xff]
        %v3308 = vld [vmem:[%s1020 + $0x8] sm:$0xff]
        %v3309 = vld [vmem:[%s1020 + $0x10] sm:$0xff]
        %v3310 = vld [vmem:[%s1020 + $0x18] sm:$0xff]
        %v3311 = vld [vmem:[%s1023] sm:$0x1]
        %v3313 = vlaneseq
        %v3314 = vshrl.u32 %v3313, 7
        %v3315 = vsub.s32 0, %v3314
        %v3316 = vrot.slane %v3311, %v3315
        %v3319 = vsel %vm1198, %v3303, 0
        %v3322 = vsel %vm1198, %v3304, 0
        %3324 = vmatprep.subr.mxu0 0.0
        %3325 = vmatpush1.msra.mxu0 %v3307
        %3326 = vmatprep.subr.mxu0 0.0
        %3327 = vmatpush1.msra.mxu0 %v3308
        %3328 = vmatprep.subr.mxu0 0.0
        %3329 = vmatpush1.msra.mxu0 %v3309
        %3330 = vmatprep.subr.mxu0 0.0
        %3331 = vmatpush1.msra.mxu0 %v3310
        %3332 = vmatprep.subr.mxu0 0.0
        %3333 = vmatpush1.msra.mxu0 0.0
        %3334 = vmatprep.subr.mxu0 0.0
        %3335 = vmatpush1.msra.mxu0 0.0
        %3336 = vmatprep.subr.mxu0 0.0
        %3337 = vmatpush1.msra.mxu0 0.0
        %3338 = vmatprep.subr.mxu0 0.0
        %3339 = vmatpush1.msra.mxu0 0.0
        %3340 = vmatprep.subr.mxu0 0.0
        %3341 = vmatpush1.msra.mxu0 0.0
        %3342 = vmatprep.subr.mxu0 0.0
        %3343 = vmatpush1.msra.mxu0 0.0
        %3344 = vmatprep.subr.mxu0 0.0
        %3345 = vmatpush1.msra.mxu0 0.0
        %3346 = vmatprep.subr.mxu0 0.0
        %3347 = vmatpush1.msra.mxu0 0.0
        %3348 = vmatprep.subr.mxu0 0.0
        %3349 = vmatpush1.msra.mxu0 0.0
        %3350 = vmatprep.subr.mxu0 0.0
        %3351 = vmatpush1.msra.mxu0 0.0
        %3352 = vmatprep.subr.mxu0 0.0
        %3353 = vmatpush1.msra.mxu0 0.0
        %3354 = vmatprep.subr.mxu0 0.0
        %3355 = vmatpush1.msra.mxu0 0.0
        %3356 = vmatprep.subr.mxu0 0.0
        %3357 = vmatpush1.msra.mxu0 0.0
        %3358 = vmatprep.subr.mxu0 0.0
        %3359 = vmatpush1.msra.mxu0 0.0
        %3360 = vmatprep.subr.mxu0 0.0
        %3361 = vmatpush1.msra.mxu0 0.0
        %3362 = vmatprep.subr.mxu0 0.0
        %3363 = vmatpush1.msra.mxu0 0.0
        %3364 = vmatprep.subr.mxu0 0.0
        %3365 = vmatpush1.msra.mxu0 0.0
        %3366 = vmatprep.subr.mxu0 0.0
        %3367 = vmatpush1.msra.mxu0 0.0
        %3368 = vmatprep.subr.mxu0 0.0
        %3369 = vmatpush1.msra.mxu0 0.0
        %3370 = vmatprep.subr.mxu0 0.0
        %3371 = vmatpush1.msra.mxu0 0.0
        %3372 = vmatprep.subr.mxu0 0.0
        %3373 = vmatpush1.msra.mxu0 0.0
        %3374 = vmatprep.subr.mxu0 0.0
        %3375 = vmatpush1.msra.mxu0 0.0
        %3376 = vmatprep.subr.mxu0 0.0
        %3377 = vmatpush1.msra.mxu0 0.0
        %3378 = vmatprep.subr.mxu0 0.0
        %3379 = vmatpush1.msra.mxu0 0.0
        %3380 = vmatprep.subr.mxu0 0.0
        %3381 = vmatpush1.msra.mxu0 0.0
        %3382 = vmatprep.subr.mxu0 0.0
        %3383 = vmatpush1.msra.mxu0 0.0
        %3384 = vmatprep.subr.mxu0 0.0
        %3385 = vmatpush1.msra.mxu0 0.0
        %3386 = vmatprep.subr.mxu0 0.0
        %3387 = vmatpush1.msra.mxu0 0.0
        %3388 = vmatprep.mubr.f32.mxu0 0.0
        %3389 = vmatmul.mubr.f32.gmra.mrb[0].mxu0 %v3319
        %v3390 = vpop.f32.mrb[0].mxu0
        %v3391 = vadd.f32 %v3316, %v3390
        %v3392 = vpop.f32.mrb[0].mxu0
        %3393 = vmatprep.mubr.f32.mxu0 0.0
        %3394 = vmatmul.mubr.f32.gmra.mrb[0].mxu0 %v3322
        %v3395 = vpop.f32.mrb[0].mxu0
        %v3396 = vadd.f32 %v3316, %v3395
        %v3397 = vpop.f32.mrb[0].mxu0
        %3398 = vdwg.mxu0
        %vm3399 = vcmask 392192
        %3400 = vst.msk [vmem:[%s1033] sm:$0xff] %vm3399, %v3391
        %3401 = vst.msk [vmem:[%s1033 + $0x8] sm:$0xff] %vm3399, %v3396
        %p3402 = scmp.eq.s32.totalorder %s41, 1
        // Predicated region
        $region121: #{tiny_bert_forward.1} parent=115 // pred_check
          %p3403 = pneg %p3402
        $region122: #{tiny_bert_forward.1} parent=115 // pred_check_branch
          %3405 = sbr.rel (%p3403) target = $region124
        $region123: #{tiny_bert_forward.1} parent=115 // pred_region
          %v3406 = vld [vmem:[%s20] sm:$0xff]
          %v3407 = vld [vmem:[%s20 + $0x8] sm:$0xff]
          %v3408 = vld [vmem:[%s20 + $0x10] sm:$0xff]
          %v3409 = vld [vmem:[%s20 + $0x18] sm:$0xff]
          %v3410 = vld [vmem:[%s21] sm:$0x1]
          %v3412 = vlaneseq
          %v3413 = vshrl.u32 %v3412, 7
          %v3414 = vsub.s32 0, %v3413
          %v3415 = vrot.slane %v3410, %v3414
          %v3417 = vrot.slane %v3304, 7
          %vm3418 = vcmask 1041409
          %v3419 = vsel %vm3418, %v3417, %v3303
          %v3420 = vsel %vm1198, %v3419, 0
          %3422 = vmatprep.subr.mxu0 0.0
          %3423 = vmatpush1.msra.mxu0 %v3406
          %3424 = vmatprep.subr.mxu0 0.0
          %3425 = vmatpush1.msra.mxu0 %v3407
          %3426 = vmatprep.subr.mxu0 0.0
          %3427 = vmatpush1.msra.mxu0 %v3408
          %3428 = vmatprep.subr.mxu0 0.0
          %3429 = vmatpush1.msra.mxu0 %v3409
          %3430 = vmatprep.subr.mxu0 0.0
          %3431 = vmatpush1.msra.mxu0 0.0
          %3432 = vmatprep.subr.mxu0 0.0
          %3433 = vmatpush1.msra.mxu0 0.0
          %3434 = vmatprep.subr.mxu0 0.0
          %3435 = vmatpush1.msra.mxu0 0.0
          %3436 = vmatprep.subr.mxu0 0.0
          %3437 = vmatpush1.msra.mxu0 0.0
          %3438 = vmatprep.subr.mxu0 0.0
          %3439 = vmatpush1.msra.mxu0 0.0
          %3440 = vmatprep.subr.mxu0 0.0
          %3441 = vmatpush1.msra.mxu0 0.0
          %3442 = vmatprep.subr.mxu0 0.0
          %3443 = vmatpush1.msra.mxu0 0.0
          %3444 = vmatprep.subr.mxu0 0.0
          %3445 = vmatpush1.msra.mxu0 0.0
          %3446 = vmatprep.subr.mxu0 0.0
          %3447 = vmatpush1.msra.mxu0 0.0
          %3448 = vmatprep.subr.mxu0 0.0
          %3449 = vmatpush1.msra.mxu0 0.0
          %3450 = vmatprep.subr.mxu0 0.0
          %3451 = vmatpush1.msra.mxu0 0.0
          %3452 = vmatprep.subr.mxu0 0.0
          %3453 = vmatpush1.msra.mxu0 0.0
          %3454 = vmatprep.subr.mxu0 0.0
          %3455 = vmatpush1.msra.mxu0 0.0
          %3456 = vmatprep.subr.mxu0 0.0
          %3457 = vmatpush1.msra.mxu0 0.0
          %3458 = vmatprep.subr.mxu0 0.0
          %3459 = vmatpush1.msra.mxu0 0.0
          %3460 = vmatprep.subr.mxu0 0.0
          %3461 = vmatpush1.msra.mxu0 0.0
          %3462 = vmatprep.subr.mxu0 0.0
          %3463 = vmatpush1.msra.mxu0 0.0
          %3464 = vmatprep.subr.mxu0 0.0
          %3465 = vmatpush1.msra.mxu0 0.0
          %3466 = vmatprep.subr.mxu0 0.0
          %3467 = vmatpush1.msra.mxu0 0.0
          %3468 = vmatprep.subr.mxu0 0.0
          %3469 = vmatpush1.msra.mxu0 0.0
          %3470 = vmatprep.subr.mxu0 0.0
          %3471 = vmatpush1.msra.mxu0 0.0
          %3472 = vmatprep.subr.mxu0 0.0
          %3473 = vmatpush1.msra.mxu0 0.0
          %3474 = vmatprep.subr.mxu0 0.0
          %3475 = vmatpush1.msra.mxu0 0.0
          %3476 = vmatprep.subr.mxu0 0.0
          %3477 = vmatpush1.msra.mxu0 0.0
          %3478 = vmatprep.subr.mxu0 0.0
          %3479 = vmatpush1.msra.mxu0 0.0
          %3480 = vmatprep.subr.mxu0 0.0
          %3481 = vmatpush1.msra.mxu0 0.0
          %3482 = vmatprep.subr.mxu0 0.0
          %3483 = vmatpush1.msra.mxu0 0.0
          %3484 = vmatprep.subr.mxu0 0.0
          %3485 = vmatpush1.msra.mxu0 0.0
          %3486 = vmatprep.mubr.f32.mxu0 0.0
          %3487 = vmatmul.mubr.f32.gmra.mrb[0].mxu0 %v3420
          %v3488 = vpop.f32.mrb[0].mxu0
          %v3489 = vadd.f32 %v3415, %v3488
          %v3490 = vpop.f32.mrb[0].mxu0
          %3491 = vdwg.mxu0
          %v3492 = vtanh.pop %v3489
          %v3493 = vld [vmem:[%s22] sm:$0xff]
          %v3494 = vld [vmem:[%s22 + $0x8] sm:$0xff]
          %v3495 = vld [vmem:[%s22 + $0x10] sm:$0xff]
          %v3496 = vld [vmem:[%s22 + $0x18] sm:$0xff]
          %v3497 = vld [vmem:[%s23] sm:$0x1]
          %v3499 = vlaneseq
          %v3500 = vshrl.u32 %v3499, 7
          %v3501 = vsub.s32 0, %v3500
          %v3502 = vrot.slane %v3497, %v3501
          %v3505 = vsel %vm1198, %v3492, 0
          %3507 = vmatprep.subr.mxu0 0.0
          %3508 = vmatpush1.msra.mxu0 %v3493
          %3509 = vmatprep.subr.mxu0 0.0
          %3510 = vmatpush1.msra.mxu0 %v3494
          %3511 = vmatprep.subr.mxu0 0.0
          %3512 = vmatpush1.msra.mxu0 %v3495
          %3513 = vmatprep.subr.mxu0 0.0
          %3514 = vmatpush1.msra.mxu0 %v3496
          %3515 = vmatprep.subr.mxu0 0.0
          %3516 = vmatpush1.msra.mxu0 0.0
          %3517 = vmatprep.subr.mxu0 0.0
          %3518 = vmatpush1.msra.mxu0 0.0
          %3519 = vmatprep.subr.mxu0 0.0
          %3520 = vmatpush1.msra.mxu0 0.0
          %3521 = vmatprep.subr.mxu0 0.0
          %3522 = vmatpush1.msra.mxu0 0.0
          %3523 = vmatprep.subr.mxu0 0.0
          %3524 = vmatpush1.msra.mxu0 0.0
          %3525 = vmatprep.subr.mxu0 0.0
          %3526 = vmatpush1.msra.mxu0 0.0
          %3527 = vmatprep.subr.mxu0 0.0
          %3528 = vmatpush1.msra.mxu0 0.0
          %3529 = vmatprep.subr.mxu0 0.0
          %3530 = vmatpush1.msra.mxu0 0.0
          %3531 = vmatprep.subr.mxu0 0.0
          %3532 = vmatpush1.msra.mxu0 0.0
          %3533 = vmatprep.subr.mxu0 0.0
          %3534 = vmatpush1.msra.mxu0 0.0
          %3535 = vmatprep.subr.mxu0 0.0
          %3536 = vmatpush1.msra.mxu0 0.0
          %3537 = vmatprep.subr.mxu0 0.0
          %3538 = vmatpush1.msra.mxu0 0.0
          %3539 = vmatprep.subr.mxu0 0.0
          %3540 = vmatpush1.msra.mxu0 0.0
          %3541 = vmatprep.subr.mxu0 0.0
          %3542 = vmatpush1.msra.mxu0 0.0
          %3543 = vmatprep.subr.mxu0 0.0
          %3544 = vmatpush1.msra.mxu0 0.0
          %3545 = vmatprep.subr.mxu0 0.0
          %3546 = vmatpush1.msra.mxu0 0.0
          %3547 = vmatprep.subr.mxu0 0.0
          %3548 = vmatpush1.msra.mxu0 0.0
          %3549 = vmatprep.subr.mxu0 0.0
          %3550 = vmatpush1.msra.mxu0 0.0
          %3551 = vmatprep.subr.mxu0 0.0
          %3552 = vmatpush1.msra.mxu0 0.0
          %3553 = vmatprep.subr.mxu0 0.0
          %3554 = vmatpush1.msra.mxu0 0.0
          %3555 = vmatprep.subr.mxu0 0.0
          %3556 = vmatpush1.msra.mxu0 0.0
          %3557 = vmatprep.subr.mxu0 0.0
          %3558 = vmatpush1.msra.mxu0 0.0
          %3559 = vmatprep.subr.mxu0 0.0
          %3560 = vmatpush1.msra.mxu0 0.0
          %3561 = vmatprep.subr.mxu0 0.0
          %3562 = vmatpush1.msra.mxu0 0.0
          %3563 = vmatprep.subr.mxu0 0.0
          %3564 = vmatpush1.msra.mxu0 0.0
          %3565 = vmatprep.subr.mxu0 0.0
          %3566 = vmatpush1.msra.mxu0 0.0
          %3567 = vmatprep.subr.mxu0 0.0
          %3568 = vmatpush1.msra.mxu0 0.0
          %3569 = vmatprep.subr.mxu0 0.0
          %3570 = vmatpush1.msra.mxu0 0.0
          %3571 = vmatprep.mubr.f32.mxu0 0.0
          %3572 = vmatmul.mubr.f32.gmra.mrb[0].mxu0 %v3505
          %v3573 = vpop.f32.mrb[0].mxu0
          %v3574 = vadd.f32 %v3502, %v3573
          %v3575 = vpop.f32.mrb[0].mxu0
          %3576 = vdwg.mxu0
          %vm3577 = vcmask 17408
          %3578 = vst.msk [vmem:[#allocation5] sm:$0x3] %vm3577, %v3574
        $region124: #{tiny_bert_forward.1} parent=115 // pred_fallthru
          _
        %p3579 = scmp.lt.s32.totalorder %s41, 1
        %s3580 = scalar_select %p3579, %s41, 1
        %s3581 = smul.addr %s3580, 2
        %s3582 = smul.addr %s3581, 8
        %s3583 = scalar_lea.vmem %s25, %s3582
        %p3584 = scmp.lt.s32.totalorder %s41, 1
        %s3585 = scalar_select %p3584, %s41, 1
        %s3586 = smul.addr %s3585, 2
        %s3587 = smul.addr %s3586, 8
        %s3588 = scalar_lea.vmem %s26, %s3587
        // Predicated region
        $region125: #{tiny_bert_forward.1} parent=115 // pred_check
          %p3589 = pneg %p628
        $region126: #{tiny_bert_forward.1} parent=115 // pred_check_branch
          %3591 = sbr.rel (%p3589) target = $region128
        $region127: #{tiny_bert_forward.1} parent=115 // pred_region
          %s3593 = ssub.s32 256, 256
          %3594 = vsyncadd [#allocation4], %s3593
          %s3595 = sshll.u32 [#allocation3], 4
          %s3596 = int_to_ptr.vmem [resolvable:$true] %s3595
          %3601 = dma.vmem_to_hbm [thread:$0]  %s3596, 256, %s24, [#allocation4], 128, 128, 8
        $region128: #{tiny_bert_forward.1} parent=115 // pred_fallthru
          _
        // Predicated region
        $region129: #{tiny_bert_forward.1} parent=115 // pred_check
          %p3602 = pneg %p654
        $region130: #{tiny_bert_forward.1} parent=115 // pred_check_branch
          %3604 = sbr.rel (%p3602) target = $region132
        $region131: #{tiny_bert_forward.1} parent=115 // pred_region
          _
        $region132: #{tiny_bert_forward.1} parent=115 // pred_fallthru
          _
        // Predicated region
        $region133: #{tiny_bert_forward.1} parent=115 // pred_check
          %p3605 = pneg %p680
        $region134: #{tiny_bert_forward.1} parent=115 // pred_check_branch
          %3607 = sbr.rel (%p3605) target = $region136
        $region135: #{tiny_bert_forward.1} parent=115 // pred_region
          _
        $region136: #{tiny_bert_forward.1} parent=115 // pred_fallthru
          _
        // Predicated region
        $region137: #{tiny_bert_forward.1} parent=115 // pred_check
          %p3608 = pneg %p701
        $region138: #{tiny_bert_forward.1} parent=115 // pred_check_branch
          %3610 = sbr.rel (%p3608) target = $region140
        $region139: #{tiny_bert_forward.1} parent=115 // pred_region
          %s3612 = ssub.s32 32, 32
          %3613 = vsyncadd [#allocation6], %s3612
          %s3615 = sshll.u32 [#allocation5], 4
          %s3616 = int_to_ptr.vmem [resolvable:$true] %s3615
          %3618 = dma.vmem_to_hbm [thread:$0]  %s3616, 32, %s27, [#allocation6]
        $region140: #{tiny_bert_forward.1} parent=115 // pred_fallthru
          _
        // Predicated region
        $region141: #{tiny_bert_forward.1} parent=115 // pred_check
          %p3619 = pneg %p628
        $region142: #{tiny_bert_forward.1} parent=115 // pred_check_branch
          %3621 = sbr.rel (%p3619) target = $region144
        $region143: #{tiny_bert_forward.1} parent=115 // pred_region
          %3622 = dma.done [#allocation4], 256
        $region144: #{tiny_bert_forward.1} parent=115 // pred_fallthru
          _
        // Predicated region
        $region145: #{tiny_bert_forward.1} parent=115 // pred_check
          %p3623 = pneg %p701
        $region146: #{tiny_bert_forward.1} parent=115 // pred_check_branch
          %3625 = sbr.rel (%p3623) target = $region148
        $region147: #{tiny_bert_forward.1} parent=115 // pred_region
          %3626 = dma.done [#allocation6], 32
        $region148: #{tiny_bert_forward.1} parent=115 // pred_fallthru
          _
      $region116: #{tiny_bert_forward.1} parent=5 // pred_fallthru
        _
      %p3627 = scmp.le.s32.totalorder 2, %s36
      // Predicated region
      $region149: #{tiny_bert_forward.1} parent=5 // pred_check
        %p3628 = pneg %p3627
      $region150: #{tiny_bert_forward.1} parent=5 // pred_check_branch
        %3630 = sbr.rel (%p3628) target = $region152
      $region151: #{tiny_bert_forward.1} parent=5 // pred_region
        %s3631 = ssub.s32 %s36, 2
        // Predicated region
        $region153: #{tiny_bert_forward.1} parent=151 // pred_check
          %p3632 = pneg %p660
        $region154: #{tiny_bert_forward.1} parent=151 // pred_check_branch
          %3634 = sbr.rel (%p3632) target = $region156
        $region155: #{tiny_bert_forward.1} parent=151 // pred_region
          %p3635 = scmp.lt.s32.totalorder %s42, 1
          %s3636 = scalar_select %p3635, %s42, 1
          %s3637 = smul.addr %s3636, 2
          %s3638 = smul.addr %s3637, 8
          %s3639 = scalar_lea.vmem %s25, %s3638
        $region156: #{tiny_bert_forward.1} parent=151 // pred_fallthru
          _
        // Predicated region
        $region157: #{tiny_bert_forward.1} parent=151 // pred_check
          %p3640 = pneg %p686
        $region158: #{tiny_bert_forward.1} parent=151 // pred_check_branch
          %3642 = sbr.rel (%p3640) target = $region160
        $region159: #{tiny_bert_forward.1} parent=151 // pred_region
          %p3643 = scmp.lt.s32.totalorder %s42, 1
          %s3644 = scalar_select %p3643, %s42, 1
          %s3645 = smul.addr %s3644, 2
          %s3646 = smul.addr %s3645, 8
          %s3647 = scalar_lea.vmem %s26, %s3646
        $region160: #{tiny_bert_forward.1} parent=151 // pred_fallthru
          _
      $region152: #{tiny_bert_forward.1} parent=5 // pred_fallthru
        _
    $region6: #{tiny_bert_forward.1} parent=1 // loop_footer
      %s40 = sadd.s32 1, %s36
    $region7: #{tiny_bert_forward.1} parent=1 // loop_footer_branch
      %35 = sbr.rel target = $region3
    $region8: #{tiny_bert_forward.1} parent=1 // loop_exit
      _
    %3648 = vsyncpa [#allocation4], 1
    %s3649 = scalar_lea.sflag [#allocation4], 1
    %3650 = vsyncpa %s3649, 1
    %3651 = vsyncpa [#allocation6], 1

</llo_original>
